<compile_context>
chip_gen: v7x
topology: tpu7x:2x2x1
jax: 0.10.0
libtpu: 0.0.40
codegen_flags: <defaults>
</compile_context>

<pallas_src>
import functools

import jax
import jax.numpy as jnp
from jax.experimental import pallas as pl
from jax.experimental.pallas import tpu as pltpu

EPS = 1e-5  # BatchNorm1d default eps

N_BRANCH_INPUTS = 5    # v, e, src_col (E,1), dst_col (E,1), dst_row (1,E)
N_BRANCH_PARAMS = 12   # we, be, wg_src, wg_dst, wg_edge, bg, ws_src, ws_dst, ws_edge, bs, bn_scale, bn_shift
OUT_PAD = 128          # lane-dense padded output width


# ----------------------------- in-kernel helpers -----------------------------

def _silu(x):
    return x * jax.nn.sigmoid(x)


def _softplus(x):
    # nn.Softplus(beta=1, threshold=20)
    return jnp.where(x > 20.0, x, jnp.log1p(jnp.exp(jnp.minimum(x, 20.0))))


def _bf16(x):
    return x.astype(jnp.bfloat16)


def _dot(a, b):
    # bf16 operands, f32 accumulation on the MXU
    return jnp.dot(a, b, preferred_element_type=jnp.float32)


def _onehot_bf16(cond):
    # exact 0/1 selector; bf16 so the MXU runs at bf16 throughput
    return jnp.where(cond, 1.0, 0.0).astype(jnp.bfloat16)


# --------------------------------- kernel ------------------------------------

def _branch_compute(in_refs, p_refs, *, n_layers, batch, n_per):
    """embed MLP -> n_layers x CGCNN conv -> per-graph mean pool (all in vregs)."""
    v_ref, e_ref, src_ref, dst_ref, dstrow_ref = in_refs
    (we, be, wg_src, wg_dst, wg_edge, bg,
     ws_src, ws_dst, ws_edge, bs, bn_scale, bn_shift) = p_refs

    n_nodes = v_ref.shape[0]
    n_edges = e_ref.shape[0]

    # node embedding: silu(v @ W' + b')   (BatchNorm folded into W', b')
    h = _silu(_dot(_bf16(v_ref[...]), we[...]) + be[...])          # (N, F) f32

    e_feat = _bf16(e_ref[...])                                     # (E, Fe)

    # Build 0/1 incidence selectors in-register from int32 index vectors.
    src = src_ref[...]                                             # (E, 1) int32
    dst = dst_ref[...]                                             # (E, 1) int32
    dst_row = dstrow_ref[...]                                      # (1, E) int32
    node_cols = jax.lax.broadcasted_iota(jnp.int32, (n_edges, n_nodes), 1)
    S = _onehot_bf16(node_cols == src)                             # (E, N): gather src feats
    D = _onehot_bf16(node_cols == dst)                             # (E, N): gather dst feats
    node_rows = jax.lax.broadcasted_iota(jnp.int32, (n_nodes, n_edges), 0)
    A = _onehot_bf16(node_rows == dst_row)                         # (N, E): scatter-sum to dst

    # Static compile-time loop over conv layers; node feats stay resident.
    for l in range(n_layers):
        hb = _bf16(h)
        # gather once per layer (0/1 selector, so exact in bf16)
        h_src = _bf16(_dot(S, hb))                                 # (E, F)
        h_dst = _bf16(_dot(D, hb))                                 # (E, F)
        # cat([h_src, h_dst, e]) @ W == row-block dots; gate & screen kept separate
        z_gate = (_dot(h_src, wg_src[l]) + _dot(h_dst, wg_dst[l])
                  + _dot(e_feat, wg_edge[l]) + bg[l])              # (E, F)
        z_scr = (_dot(h_src, ws_src[l]) + _dot(h_dst, ws_dst[l])
                 + _dot(e_feat, ws_edge[l]) + bs[l])               # (E, F)
        h_upd = _bf16(jax.nn.sigmoid(z_gate) * _softplus(z_scr))   # (E, F)
        # scatter-sum to destination nodes
        agg = _dot(A, h_upd)                                       # (N, F)
        # node BN (folded to scale/shift) + residual + softplus
        h = _softplus(agg * bn_scale[l] + bn_shift[l] + h)

    # Mean pooling per graph (fixed-size graphs): 0/1 membership selector
    # built from iota (no pooling-matrix input, no DMA), scaled in f32.
    row_graph = jax.lax.broadcasted_iota(jnp.int32, (batch, n_nodes), 0)
    col_node = jax.lax.broadcasted_iota(jnp.int32, (batch, n_nodes), 1)
    lo = row_graph * n_per
    member = jnp.logical_and(col_node >= lo, col_node < lo + n_per)
    Pm = _onehot_bf16(member)                                      # (B, N)
    pooled = _dot(Pm, _bf16(h)) * (1.0 / n_per)                    # (B, F) f32
    return pooled


def _sgcnn_kernel(*refs, n_layers, batch, n_per_slab, n_per_bulk, n_fc):
    """Whole SGCNN forward in one kernel: slab branch, bulk branch, head."""
    o_ref = refs[-1]
    refs = refs[:-1]
    i = 0
    slab_in = refs[i:i + N_BRANCH_INPUTS]; i += N_BRANCH_INPUTS
    bulk_in = refs[i:i + N_BRANCH_INPUTS]; i += N_BRANCH_INPUTS
    slab_p = refs[i:i + N_BRANCH_PARAMS]; i += N_BRANCH_PARAMS
    bulk_p = refs[i:i + N_BRANCH_PARAMS]; i += N_BRANCH_PARAMS
    head_p = refs[i:]

    # TODO(synk): on v7x run the two branches concurrently on the two TensorCores.
    vsp = _branch_compute(slab_in, slab_p, n_layers=n_layers, batch=batch, n_per=n_per_slab)
    vbp = _branch_compute(bulk_in, bulk_p, n_layers=n_layers, batch=batch, n_per=n_per_bulk)

    # cat([vsp, vbp]) @ W0  ==  vsp @ W0[:F] + vbp @ W0[F:]
    w0s, w0b, b0 = head_p[0], head_p[1], head_p[2]
    h = _silu(_dot(_bf16(vsp), w0s[...]) + _dot(_bf16(vbp), w0b[...]) + b0[...])
    mid = head_p[3:-2]
    for k in range(n_fc - 1):
        w_ref, b_ref = mid[2 * k], mid[2 * k + 1]
        h = _silu(_dot(_bf16(h), w_ref[...]) + b_ref[...])
    # pred_regre_0: plain Linear, zero-padded to 128 output lanes -> dense store
    w_out, b_out = head_p[-2], head_p[-1]
    o_ref[...] = _dot(_bf16(h), w_out[...]) + b_out[...]


# -------------------------------- wrapper ------------------------------------

def _vmem_spec():
    return pl.BlockSpec(memory_space=pltpu.MemorySpace.VMEM)


def _cast_branch_params(p):
    bf_idx = {0, 2, 3, 4, 6, 7, 8}   # weight matrices -> bf16; biases / BN stay f32
    return [x.astype(jnp.bfloat16) if i in bf_idx else x for i, x in enumerate(p)]


def _cast_head_params(p):
    out = [p[0].astype(jnp.bfloat16), p[1].astype(jnp.bfloat16), p[2]]
    mid = p[3:-2]
    for i, x in enumerate(mid):
        out.append(x.astype(jnp.bfloat16) if i % 2 == 0 else x)
    out += [p[-2].astype(jnp.bfloat16), p[-1]]
    return out


def sgcnn_forward(slab_inputs, bulk_inputs, slab_params, bulk_params, head_params,
                  *, conv_number, n_fc, batch, n_per_slab, n_per_bulk):
    args = (list(slab_inputs) + list(bulk_inputs)
            + _cast_branch_params(slab_params) + _cast_branch_params(bulk_params)
            + _cast_head_params(head_params))
    kernel = functools.partial(
        _sgcnn_kernel, n_layers=conv_number, batch=batch,
        n_per_slab=n_per_slab, n_per_bulk=n_per_bulk, n_fc=n_fc)
    out = pl.pallas_call(
        kernel,
        out_shape=jax.ShapeDtypeStruct((batch, OUT_PAD), jnp.float32),
        in_specs=[_vmem_spec()] * len(args),
        out_specs=_vmem_spec(),
    )(*args)
    # only column 0 is a real target (regre_dim=[1]); the rest is lane padding
    return out[:, :1]


# ---------------------------- parameter factories -----------------------------

def init_linear(key, fan_in, fan_out):
    kw, kb = jax.random.split(key)
    bound = 1.0 / (fan_in ** 0.5)
    w = jax.random.uniform(kw, (fan_in, fan_out), jnp.float32, -bound, bound)
    b = jax.random.uniform(kb, (1, fan_out), jnp.float32, -bound, bound)
    return w, b


def init_bn(key, f):
    k1, k2, k3, k4 = jax.random.split(key, 4)
    gamma = (1.0 + 0.1 * jax.random.normal(k1, (f,))).astype(jnp.float32)
    beta = (0.1 * jax.random.normal(k2, (f,))).astype(jnp.float32)
    mean = (0.1 * jax.random.normal(k3, (f,))).astype(jnp.float32)
    var = (1.0 + 0.1 * jnp.abs(jax.random.normal(k4, (f,)))).astype(jnp.float32)
    return (gamma, beta, mean, var)


def init_mlp(key, fan_in, fan_out):
    k1, k2 = jax.random.split(key)
    w, b = init_linear(k1, fan_in, fan_out)
    return (w, b, init_bn(k2, fan_out))


def init_conv(key, f, fe):
    k1, k2, k3 = jax.random.split(key, 3)
    return dict(mlp=init_mlp(k1, 2 * f + fe, f),
                screen=init_mlp(k2, 2 * f + fe, f),
                node_bn=init_bn(k3, f))


# --------------------- host-side BN folding / weight packing ------------------

def fold_bn_into_linear(w, b, bn):
    # eval-mode BN after Linear:  W' = W * scale, b' = (b - mean)*scale + beta
    gamma, beta, mean, var = bn
    scale = gamma / jnp.sqrt(var + EPS)
    return w * scale[None, :], (b - mean[None, :]) * scale[None, :] + beta[None, :]


def bn_scale_shift(bn):
    gamma, beta, mean, var = bn
    scale = gamma / jnp.sqrt(var + EPS)
    return scale[None, :], beta[None, :] - mean[None, :] * scale[None, :]


def prepare_branch_params(embed_mlp, conv_params, f):
    """Fold eval-mode BN, split the (2F+Fe, F) gate/screen weights into src/dst/edge
    row-blocks, stack per-layer.  All arrays stay f32 here; the wrapper casts
    weight matrices to bf16 for the MXU."""
    we, be = fold_bn_into_linear(*embed_mlp)
    wg_src, wg_dst, wg_edge, bg = [], [], [], []
    ws_src, ws_dst, ws_edge, bs = [], [], [], []
    bn_s, bn_b = [], []
    for cp in conv_params:
        wm, bm = fold_bn_into_linear(*cp["mlp"])        # gate (sigmoid) branch
        wsc, bsc = fold_bn_into_linear(*cp["screen"])   # screen (softplus) branch
        wg_src.append(wm[:f]); wg_dst.append(wm[f:2 * f]); wg_edge.append(wm[2 * f:]); bg.append(bm)
        ws_src.append(wsc[:f]); ws_dst.append(wsc[f:2 * f]); ws_edge.append(wsc[2 * f:]); bs.append(bsc)
        sc, sh = bn_scale_shift(cp["node_bn"])
        bn_s.append(sc); bn_b.append(sh)
    st = jnp.stack
    return [we, be,
            st(wg_src), st(wg_dst), st(wg_edge), st(bg),
            st(ws_src), st(ws_dst), st(ws_edge), st(bs),
            st(bn_s), st(bn_b)]


def prepare_head_params(fc_mlps, pred_linear, f, out_pad=OUT_PAD):
    w0, b0 = fold_bn_into_linear(*fc_mlps[0])           # first FC: input 2F
    rest = [fold_bn_into_linear(*mlp) for mlp in fc_mlps[1:]]
    wo, bo = pred_linear                                 # (fc_last, 1), (1, 1)
    wo_pad = jnp.zeros((wo.shape[0], out_pad), jnp.float32).at[:, :wo.shape[1]].set(wo)
    bo_pad = jnp.zeros((1, out_pad), jnp.float32).at[:, :bo.shape[1]].set(bo)
    params = [w0[:f], w0[f:], b0]
    for (w, b) in rest:
        params += [w, b]
    params += [wo_pad, bo_pad]
    return params, 1 + len(rest)


# ------------------------------ graph building --------------------------------

def build_graph(key, batch, n_per, e_per):
    """Random fixed-size graphs; only int32 src/dst index vectors are needed."""
    k1, k2 = jax.random.split(key)
    offs = jnp.arange(batch, dtype=jnp.int32)[:, None] * n_per
    src = (jax.random.randint(k1, (batch, e_per), 0, n_per, dtype=jnp.int32) + offs).reshape(-1)
    dst = (jax.random.randint(k2, (batch, e_per), 0, n_per, dtype=jnp.int32) + offs).reshape(-1)
    return src, dst


def pack_graph_inputs(v, e, src, dst):
    return (v, e,
            src.reshape(-1, 1).astype(jnp.int32),
            dst.reshape(-1, 1).astype(jnp.int32),
            dst.reshape(1, -1).astype(jnp.int32))


# --------------------------- pure-JAX f32 reference ----------------------------

def reference_forward(slab_inputs, bulk_inputs, slab_p, bulk_p, head_p, *,
                      conv_number, batch, n_per_slab, n_per_bulk, n_fc):
    def branch(inputs, p, n_per):
        v, e, src_col, dst_col, _ = inputs
        src = src_col.reshape(-1)
        dst = dst_col.reshape(-1)
        (we, be, wg_src, wg_dst, wg_edge, bg,
         ws_src, ws_dst, ws_edge, bs, bn_s, bn_b) = p
        h = jax.nn.silu(v @ we + be)
        n_nodes = v.shape[0]
        S = jax.nn.one_hot(src, n_nodes, dtype=jnp.float32)
        D = jax.nn.one_hot(dst, n_nodes, dtype=jnp.float32)
        for l in range(conv_number):
            h_src = S @ h
            h_dst = D @ h
            zg = h_src @ wg_src[l] + h_dst @ wg_dst[l] + e @ wg_edge[l] + bg[l]
            zs = h_src @ ws_src[l] + h_dst @ ws_dst[l] + e @ ws_edge[l] + bs[l]
            upd = jax.nn.sigmoid(zg) * jax.nn.softplus(zs)
            agg = D.T @ upd
            h = jax.nn.softplus(agg * bn_s[l] + bn_b[l] + h)
        return h.reshape(batch, n_per, -1).mean(axis=1)

    vsp = branch(slab_inputs, slab_p, n_per_slab)
    vbp = branch(bulk_inputs, bulk_p, n_per_bulk)
    h = jax.nn.silu(vsp @ head_p[0] + vbp @ head_p[1] + head_p[2])
    mid = head_p[3:-2]
    for k in range(n_fc - 1):
        h = jax.nn.silu(h @ mid[2 * k] + mid[2 * k + 1])
    out = h @ head_p[-2] + head_p[-1]
    return out[:, :1]


# ----------------------------------- main --------------------------------------

if __name__ == "__main__":
    key = jax.random.PRNGKey(0)

    # small config consistent with the module (task_typ='regre', regre_dim=[1], att=False)
    batch = 2
    embed = 32
    conv_number = 2
    fc_lens = [32, 16]
    node_feat_slab, edge_feat_slab = 24, 12
    node_feat_bulk, edge_feat_bulk = 20, 10
    n_per_slab, e_per_slab = 6, 12
    n_per_bulk, e_per_bulk = 8, 16

    keys = jax.random.split(key, 12)

    # graphs + input features
    src_s, dst_s = build_graph(keys[0], batch, n_per_slab, e_per_slab)
    src_b, dst_b = build_graph(keys[1], batch, n_per_bulk, e_per_bulk)
    v_s = jax.random.normal(keys[2], (batch * n_per_slab, node_feat_slab), jnp.float32)
    e_s = jax.random.normal(keys[3], (batch * e_per_slab, edge_feat_slab), jnp.float32)
    v_b = jax.random.normal(keys[4], (batch * n_per_bulk, node_feat_bulk), jnp.float32)
    e_b = jax.random.normal(keys[5], (batch * e_per_bulk, edge_feat_bulk), jnp.float32)

    # raw parameters (deterministic synthetic init, matching module structure)
    conv_slab_keys = jax.random.split(keys[8], conv_number)
    conv_bulk_keys = jax.random.split(keys[9], conv_number)
    fc_dims = [2 * embed] + fc_lens
    fc_keys = jax.random.split(keys[10], len(fc_dims) - 1)
    raw = dict(
        embed_slab=init_mlp(keys[6], node_feat_slab, embed),
        embed_bulk=init_mlp(keys[7], node_feat_bulk, embed),
        conv_slab=[init_conv(k, embed, edge_feat_slab) for k in conv_slab_keys],
        conv_bulk=[init_conv(k, embed, edge_feat_bulk) for k in conv_bulk_keys],
        fc=[init_mlp(k, fc_dims[i], fc_dims[i + 1]) for i, k in enumerate(fc_keys)],
        pred_regre_0=init_linear(keys[11], fc_dims[-1], 1),
    )

    # host-side preparation: fold eval-mode BatchNorm, split gate/screen row blocks,
    # split first-FC weight for the implicit concat, stack per-conv weights.
    slab_p = prepare_branch_params(raw["embed_slab"], raw["conv_slab"], embed)
    bulk_p = prepare_branch_params(raw["embed_bulk"], raw["conv_bulk"], embed)
    head_p, n_fc = prepare_head_params(raw["fc"], raw["pred_regre_0"], embed)

    slab_inputs = pack_graph_inputs(v_s, e_s, src_s, dst_s)
    bulk_inputs = pack_graph_inputs(v_b, e_b, src_b, dst_b)

    out = sgcnn_forward(slab_inputs, bulk_inputs, slab_p, bulk_p, head_p,
                        conv_number=conv_number, n_fc=n_fc, batch=batch,
                        n_per_slab=n_per_slab, n_per_bulk=n_per_bulk)
    out = jax.block_until_ready(out)

    ref = reference_forward(slab_inputs, bulk_inputs, slab_p, bulk_p, head_p,
                            conv_number=conv_number, batch=batch,
                            n_per_slab=n_per_slab, n_per_bulk=n_per_bulk, n_fc=n_fc)
    ref = jax.block_until_ready(ref)

    assert out.shape == (batch, 1)
    assert bool(jnp.all(jnp.isfinite(out)))
    # bf16 MXU operands vs f32 reference: loose tolerance, catches structural bugs
    assert bool(jnp.allclose(out, ref, rtol=1e-1, atol=1e-1)), (out, ref)
    print("KERNEL_OK")
</pallas_src>

<mosaic_0001>
module attributes {stable_mosaic.version = 11 : i64} {
  func.func @_sgcnn_kernel(%arg0: memref<12x24xf32, #tpu.memory_space<vmem>>, %arg1: memref<24x12xf32, #tpu.memory_space<vmem>>, %arg2: memref<24x1xi32, #tpu.memory_space<vmem>>, %arg3: memref<24x1xi32, #tpu.memory_space<vmem>>, %arg4: memref<1x24xi32, #tpu.memory_space<vmem>>, %arg5: memref<16x20xf32, #tpu.memory_space<vmem>>, %arg6: memref<32x10xf32, #tpu.memory_space<vmem>>, %arg7: memref<32x1xi32, #tpu.memory_space<vmem>>, %arg8: memref<32x1xi32, #tpu.memory_space<vmem>>, %arg9: memref<1x32xi32, #tpu.memory_space<vmem>>, %arg10: memref<24x32xbf16, #tpu.memory_space<vmem>>, %arg11: memref<1x32xf32, #tpu.memory_space<vmem>>, %arg12: memref<2x32x32xbf16, #tpu.memory_space<vmem>>, %arg13: memref<2x32x32xbf16, #tpu.memory_space<vmem>>, %arg14: memref<2x12x32xbf16, #tpu.memory_space<vmem>>, %arg15: memref<2x1x32xf32, #tpu.memory_space<vmem>>, %arg16: memref<2x32x32xbf16, #tpu.memory_space<vmem>>, %arg17: memref<2x32x32xbf16, #tpu.memory_space<vmem>>, %arg18: memref<2x12x32xbf16, #tpu.memory_space<vmem>>, %arg19: memref<2x1x32xf32, #tpu.memory_space<vmem>>, %arg20: memref<2x1x32xf32, #tpu.memory_space<vmem>>, %arg21: memref<2x1x32xf32, #tpu.memory_space<vmem>>, %arg22: memref<20x32xbf16, #tpu.memory_space<vmem>>, %arg23: memref<1x32xf32, #tpu.memory_space<vmem>>, %arg24: memref<2x32x32xbf16, #tpu.memory_space<vmem>>, %arg25: memref<2x32x32xbf16, #tpu.memory_space<vmem>>, %arg26: memref<2x10x32xbf16, #tpu.memory_space<vmem>>, %arg27: memref<2x1x32xf32, #tpu.memory_space<vmem>>, %arg28: memref<2x32x32xbf16, #tpu.memory_space<vmem>>, %arg29: memref<2x32x32xbf16, #tpu.memory_space<vmem>>, %arg30: memref<2x10x32xbf16, #tpu.memory_space<vmem>>, %arg31: memref<2x1x32xf32, #tpu.memory_space<vmem>>, %arg32: memref<2x1x32xf32, #tpu.memory_space<vmem>>, %arg33: memref<2x1x32xf32, #tpu.memory_space<vmem>>, %arg34: memref<32x32xbf16, #tpu.memory_space<vmem>>, %arg35: memref<32x32xbf16, #tpu.memory_space<vmem>>, %arg36: memref<1x32xf32, #tpu.memory_space<vmem>>, %arg37: memref<32x16xbf16, #tpu.memory_space<vmem>>, %arg38: memref<1x16xf32, #tpu.memory_space<vmem>>, %arg39: memref<16x128xbf16, #tpu.memory_space<vmem>>, %arg40: memref<1x128xf32, #tpu.memory_space<vmem>>, %arg41: memref<2x128xf32, #tpu.memory_space<vmem>>) attributes {dimension_semantics = [], scalar_prefetch = 0 : i64, scratch_operands = 0 : i64, tpu.core_type = #tpu.core_type<tc>} {
    %c0 = arith.constant 0 : index
    %c0_0 = arith.constant 0 : index
    %0 = vector.load %arg0[%c0, %c0_0] : memref<12x24xf32, #tpu.memory_space<vmem>>, vector<12x24xf32>
    %1 = arith.truncf %0 : vector<12x24xf32> to vector<12x24xbf16>
    %c0_1 = arith.constant 0 : index
    %c0_2 = arith.constant 0 : index
    %2 = vector.load %arg10[%c0_1, %c0_2] : memref<24x32xbf16, #tpu.memory_space<vmem>>, vector<24x32xbf16>
    %cst = arith.constant dense<0.000000e+00> : vector<12x32xf32>
    %3 = tpu.matmul %1, %2, %cst {dimension_numbers = #tpu.dot_dimension_numbers<[1], [0], [0], [1], [0, 0, 1, 1], [], []>} : vector<12x24xbf16>, vector<24x32xbf16>, vector<12x32xf32> -> vector<12x32xf32>
    %c0_3 = arith.constant 0 : index
    %c0_4 = arith.constant 0 : index
    %4 = vector.load %arg11[%c0_3, %c0_4] : memref<1x32xf32, #tpu.memory_space<vmem>>, vector<1x32xf32>
    %5 = vector.broadcast %4 : vector<1x32xf32> to vector<12x32xf32>
    %6 = arith.addf %3, %5 : vector<12x32xf32>
    %7 = arith.negf %6 : vector<12x32xf32>
    %8 = math.exp %7 : vector<12x32xf32>
    %cst_5 = arith.constant 1.000000e+00 : f32
    %9 = vector.broadcast %cst_5 : f32 to vector<12x32xf32>
    %10 = arith.addf %9, %8 : vector<12x32xf32>
    %11 = arith.divf %9, %10 : vector<12x32xf32>
    %12 = arith.mulf %6, %11 : vector<12x32xf32>
    %c0_6 = arith.constant 0 : index
    %c0_7 = arith.constant 0 : index
    %13 = vector.load %arg1[%c0_6, %c0_7] : memref<24x12xf32, #tpu.memory_space<vmem>>, vector<24x12xf32>
    %14 = arith.truncf %13 : vector<24x12xf32> to vector<24x12xbf16>
    %c0_8 = arith.constant 0 : index
    %c0_9 = arith.constant 0 : index
    %15 = vector.load %arg2[%c0_8, %c0_9] : memref<24x1xi32, #tpu.memory_space<vmem>>, vector<24x1xi32>
    %c0_10 = arith.constant 0 : index
    %c0_11 = arith.constant 0 : index
    %16 = vector.load %arg3[%c0_10, %c0_11] : memref<24x1xi32, #tpu.memory_space<vmem>>, vector<24x1xi32>
    %c0_12 = arith.constant 0 : index
    %c0_13 = arith.constant 0 : index
    %17 = vector.load %arg4[%c0_12, %c0_13] : memref<1x24xi32, #tpu.memory_space<vmem>>, vector<1x24xi32>
    %18 = tpu.iota {dimensions = array<i32: 1>} : vector<24x12xi32>
    %19 = vector.broadcast %15 : vector<24x1xi32> to vector<24x12xi32>
    %20 = arith.cmpi eq, %18, %19 : vector<24x12xi32>
    %cst_14 = arith.constant 1.000000e+00 : f32
    %cst_15 = arith.constant 0.000000e+00 : f32
    %21 = vector.broadcast %cst_14 : f32 to vector<24x12xf32>
    %22 = vector.broadcast %cst_15 : f32 to vector<24x12xf32>
    %23 = arith.select %20, %21, %22 : vector<24x12xi1>, vector<24x12xf32>
    %24 = arith.truncf %23 : vector<24x12xf32> to vector<24x12xbf16>
    %25 = vector.broadcast %16 : vector<24x1xi32> to vector<24x12xi32>
    %26 = arith.cmpi eq, %18, %25 : vector<24x12xi32>
    %cst_16 = arith.constant 1.000000e+00 : f32
    %cst_17 = arith.constant 0.000000e+00 : f32
    %27 = vector.broadcast %cst_16 : f32 to vector<24x12xf32>
    %28 = vector.broadcast %cst_17 : f32 to vector<24x12xf32>
    %29 = arith.select %26, %27, %28 : vector<24x12xi1>, vector<24x12xf32>
    %30 = arith.truncf %29 : vector<24x12xf32> to vector<24x12xbf16>
    %31 = tpu.iota {dimensions = array<i32: 0>} : vector<12x24xi32>
    %32 = vector.broadcast %17 : vector<1x24xi32> to vector<12x24xi32>
    %33 = arith.cmpi eq, %31, %32 : vector<12x24xi32>
    %cst_18 = arith.constant 1.000000e+00 : f32
    %cst_19 = arith.constant 0.000000e+00 : f32
    %34 = vector.broadcast %cst_18 : f32 to vector<12x24xf32>
    %35 = vector.broadcast %cst_19 : f32 to vector<12x24xf32>
    %36 = arith.select %33, %34, %35 : vector<12x24xi1>, vector<12x24xf32>
    %37 = arith.truncf %36 : vector<12x24xf32> to vector<12x24xbf16>
    %38 = arith.truncf %12 : vector<12x32xf32> to vector<12x32xbf16>
    %cst_20 = arith.constant dense<0.000000e+00> : vector<24x32xf32>
    %39 = tpu.matmul %24, %38, %cst_20 {dimension_numbers = #tpu.dot_dimension_numbers<[1], [0], [0], [1], [0, 0, 1, 1], [], []>} : vector<24x12xbf16>, vector<12x32xbf16>, vector<24x32xf32> -> vector<24x32xf32>
    %40 = arith.truncf %39 : vector<24x32xf32> to vector<24x32xbf16>
    %cst_21 = arith.constant dense<0.000000e+00> : vector<24x32xf32>
    %41 = tpu.matmul %30, %38, %cst_21 {dimension_numbers = #tpu.dot_dimension_numbers<[1], [0], [0], [1], [0, 0, 1, 1], [], []>} : vector<24x12xbf16>, vector<12x32xbf16>, vector<24x32xf32> -> vector<24x32xf32>
    %42 = arith.truncf %41 : vector<24x32xf32> to vector<24x32xbf16>
    %c0_22 = arith.constant 0 : index
    %c0_23 = arith.constant 0 : index
    %c0_24 = arith.constant 0 : index
    %43 = vector.load %arg12[%c0_22, %c0_23, %c0_24] : memref<2x32x32xbf16, #tpu.memory_space<vmem>>, vector<1x32x32xbf16>
    %44 = vector.shape_cast %43 : vector<1x32x32xbf16> to vector<32x32xbf16>
    %cst_25 = arith.constant dense<0.000000e+00> : vector<24x32xf32>
    %45 = tpu.matmul %40, %44, %cst_25 {dimension_numbers = #tpu.dot_dimension_numbers<[1], [0], [0], [1], [0, 0, 1, 1], [], []>} : vector<24x32xbf16>, vector<32x32xbf16>, vector<24x32xf32> -> vector<24x32xf32>
    %c0_26 = arith.constant 0 : index
    %c0_27 = arith.constant 0 : index
    %c0_28 = arith.constant 0 : index
    %46 = vector.load %arg13[%c0_26, %c0_27, %c0_28] : memref<2x32x32xbf16, #tpu.memory_space<vmem>>, vector<1x32x32xbf16>
    %47 = vector.shape_cast %46 : vector<1x32x32xbf16> to vector<32x32xbf16>
    %cst_29 = arith.constant dense<0.000000e+00> : vector<24x32xf32>
    %48 = tpu.matmul %42, %47, %cst_29 {dimension_numbers = #tpu.dot_dimension_numbers<[1], [0], [0], [1], [0, 0, 1, 1], [], []>} : vector<24x32xbf16>, vector<32x32xbf16>, vector<24x32xf32> -> vector<24x32xf32>
    %49 = arith.addf %45, %48 : vector<24x32xf32>
    %c0_30 = arith.constant 0 : index
    %c0_31 = arith.constant 0 : index
    %c0_32 = arith.constant 0 : index
    %50 = vector.load %arg14[%c0_30, %c0_31, %c0_32] : memref<2x12x32xbf16, #tpu.memory_space<vmem>>, vector<1x12x32xbf16>
    %51 = vector.shape_cast %50 : vector<1x12x32xbf16> to vector<12x32xbf16>
    %cst_33 = arith.constant dense<0.000000e+00> : vector<24x32xf32>
    %52 = tpu.matmul %14, %51, %cst_33 {dimension_numbers = #tpu.dot_dimension_numbers<[1], [0], [0], [1], [0, 0, 1, 1], [], []>} : vector<24x12xbf16>, vector<12x32xbf16>, vector<24x32xf32> -> vector<24x32xf32>
    %53 = arith.addf %49, %52 : vector<24x32xf32>
    %c0_34 = arith.constant 0 : index
    %c0_35 = arith.constant 0 : index
    %c0_36 = arith.constant 0 : index
    %54 = vector.load %arg15[%c0_34, %c0_35, %c0_36] : memref<2x1x32xf32, #tpu.memory_space<vmem>>, vector<1x1x32xf32>
    %55 = vector.shape_cast %54 : vector<1x1x32xf32> to vector<1x32xf32>
    %56 = vector.broadcast %55 : vector<1x32xf32> to vector<24x32xf32>
    %57 = arith.addf %53, %56 : vector<24x32xf32>
    %c0_37 = arith.constant 0 : index
    %c0_38 = arith.constant 0 : index
    %c0_39 = arith.constant 0 : index
    %58 = vector.load %arg16[%c0_37, %c0_38, %c0_39] : memref<2x32x32xbf16, #tpu.memory_space<vmem>>, vector<1x32x32xbf16>
    %59 = vector.shape_cast %58 : vector<1x32x32xbf16> to vector<32x32xbf16>
    %cst_40 = arith.constant dense<0.000000e+00> : vector<24x32xf32>
    %60 = tpu.matmul %40, %59, %cst_40 {dimension_numbers = #tpu.dot_dimension_numbers<[1], [0], [0], [1], [0, 0, 1, 1], [], []>} : vector<24x32xbf16>, vector<32x32xbf16>, vector<24x32xf32> -> vector<24x32xf32>
    %c0_41 = arith.constant 0 : index
    %c0_42 = arith.constant 0 : index
    %c0_43 = arith.constant 0 : index
    %61 = vector.load %arg17[%c0_41, %c0_42, %c0_43] : memref<2x32x32xbf16, #tpu.memory_space<vmem>>, vector<1x32x32xbf16>
    %62 = vector.shape_cast %61 : vector<1x32x32xbf16> to vector<32x32xbf16>
    %cst_44 = arith.constant dense<0.000000e+00> : vector<24x32xf32>
    %63 = tpu.matmul %42, %62, %cst_44 {dimension_numbers = #tpu.dot_dimension_numbers<[1], [0], [0], [1], [0, 0, 1, 1], [], []>} : vector<24x32xbf16>, vector<32x32xbf16>, vector<24x32xf32> -> vector<24x32xf32>
    %64 = arith.addf %60, %63 : vector<24x32xf32>
    %c0_45 = arith.constant 0 : index
    %c0_46 = arith.constant 0 : index
    %c0_47 = arith.constant 0 : index
    %65 = vector.load %arg18[%c0_45, %c0_46, %c0_47] : memref<2x12x32xbf16, #tpu.memory_space<vmem>>, vector<1x12x32xbf16>
    %66 = vector.shape_cast %65 : vector<1x12x32xbf16> to vector<12x32xbf16>
    %cst_48 = arith.constant dense<0.000000e+00> : vector<24x32xf32>
    %67 = tpu.matmul %14, %66, %cst_48 {dimension_numbers = #tpu.dot_dimension_numbers<[1], [0], [0], [1], [0, 0, 1, 1], [], []>} : vector<24x12xbf16>, vector<12x32xbf16>, vector<24x32xf32> -> vector<24x32xf32>
    %68 = arith.addf %64, %67 : vector<24x32xf32>
    %c0_49 = arith.constant 0 : index
    %c0_50 = arith.constant 0 : index
    %c0_51 = arith.constant 0 : index
    %69 = vector.load %arg19[%c0_49, %c0_50, %c0_51] : memref<2x1x32xf32, #tpu.memory_space<vmem>>, vector<1x1x32xf32>
    %70 = vector.shape_cast %69 : vector<1x1x32xf32> to vector<1x32xf32>
    %71 = vector.broadcast %70 : vector<1x32xf32> to vector<24x32xf32>
    %72 = arith.addf %68, %71 : vector<24x32xf32>
    %73 = arith.negf %57 : vector<24x32xf32>
    %74 = math.exp %73 : vector<24x32xf32>
    %cst_52 = arith.constant 1.000000e+00 : f32
    %75 = vector.broadcast %cst_52 : f32 to vector<24x32xf32>
    %76 = arith.addf %75, %74 : vector<24x32xf32>
    %77 = arith.divf %75, %76 : vector<24x32xf32>
    %cst_53 = arith.constant 2.000000e+01 : f32
    %78 = vector.broadcast %cst_53 : f32 to vector<24x32xf32>
    %79 = arith.cmpf ogt, %72, %78 : vector<24x32xf32>
    %cst_54 = arith.constant 2.000000e+01 : f32
    %80 = vector.broadcast %cst_54 : f32 to vector<24x32xf32>
    %81 = arith.minimumf %72, %80 : vector<24x32xf32>
    %82 = math.exp %81 : vector<24x32xf32>
    %83 = math.log1p %82 : vector<24x32xf32>
    %84 = arith.select %79, %72, %83 : vector<24x32xi1>, vector<24x32xf32>
    %85 = arith.mulf %77, %84 : vector<24x32xf32>
    %86 = arith.truncf %85 : vector<24x32xf32> to vector<24x32xbf16>
    %cst_55 = arith.constant dense<0.000000e+00> : vector<12x32xf32>
    %87 = tpu.matmul %37, %86, %cst_55 {dimension_numbers = #tpu.dot_dimension_numbers<[1], [0], [0], [1], [0, 0, 1, 1], [], []>} : vector<12x24xbf16>, vector<24x32xbf16>, vector<12x32xf32> -> vector<12x32xf32>
    %c0_56 = arith.constant 0 : index
    %c0_57 = arith.constant 0 : index
    %c0_58 = arith.constant 0 : index
    %88 = vector.load %arg20[%c0_56, %c0_57, %c0_58] : memref<2x1x32xf32, #tpu.memory_space<vmem>>, vector<1x1x32xf32>
    %89 = vector.shape_cast %88 : vector<1x1x32xf32> to vector<1x32xf32>
    %90 = vector.broadcast %89 : vector<1x32xf32> to vector<12x32xf32>
    %91 = arith.mulf %87, %90 : vector<12x32xf32>
    %c0_59 = arith.constant 0 : index
    %c0_60 = arith.constant 0 : index
    %c0_61 = arith.constant 0 : index
    %92 = vector.load %arg21[%c0_59, %c0_60, %c0_61] : memref<2x1x32xf32, #tpu.memory_space<vmem>>, vector<1x1x32xf32>
    %93 = vector.shape_cast %92 : vector<1x1x32xf32> to vector<1x32xf32>
    %94 = vector.broadcast %93 : vector<1x32xf32> to vector<12x32xf32>
    %95 = arith.addf %91, %94 : vector<12x32xf32>
    %96 = arith.addf %95, %12 : vector<12x32xf32>
    %cst_62 = arith.constant 2.000000e+01 : f32
    %97 = vector.broadcast %cst_62 : f32 to vector<12x32xf32>
    %98 = arith.cmpf ogt, %96, %97 : vector<12x32xf32>
    %cst_63 = arith.constant 2.000000e+01 : f32
    %99 = vector.broadcast %cst_63 : f32 to vector<12x32xf32>
    %100 = arith.minimumf %96, %99 : vector<12x32xf32>
    %101 = math.exp %100 : vector<12x32xf32>
    %102 = math.log1p %101 : vector<12x32xf32>
    %103 = arith.select %98, %96, %102 : vector<12x32xi1>, vector<12x32xf32>
    %104 = arith.truncf %103 : vector<12x32xf32> to vector<12x32xbf16>
    %cst_64 = arith.constant dense<0.000000e+00> : vector<24x32xf32>
    %105 = tpu.matmul %24, %104, %cst_64 {dimension_numbers = #tpu.dot_dimension_numbers<[1], [0], [0], [1], [0, 0, 1, 1], [], []>} : vector<24x12xbf16>, vector<12x32xbf16>, vector<24x32xf32> -> vector<24x32xf32>
    %106 = arith.truncf %105 : vector<24x32xf32> to vector<24x32xbf16>
    %cst_65 = arith.constant dense<0.000000e+00> : vector<24x32xf32>
    %107 = tpu.matmul %30, %104, %cst_65 {dimension_numbers = #tpu.dot_dimension_numbers<[1], [0], [0], [1], [0, 0, 1, 1], [], []>} : vector<24x12xbf16>, vector<12x32xbf16>, vector<24x32xf32> -> vector<24x32xf32>
    %108 = arith.truncf %107 : vector<24x32xf32> to vector<24x32xbf16>
    %c1 = arith.constant 1 : index
    %c0_66 = arith.constant 0 : index
    %c0_67 = arith.constant 0 : index
    %109 = vector.load %arg12[%c1, %c0_66, %c0_67] : memref<2x32x32xbf16, #tpu.memory_space<vmem>>, vector<1x32x32xbf16>
    %110 = vector.shape_cast %109 : vector<1x32x32xbf16> to vector<32x32xbf16>
    %cst_68 = arith.constant dense<0.000000e+00> : vector<24x32xf32>
    %111 = tpu.matmul %106, %110, %cst_68 {dimension_numbers = #tpu.dot_dimension_numbers<[1], [0], [0], [1], [0, 0, 1, 1], [], []>} : vector<24x32xbf16>, vector<32x32xbf16>, vector<24x32xf32> -> vector<24x32xf32>
    %c1_69 = arith.constant 1 : index
    %c0_70 = arith.constant 0 : index
    %c0_71 = arith.constant 0 : index
    %112 = vector.load %arg13[%c1_69, %c0_70, %c0_71] : memref<2x32x32xbf16, #tpu.memory_space<vmem>>, vector<1x32x32xbf16>
    %113 = vector.shape_cast %112 : vector<1x32x32xbf16> to vector<32x32xbf16>
    %cst_72 = arith.constant dense<0.000000e+00> : vector<24x32xf32>
    %114 = tpu.matmul %108, %113, %cst_72 {dimension_numbers = #tpu.dot_dimension_numbers<[1], [0], [0], [1], [0, 0, 1, 1], [], []>} : vector<24x32xbf16>, vector<32x32xbf16>, vector<24x32xf32> -> vector<24x32xf32>
    %115 = arith.addf %111, %114 : vector<24x32xf32>
    %c1_73 = arith.constant 1 : index
    %c0_74 = arith.constant 0 : index
    %c0_75 = arith.constant 0 : index
    %116 = vector.load %arg14[%c1_73, %c0_74, %c0_75] : memref<2x12x32xbf16, #tpu.memory_space<vmem>>, vector<1x12x32xbf16>
    %117 = vector.shape_cast %116 : vector<1x12x32xbf16> to vector<12x32xbf16>
    %cst_76 = arith.constant dense<0.000000e+00> : vector<24x32xf32>
    %118 = tpu.matmul %14, %117, %cst_76 {dimension_numbers = #tpu.dot_dimension_numbers<[1], [0], [0], [1], [0, 0, 1, 1], [], []>} : vector<24x12xbf16>, vector<12x32xbf16>, vector<24x32xf32> -> vector<24x32xf32>
    %119 = arith.addf %115, %118 : vector<24x32xf32>
    %c1_77 = arith.constant 1 : index
    %c0_78 = arith.constant 0 : index
    %c0_79 = arith.constant 0 : index
    %120 = vector.load %arg15[%c1_77, %c0_78, %c0_79] : memref<2x1x32xf32, #tpu.memory_space<vmem>>, vector<1x1x32xf32>
    %121 = vector.shape_cast %120 : vector<1x1x32xf32> to vector<1x32xf32>
    %122 = vector.broadcast %121 : vector<1x32xf32> to vector<24x32xf32>
    %123 = arith.addf %119, %122 : vector<24x32xf32>
    %c1_80 = arith.constant 1 : index
    %c0_81 = arith.constant 0 : index
    %c0_82 = arith.constant 0 : index
    %124 = vector.load %arg16[%c1_80, %c0_81, %c0_82] : memref<2x32x32xbf16, #tpu.memory_space<vmem>>, vector<1x32x32xbf16>
    %125 = vector.shape_cast %124 : vector<1x32x32xbf16> to vector<32x32xbf16>
    %cst_83 = arith.constant dense<0.000000e+00> : vector<24x32xf32>
    %126 = tpu.matmul %106, %125, %cst_83 {dimension_numbers = #tpu.dot_dimension_numbers<[1], [0], [0], [1], [0, 0, 1, 1], [], []>} : vector<24x32xbf16>, vector<32x32xbf16>, vector<24x32xf32> -> vector<24x32xf32>
    %c1_84 = arith.constant 1 : index
    %c0_85 = arith.constant 0 : index
    %c0_86 = arith.constant 0 : index
    %127 = vector.load %arg17[%c1_84, %c0_85, %c0_86] : memref<2x32x32xbf16, #tpu.memory_space<vmem>>, vector<1x32x32xbf16>
    %128 = vector.shape_cast %127 : vector<1x32x32xbf16> to vector<32x32xbf16>
    %cst_87 = arith.constant dense<0.000000e+00> : vector<24x32xf32>
    %129 = tpu.matmul %108, %128, %cst_87 {dimension_numbers = #tpu.dot_dimension_numbers<[1], [0], [0], [1], [0, 0, 1, 1], [], []>} : vector<24x32xbf16>, vector<32x32xbf16>, vector<24x32xf32> -> vector<24x32xf32>
    %130 = arith.addf %126, %129 : vector<24x32xf32>
    %c1_88 = arith.constant 1 : index
    %c0_89 = arith.constant 0 : index
    %c0_90 = arith.constant 0 : index
    %131 = vector.load %arg18[%c1_88, %c0_89, %c0_90] : memref<2x12x32xbf16, #tpu.memory_space<vmem>>, vector<1x12x32xbf16>
    %132 = vector.shape_cast %131 : vector<1x12x32xbf16> to vector<12x32xbf16>
    %cst_91 = arith.constant dense<0.000000e+00> : vector<24x32xf32>
    %133 = tpu.matmul %14, %132, %cst_91 {dimension_numbers = #tpu.dot_dimension_numbers<[1], [0], [0], [1], [0, 0, 1, 1], [], []>} : vector<24x12xbf16>, vector<12x32xbf16>, vector<24x32xf32> -> vector<24x32xf32>
    %134 = arith.addf %130, %133 : vector<24x32xf32>
    %c1_92 = arith.constant 1 : index
    %c0_93 = arith.constant 0 : index
    %c0_94 = arith.constant 0 : index
    %135 = vector.load %arg19[%c1_92, %c0_93, %c0_94] : memref<2x1x32xf32, #tpu.memory_space<vmem>>, vector<1x1x32xf32>
    %136 = vector.shape_cast %135 : vector<1x1x32xf32> to vector<1x32xf32>
    %137 = vector.broadcast %136 : vector<1x32xf32> to vector<24x32xf32>
    %138 = arith.addf %134, %137 : vector<24x32xf32>
    %139 = arith.negf %123 : vector<24x32xf32>
    %140 = math.exp %139 : vector<24x32xf32>
    %cst_95 = arith.constant 1.000000e+00 : f32
    %141 = vector.broadcast %cst_95 : f32 to vector<24x32xf32>
    %142 = arith.addf %141, %140 : vector<24x32xf32>
    %143 = arith.divf %141, %142 : vector<24x32xf32>
    %cst_96 = arith.constant 2.000000e+01 : f32
    %144 = vector.broadcast %cst_96 : f32 to vector<24x32xf32>
    %145 = arith.cmpf ogt, %138, %144 : vector<24x32xf32>
    %cst_97 = arith.constant 2.000000e+01 : f32
    %146 = vector.broadcast %cst_97 : f32 to vector<24x32xf32>
    %147 = arith.minimumf %138, %146 : vector<24x32xf32>
    %148 = math.exp %147 : vector<24x32xf32>
    %149 = math.log1p %148 : vector<24x32xf32>
    %150 = arith.select %145, %138, %149 : vector<24x32xi1>, vector<24x32xf32>
    %151 = arith.mulf %143, %150 : vector<24x32xf32>
    %152 = arith.truncf %151 : vector<24x32xf32> to vector<24x32xbf16>
    %cst_98 = arith.constant dense<0.000000e+00> : vector<12x32xf32>
    %153 = tpu.matmul %37, %152, %cst_98 {dimension_numbers = #tpu.dot_dimension_numbers<[1], [0], [0], [1], [0, 0, 1, 1], [], []>} : vector<12x24xbf16>, vector<24x32xbf16>, vector<12x32xf32> -> vector<12x32xf32>
    %c1_99 = arith.constant 1 : index
    %c0_100 = arith.constant 0 : index
    %c0_101 = arith.constant 0 : index
    %154 = vector.load %arg20[%c1_99, %c0_100, %c0_101] : memref<2x1x32xf32, #tpu.memory_space<vmem>>, vector<1x1x32xf32>
    %155 = vector.shape_cast %154 : vector<1x1x32xf32> to vector<1x32xf32>
    %156 = vector.broadcast %155 : vector<1x32xf32> to vector<12x32xf32>
    %157 = arith.mulf %153, %156 : vector<12x32xf32>
    %c1_102 = arith.constant 1 : index
    %c0_103 = arith.constant 0 : index
    %c0_104 = arith.constant 0 : index
    %158 = vector.load %arg21[%c1_102, %c0_103, %c0_104] : memref<2x1x32xf32, #tpu.memory_space<vmem>>, vector<1x1x32xf32>
    %159 = vector.shape_cast %158 : vector<1x1x32xf32> to vector<1x32xf32>
    %160 = vector.broadcast %159 : vector<1x32xf32> to vector<12x32xf32>
    %161 = arith.addf %157, %160 : vector<12x32xf32>
    %162 = arith.addf %161, %103 : vector<12x32xf32>
    %cst_105 = arith.constant 2.000000e+01 : f32
    %163 = vector.broadcast %cst_105 : f32 to vector<12x32xf32>
    %164 = arith.cmpf ogt, %162, %163 : vector<12x32xf32>
    %cst_106 = arith.constant 2.000000e+01 : f32
    %165 = vector.broadcast %cst_106 : f32 to vector<12x32xf32>
    %166 = arith.minimumf %162, %165 : vector<12x32xf32>
    %167 = math.exp %166 : vector<12x32xf32>
    %168 = math.log1p %167 : vector<12x32xf32>
    %169 = arith.select %164, %162, %168 : vector<12x32xi1>, vector<12x32xf32>
    %170 = tpu.iota {dimensions = array<i32: 0>} : vector<2x12xi32>
    %171 = tpu.iota {dimensions = array<i32: 1>} : vector<2x12xi32>
    %c6_i32 = arith.constant 6 : i32
    %172 = vector.broadcast %c6_i32 : i32 to vector<2x12xi32>
    %173 = arith.muli %170, %172 : vector<2x12xi32>
    %174 = arith.cmpi sge, %171, %173 : vector<2x12xi32>
    %c6_i32_107 = arith.constant 6 : i32
    %175 = vector.broadcast %c6_i32_107 : i32 to vector<2x12xi32>
    %176 = arith.addi %173, %175 : vector<2x12xi32>
    %177 = arith.cmpi slt, %171, %176 : vector<2x12xi32>
    %178 = arith.andi %174, %177 : vector<2x12xi1>
    %cst_108 = arith.constant 1.000000e+00 : f32
    %cst_109 = arith.constant 0.000000e+00 : f32
    %179 = vector.broadcast %cst_108 : f32 to vector<2x12xf32>
    %180 = vector.broadcast %cst_109 : f32 to vector<2x12xf32>
    %181 = arith.select %178, %179, %180 : vector<2x12xi1>, vector<2x12xf32>
    %182 = arith.truncf %181 : vector<2x12xf32> to vector<2x12xbf16>
    %183 = arith.truncf %169 : vector<12x32xf32> to vector<12x32xbf16>
    %cst_110 = arith.constant dense<0.000000e+00> : vector<2x32xf32>
    %184 = tpu.matmul %182, %183, %cst_110 {dimension_numbers = #tpu.dot_dimension_numbers<[1], [0], [0], [1], [0, 0, 1, 1], [], []>} : vector<2x12xbf16>, vector<12x32xbf16>, vector<2x32xf32> -> vector<2x32xf32>
    %cst_111 = arith.constant 0.166666672 : f32
    %185 = vector.broadcast %cst_111 : f32 to vector<2x32xf32>
    %186 = arith.mulf %184, %185 : vector<2x32xf32>
    %c0_112 = arith.constant 0 : index
    %c0_113 = arith.constant 0 : index
    %187 = vector.load %arg5[%c0_112, %c0_113] : memref<16x20xf32, #tpu.memory_space<vmem>>, vector<16x20xf32>
    %188 = arith.truncf %187 : vector<16x20xf32> to vector<16x20xbf16>
    %c0_114 = arith.constant 0 : index
    %c0_115 = arith.constant 0 : index
    %189 = vector.load %arg22[%c0_114, %c0_115] : memref<20x32xbf16, #tpu.memory_space<vmem>>, vector<20x32xbf16>
    %cst_116 = arith.constant dense<0.000000e+00> : vector<16x32xf32>
    %190 = tpu.matmul %188, %189, %cst_116 {dimension_numbers = #tpu.dot_dimension_numbers<[1], [0], [0], [1], [0, 0, 1, 1], [], []>} : vector<16x20xbf16>, vector<20x32xbf16>, vector<16x32xf32> -> vector<16x32xf32>
    %c0_117 = arith.constant 0 : index
    %c0_118 = arith.constant 0 : index
    %191 = vector.load %arg23[%c0_117, %c0_118] : memref<1x32xf32, #tpu.memory_space<vmem>>, vector<1x32xf32>
    %192 = vector.broadcast %191 : vector<1x32xf32> to vector<16x32xf32>
    %193 = arith.addf %190, %192 : vector<16x32xf32>
    %194 = arith.negf %193 : vector<16x32xf32>
    %195 = math.exp %194 : vector<16x32xf32>
    %cst_119 = arith.constant 1.000000e+00 : f32
    %196 = vector.broadcast %cst_119 : f32 to vector<16x32xf32>
    %197 = arith.addf %196, %195 : vector<16x32xf32>
    %198 = arith.divf %196, %197 : vector<16x32xf32>
    %199 = arith.mulf %193, %198 : vector<16x32xf32>
    %c0_120 = arith.constant 0 : index
    %c0_121 = arith.constant 0 : index
    %200 = vector.load %arg6[%c0_120, %c0_121] : memref<32x10xf32, #tpu.memory_space<vmem>>, vector<32x10xf32>
    %201 = arith.truncf %200 : vector<32x10xf32> to vector<32x10xbf16>
    %c0_122 = arith.constant 0 : index
    %c0_123 = arith.constant 0 : index
    %202 = vector.load %arg7[%c0_122, %c0_123] : memref<32x1xi32, #tpu.memory_space<vmem>>, vector<32x1xi32>
    %c0_124 = arith.constant 0 : index
    %c0_125 = arith.constant 0 : index
    %203 = vector.load %arg8[%c0_124, %c0_125] : memref<32x1xi32, #tpu.memory_space<vmem>>, vector<32x1xi32>
    %c0_126 = arith.constant 0 : index
    %c0_127 = arith.constant 0 : index
    %204 = vector.load %arg9[%c0_126, %c0_127] : memref<1x32xi32, #tpu.memory_space<vmem>>, vector<1x32xi32>
    %205 = tpu.iota {dimensions = array<i32: 1>} : vector<32x16xi32>
    %206 = vector.broadcast %202 : vector<32x1xi32> to vector<32x16xi32>
    %207 = arith.cmpi eq, %205, %206 : vector<32x16xi32>
    %cst_128 = arith.constant 1.000000e+00 : f32
    %cst_129 = arith.constant 0.000000e+00 : f32
    %208 = vector.broadcast %cst_128 : f32 to vector<32x16xf32>
    %209 = vector.broadcast %cst_129 : f32 to vector<32x16xf32>
    %210 = arith.select %207, %208, %209 : vector<32x16xi1>, vector<32x16xf32>
    %211 = arith.truncf %210 : vector<32x16xf32> to vector<32x16xbf16>
    %212 = vector.broadcast %203 : vector<32x1xi32> to vector<32x16xi32>
    %213 = arith.cmpi eq, %205, %212 : vector<32x16xi32>
    %cst_130 = arith.constant 1.000000e+00 : f32
    %cst_131 = arith.constant 0.000000e+00 : f32
    %214 = vector.broadcast %cst_130 : f32 to vector<32x16xf32>
    %215 = vector.broadcast %cst_131 : f32 to vector<32x16xf32>
    %216 = arith.select %213, %214, %215 : vector<32x16xi1>, vector<32x16xf32>
    %217 = arith.truncf %216 : vector<32x16xf32> to vector<32x16xbf16>
    %218 = tpu.iota {dimensions = array<i32: 0>} : vector<16x32xi32>
    %219 = vector.broadcast %204 : vector<1x32xi32> to vector<16x32xi32>
    %220 = arith.cmpi eq, %218, %219 : vector<16x32xi32>
    %cst_132 = arith.constant 1.000000e+00 : f32
    %cst_133 = arith.constant 0.000000e+00 : f32
    %221 = vector.broadcast %cst_132 : f32 to vector<16x32xf32>
    %222 = vector.broadcast %cst_133 : f32 to vector<16x32xf32>
    %223 = arith.select %220, %221, %222 : vector<16x32xi1>, vector<16x32xf32>
    %224 = arith.truncf %223 : vector<16x32xf32> to vector<16x32xbf16>
    %225 = arith.truncf %199 : vector<16x32xf32> to vector<16x32xbf16>
    %cst_134 = arith.constant dense<0.000000e+00> : vector<32x32xf32>
    %226 = tpu.matmul %211, %225, %cst_134 {dimension_numbers = #tpu.dot_dimension_numbers<[1], [0], [0], [1], [0, 0, 1, 1], [], []>} : vector<32x16xbf16>, vector<16x32xbf16>, vector<32x32xf32> -> vector<32x32xf32>
    %227 = arith.truncf %226 : vector<32x32xf32> to vector<32x32xbf16>
    %cst_135 = arith.constant dense<0.000000e+00> : vector<32x32xf32>
    %228 = tpu.matmul %217, %225, %cst_135 {dimension_numbers = #tpu.dot_dimension_numbers<[1], [0], [0], [1], [0, 0, 1, 1], [], []>} : vector<32x16xbf16>, vector<16x32xbf16>, vector<32x32xf32> -> vector<32x32xf32>
    %229 = arith.truncf %228 : vector<32x32xf32> to vector<32x32xbf16>
    %c0_136 = arith.constant 0 : index
    %c0_137 = arith.constant 0 : index
    %c0_138 = arith.constant 0 : index
    %230 = vector.load %arg24[%c0_136, %c0_137, %c0_138] : memref<2x32x32xbf16, #tpu.memory_space<vmem>>, vector<1x32x32xbf16>
    %231 = vector.shape_cast %230 : vector<1x32x32xbf16> to vector<32x32xbf16>
    %cst_139 = arith.constant dense<0.000000e+00> : vector<32x32xf32>
    %232 = tpu.matmul %227, %231, %cst_139 {dimension_numbers = #tpu.dot_dimension_numbers<[1], [0], [0], [1], [0, 0, 1, 1], [], []>} : vector<32x32xbf16>, vector<32x32xbf16>, vector<32x32xf32> -> vector<32x32xf32>
    %c0_140 = arith.constant 0 : index
    %c0_141 = arith.constant 0 : index
    %c0_142 = arith.constant 0 : index
    %233 = vector.load %arg25[%c0_140, %c0_141, %c0_142] : memref<2x32x32xbf16, #tpu.memory_space<vmem>>, vector<1x32x32xbf16>
    %234 = vector.shape_cast %233 : vector<1x32x32xbf16> to vector<32x32xbf16>
    %cst_143 = arith.constant dense<0.000000e+00> : vector<32x32xf32>
    %235 = tpu.matmul %229, %234, %cst_143 {dimension_numbers = #tpu.dot_dimension_numbers<[1], [0], [0], [1], [0, 0, 1, 1], [], []>} : vector<32x32xbf16>, vector<32x32xbf16>, vector<32x32xf32> -> vector<32x32xf32>
    %236 = arith.addf %232, %235 : vector<32x32xf32>
    %c0_144 = arith.constant 0 : index
    %c0_145 = arith.constant 0 : index
    %c0_146 = arith.constant 0 : index
    %237 = vector.load %arg26[%c0_144, %c0_145, %c0_146] : memref<2x10x32xbf16, #tpu.memory_space<vmem>>, vector<1x10x32xbf16>
    %238 = vector.shape_cast %237 : vector<1x10x32xbf16> to vector<10x32xbf16>
    %cst_147 = arith.constant dense<0.000000e+00> : vector<32x32xf32>
    %239 = tpu.matmul %201, %238, %cst_147 {dimension_numbers = #tpu.dot_dimension_numbers<[1], [0], [0], [1], [0, 0, 1, 1], [], []>} : vector<32x10xbf16>, vector<10x32xbf16>, vector<32x32xf32> -> vector<32x32xf32>
    %240 = arith.addf %236, %239 : vector<32x32xf32>
    %c0_148 = arith.constant 0 : index
    %c0_149 = arith.constant 0 : index
    %c0_150 = arith.constant 0 : index
    %241 = vector.load %arg27[%c0_148, %c0_149, %c0_150] : memref<2x1x32xf32, #tpu.memory_space<vmem>>, vector<1x1x32xf32>
    %242 = vector.shape_cast %241 : vector<1x1x32xf32> to vector<1x32xf32>
    %243 = vector.broadcast %242 : vector<1x32xf32> to vector<32x32xf32>
    %244 = arith.addf %240, %243 : vector<32x32xf32>
    %c0_151 = arith.constant 0 : index
    %c0_152 = arith.constant 0 : index
    %c0_153 = arith.constant 0 : index
    %245 = vector.load %arg28[%c0_151, %c0_152, %c0_153] : memref<2x32x32xbf16, #tpu.memory_space<vmem>>, vector<1x32x32xbf16>
    %246 = vector.shape_cast %245 : vector<1x32x32xbf16> to vector<32x32xbf16>
    %cst_154 = arith.constant dense<0.000000e+00> : vector<32x32xf32>
    %247 = tpu.matmul %227, %246, %cst_154 {dimension_numbers = #tpu.dot_dimension_numbers<[1], [0], [0], [1], [0, 0, 1, 1], [], []>} : vector<32x32xbf16>, vector<32x32xbf16>, vector<32x32xf32> -> vector<32x32xf32>
    %c0_155 = arith.constant 0 : index
    %c0_156 = arith.constant 0 : index
    %c0_157 = arith.constant 0 : index
    %248 = vector.load %arg29[%c0_155, %c0_156, %c0_157] : memref<2x32x32xbf16, #tpu.memory_space<vmem>>, vector<1x32x32xbf16>
    %249 = vector.shape_cast %248 : vector<1x32x32xbf16> to vector<32x32xbf16>
    %cst_158 = arith.constant dense<0.000000e+00> : vector<32x32xf32>
    %250 = tpu.matmul %229, %249, %cst_158 {dimension_numbers = #tpu.dot_dimension_numbers<[1], [0], [0], [1], [0, 0, 1, 1], [], []>} : vector<32x32xbf16>, vector<32x32xbf16>, vector<32x32xf32> -> vector<32x32xf32>
    %251 = arith.addf %247, %250 : vector<32x32xf32>
    %c0_159 = arith.constant 0 : index
    %c0_160 = arith.constant 0 : index
    %c0_161 = arith.constant 0 : index
    %252 = vector.load %arg30[%c0_159, %c0_160, %c0_161] : memref<2x10x32xbf16, #tpu.memory_space<vmem>>, vector<1x10x32xbf16>
    %253 = vector.shape_cast %252 : vector<1x10x32xbf16> to vector<10x32xbf16>
    %cst_162 = arith.constant dense<0.000000e+00> : vector<32x32xf32>
    %254 = tpu.matmul %201, %253, %cst_162 {dimension_numbers = #tpu.dot_dimension_numbers<[1], [0], [0], [1], [0, 0, 1, 1], [], []>} : vector<32x10xbf16>, vector<10x32xbf16>, vector<32x32xf32> -> vector<32x32xf32>
    %255 = arith.addf %251, %254 : vector<32x32xf32>
    %c0_163 = arith.constant 0 : index
    %c0_164 = arith.constant 0 : index
    %c0_165 = arith.constant 0 : index
    %256 = vector.load %arg31[%c0_163, %c0_164, %c0_165] : memref<2x1x32xf32, #tpu.memory_space<vmem>>, vector<1x1x32xf32>
    %257 = vector.shape_cast %256 : vector<1x1x32xf32> to vector<1x32xf32>
    %258 = vector.broadcast %257 : vector<1x32xf32> to vector<32x32xf32>
    %259 = arith.addf %255, %258 : vector<32x32xf32>
    %260 = arith.negf %244 : vector<32x32xf32>
    %261 = math.exp %260 : vector<32x32xf32>
    %cst_166 = arith.constant 1.000000e+00 : f32
    %262 = vector.broadcast %cst_166 : f32 to vector<32x32xf32>
    %263 = arith.addf %262, %261 : vector<32x32xf32>
    %264 = arith.divf %262, %263 : vector<32x32xf32>
    %cst_167 = arith.constant 2.000000e+01 : f32
    %265 = vector.broadcast %cst_167 : f32 to vector<32x32xf32>
    %266 = arith.cmpf ogt, %259, %265 : vector<32x32xf32>
    %cst_168 = arith.constant 2.000000e+01 : f32
    %267 = vector.broadcast %cst_168 : f32 to vector<32x32xf32>
    %268 = arith.minimumf %259, %267 : vector<32x32xf32>
    %269 = math.exp %268 : vector<32x32xf32>
    %270 = math.log1p %269 : vector<32x32xf32>
    %271 = arith.select %266, %259, %270 : vector<32x32xi1>, vector<32x32xf32>
    %272 = arith.mulf %264, %271 : vector<32x32xf32>
    %273 = arith.truncf %272 : vector<32x32xf32> to vector<32x32xbf16>
    %cst_169 = arith.constant dense<0.000000e+00> : vector<16x32xf32>
    %274 = tpu.matmul %224, %273, %cst_169 {dimension_numbers = #tpu.dot_dimension_numbers<[1], [0], [0], [1], [0, 0, 1, 1], [], []>} : vector<16x32xbf16>, vector<32x32xbf16>, vector<16x32xf32> -> vector<16x32xf32>
    %c0_170 = arith.constant 0 : index
    %c0_171 = arith.constant 0 : index
    %c0_172 = arith.constant 0 : index
    %275 = vector.load %arg32[%c0_170, %c0_171, %c0_172] : memref<2x1x32xf32, #tpu.memory_space<vmem>>, vector<1x1x32xf32>
    %276 = vector.shape_cast %275 : vector<1x1x32xf32> to vector<1x32xf32>
    %277 = vector.broadcast %276 : vector<1x32xf32> to vector<16x32xf32>
    %278 = arith.mulf %274, %277 : vector<16x32xf32>
    %c0_173 = arith.constant 0 : index
    %c0_174 = arith.constant 0 : index
    %c0_175 = arith.constant 0 : index
    %279 = vector.load %arg33[%c0_173, %c0_174, %c0_175] : memref<2x1x32xf32, #tpu.memory_space<vmem>>, vector<1x1x32xf32>
    %280 = vector.shape_cast %279 : vector<1x1x32xf32> to vector<1x32xf32>
    %281 = vector.broadcast %280 : vector<1x32xf32> to vector<16x32xf32>
    %282 = arith.addf %278, %281 : vector<16x32xf32>
    %283 = arith.addf %282, %199 : vector<16x32xf32>
    %cst_176 = arith.constant 2.000000e+01 : f32
    %284 = vector.broadcast %cst_176 : f32 to vector<16x32xf32>
    %285 = arith.cmpf ogt, %283, %284 : vector<16x32xf32>
    %cst_177 = arith.constant 2.000000e+01 : f32
    %286 = vector.broadcast %cst_177 : f32 to vector<16x32xf32>
    %287 = arith.minimumf %283, %286 : vector<16x32xf32>
    %288 = math.exp %287 : vector<16x32xf32>
    %289 = math.log1p %288 : vector<16x32xf32>
    %290 = arith.select %285, %283, %289 : vector<16x32xi1>, vector<16x32xf32>
    %291 = arith.truncf %290 : vector<16x32xf32> to vector<16x32xbf16>
    %cst_178 = arith.constant dense<0.000000e+00> : vector<32x32xf32>
    %292 = tpu.matmul %211, %291, %cst_178 {dimension_numbers = #tpu.dot_dimension_numbers<[1], [0], [0], [1], [0, 0, 1, 1], [], []>} : vector<32x16xbf16>, vector<16x32xbf16>, vector<32x32xf32> -> vector<32x32xf32>
    %293 = arith.truncf %292 : vector<32x32xf32> to vector<32x32xbf16>
    %cst_179 = arith.constant dense<0.000000e+00> : vector<32x32xf32>
    %294 = tpu.matmul %217, %291, %cst_179 {dimension_numbers = #tpu.dot_dimension_numbers<[1], [0], [0], [1], [0, 0, 1, 1], [], []>} : vector<32x16xbf16>, vector<16x32xbf16>, vector<32x32xf32> -> vector<32x32xf32>
    %295 = arith.truncf %294 : vector<32x32xf32> to vector<32x32xbf16>
    %c1_180 = arith.constant 1 : index
    %c0_181 = arith.constant 0 : index
    %c0_182 = arith.constant 0 : index
    %296 = vector.load %arg24[%c1_180, %c0_181, %c0_182] : memref<2x32x32xbf16, #tpu.memory_space<vmem>>, vector<1x32x32xbf16>
    %297 = vector.shape_cast %296 : vector<1x32x32xbf16> to vector<32x32xbf16>
    %cst_183 = arith.constant dense<0.000000e+00> : vector<32x32xf32>
    %298 = tpu.matmul %293, %297, %cst_183 {dimension_numbers = #tpu.dot_dimension_numbers<[1], [0], [0], [1], [0, 0, 1, 1], [], []>} : vector<32x32xbf16>, vector<32x32xbf16>, vector<32x32xf32> -> vector<32x32xf32>
    %c1_184 = arith.constant 1 : index
    %c0_185 = arith.constant 0 : index
    %c0_186 = arith.constant 0 : index
    %299 = vector.load %arg25[%c1_184, %c0_185, %c0_186] : memref<2x32x32xbf16, #tpu.memory_space<vmem>>, vector<1x32x32xbf16>
    %300 = vector.shape_cast %299 : vector<1x32x32xbf16> to vector<32x32xbf16>
    %cst_187 = arith.constant dense<0.000000e+00> : vector<32x32xf32>
    %301 = tpu.matmul %295, %300, %cst_187 {dimension_numbers = #tpu.dot_dimension_numbers<[1], [0], [0], [1], [0, 0, 1, 1], [], []>} : vector<32x32xbf16>, vector<32x32xbf16>, vector<32x32xf32> -> vector<32x32xf32>
    %302 = arith.addf %298, %301 : vector<32x32xf32>
    %c1_188 = arith.constant 1 : index
    %c0_189 = arith.constant 0 : index
    %c0_190 = arith.constant 0 : index
    %303 = vector.load %arg26[%c1_188, %c0_189, %c0_190] : memref<2x10x32xbf16, #tpu.memory_space<vmem>>, vector<1x10x32xbf16>
    %304 = vector.shape_cast %303 : vector<1x10x32xbf16> to vector<10x32xbf16>
    %cst_191 = arith.constant dense<0.000000e+00> : vector<32x32xf32>
    %305 = tpu.matmul %201, %304, %cst_191 {dimension_numbers = #tpu.dot_dimension_numbers<[1], [0], [0], [1], [0, 0, 1, 1], [], []>} : vector<32x10xbf16>, vector<10x32xbf16>, vector<32x32xf32> -> vector<32x32xf32>
    %306 = arith.addf %302, %305 : vector<32x32xf32>
    %c1_192 = arith.constant 1 : index
    %c0_193 = arith.constant 0 : index
    %c0_194 = arith.constant 0 : index
    %307 = vector.load %arg27[%c1_192, %c0_193, %c0_194] : memref<2x1x32xf32, #tpu.memory_space<vmem>>, vector<1x1x32xf32>
    %308 = vector.shape_cast %307 : vector<1x1x32xf32> to vector<1x32xf32>
    %309 = vector.broadcast %308 : vector<1x32xf32> to vector<32x32xf32>
    %310 = arith.addf %306, %309 : vector<32x32xf32>
    %c1_195 = arith.constant 1 : index
    %c0_196 = arith.constant 0 : index
    %c0_197 = arith.constant 0 : index
    %311 = vector.load %arg28[%c1_195, %c0_196, %c0_197] : memref<2x32x32xbf16, #tpu.memory_space<vmem>>, vector<1x32x32xbf16>
    %312 = vector.shape_cast %311 : vector<1x32x32xbf16> to vector<32x32xbf16>
    %cst_198 = arith.constant dense<0.000000e+00> : vector<32x32xf32>
    %313 = tpu.matmul %293, %312, %cst_198 {dimension_numbers = #tpu.dot_dimension_numbers<[1], [0], [0], [1], [0, 0, 1, 1], [], []>} : vector<32x32xbf16>, vector<32x32xbf16>, vector<32x32xf32> -> vector<32x32xf32>
    %c1_199 = arith.constant 1 : index
    %c0_200 = arith.constant 0 : index
    %c0_201 = arith.constant 0 : index
    %314 = vector.load %arg29[%c1_199, %c0_200, %c0_201] : memref<2x32x32xbf16, #tpu.memory_space<vmem>>, vector<1x32x32xbf16>
    %315 = vector.shape_cast %314 : vector<1x32x32xbf16> to vector<32x32xbf16>
    %cst_202 = arith.constant dense<0.000000e+00> : vector<32x32xf32>
    %316 = tpu.matmul %295, %315, %cst_202 {dimension_numbers = #tpu.dot_dimension_numbers<[1], [0], [0], [1], [0, 0, 1, 1], [], []>} : vector<32x32xbf16>, vector<32x32xbf16>, vector<32x32xf32> -> vector<32x32xf32>
    %317 = arith.addf %313, %316 : vector<32x32xf32>
    %c1_203 = arith.constant 1 : index
    %c0_204 = arith.constant 0 : index
    %c0_205 = arith.constant 0 : index
    %318 = vector.load %arg30[%c1_203, %c0_204, %c0_205] : memref<2x10x32xbf16, #tpu.memory_space<vmem>>, vector<1x10x32xbf16>
    %319 = vector.shape_cast %318 : vector<1x10x32xbf16> to vector<10x32xbf16>
    %cst_206 = arith.constant dense<0.000000e+00> : vector<32x32xf32>
    %320 = tpu.matmul %201, %319, %cst_206 {dimension_numbers = #tpu.dot_dimension_numbers<[1], [0], [0], [1], [0, 0, 1, 1], [], []>} : vector<32x10xbf16>, vector<10x32xbf16>, vector<32x32xf32> -> vector<32x32xf32>
    %321 = arith.addf %317, %320 : vector<32x32xf32>
    %c1_207 = arith.constant 1 : index
    %c0_208 = arith.constant 0 : index
    %c0_209 = arith.constant 0 : index
    %322 = vector.load %arg31[%c1_207, %c0_208, %c0_209] : memref<2x1x32xf32, #tpu.memory_space<vmem>>, vector<1x1x32xf32>
    %323 = vector.shape_cast %322 : vector<1x1x32xf32> to vector<1x32xf32>
    %324 = vector.broadcast %323 : vector<1x32xf32> to vector<32x32xf32>
    %325 = arith.addf %321, %324 : vector<32x32xf32>
    %326 = arith.negf %310 : vector<32x32xf32>
    %327 = math.exp %326 : vector<32x32xf32>
    %cst_210 = arith.constant 1.000000e+00 : f32
    %328 = vector.broadcast %cst_210 : f32 to vector<32x32xf32>
    %329 = arith.addf %328, %327 : vector<32x32xf32>
    %330 = arith.divf %328, %329 : vector<32x32xf32>
    %cst_211 = arith.constant 2.000000e+01 : f32
    %331 = vector.broadcast %cst_211 : f32 to vector<32x32xf32>
    %332 = arith.cmpf ogt, %325, %331 : vector<32x32xf32>
    %cst_212 = arith.constant 2.000000e+01 : f32
    %333 = vector.broadcast %cst_212 : f32 to vector<32x32xf32>
    %334 = arith.minimumf %325, %333 : vector<32x32xf32>
    %335 = math.exp %334 : vector<32x32xf32>
    %336 = math.log1p %335 : vector<32x32xf32>
    %337 = arith.select %332, %325, %336 : vector<32x32xi1>, vector<32x32xf32>
    %338 = arith.mulf %330, %337 : vector<32x32xf32>
    %339 = arith.truncf %338 : vector<32x32xf32> to vector<32x32xbf16>
    %cst_213 = arith.constant dense<0.000000e+00> : vector<16x32xf32>
    %340 = tpu.matmul %224, %339, %cst_213 {dimension_numbers = #tpu.dot_dimension_numbers<[1], [0], [0], [1], [0, 0, 1, 1], [], []>} : vector<16x32xbf16>, vector<32x32xbf16>, vector<16x32xf32> -> vector<16x32xf32>
    %c1_214 = arith.constant 1 : index
    %c0_215 = arith.constant 0 : index
    %c0_216 = arith.constant 0 : index
    %341 = vector.load %arg32[%c1_214, %c0_215, %c0_216] : memref<2x1x32xf32, #tpu.memory_space<vmem>>, vector<1x1x32xf32>
    %342 = vector.shape_cast %341 : vector<1x1x32xf32> to vector<1x32xf32>
    %343 = vector.broadcast %342 : vector<1x32xf32> to vector<16x32xf32>
    %344 = arith.mulf %340, %343 : vector<16x32xf32>
    %c1_217 = arith.constant 1 : index
    %c0_218 = arith.constant 0 : index
    %c0_219 = arith.constant 0 : index
    %345 = vector.load %arg33[%c1_217, %c0_218, %c0_219] : memref<2x1x32xf32, #tpu.memory_space<vmem>>, vector<1x1x32xf32>
    %346 = vector.shape_cast %345 : vector<1x1x32xf32> to vector<1x32xf32>
    %347 = vector.broadcast %346 : vector<1x32xf32> to vector<16x32xf32>
    %348 = arith.addf %344, %347 : vector<16x32xf32>
    %349 = arith.addf %348, %290 : vector<16x32xf32>
    %cst_220 = arith.constant 2.000000e+01 : f32
    %350 = vector.broadcast %cst_220 : f32 to vector<16x32xf32>
    %351 = arith.cmpf ogt, %349, %350 : vector<16x32xf32>
    %cst_221 = arith.constant 2.000000e+01 : f32
    %352 = vector.broadcast %cst_221 : f32 to vector<16x32xf32>
    %353 = arith.minimumf %349, %352 : vector<16x32xf32>
    %354 = math.exp %353 : vector<16x32xf32>
    %355 = math.log1p %354 : vector<16x32xf32>
    %356 = arith.select %351, %349, %355 : vector<16x32xi1>, vector<16x32xf32>
    %357 = tpu.iota {dimensions = array<i32: 0>} : vector<2x16xi32>
    %358 = tpu.iota {dimensions = array<i32: 1>} : vector<2x16xi32>
    %c8_i32 = arith.constant 8 : i32
    %359 = vector.broadcast %c8_i32 : i32 to vector<2x16xi32>
    %360 = arith.muli %357, %359 : vector<2x16xi32>
    %361 = arith.cmpi sge, %358, %360 : vector<2x16xi32>
    %c8_i32_222 = arith.constant 8 : i32
    %362 = vector.broadcast %c8_i32_222 : i32 to vector<2x16xi32>
    %363 = arith.addi %360, %362 : vector<2x16xi32>
    %364 = arith.cmpi slt, %358, %363 : vector<2x16xi32>
    %365 = arith.andi %361, %364 : vector<2x16xi1>
    %cst_223 = arith.constant 1.000000e+00 : f32
    %cst_224 = arith.constant 0.000000e+00 : f32
    %366 = vector.broadcast %cst_223 : f32 to vector<2x16xf32>
    %367 = vector.broadcast %cst_224 : f32 to vector<2x16xf32>
    %368 = arith.select %365, %366, %367 : vector<2x16xi1>, vector<2x16xf32>
    %369 = arith.truncf %368 : vector<2x16xf32> to vector<2x16xbf16>
    %370 = arith.truncf %356 : vector<16x32xf32> to vector<16x32xbf16>
    %cst_225 = arith.constant dense<0.000000e+00> : vector<2x32xf32>
    %371 = tpu.matmul %369, %370, %cst_225 {dimension_numbers = #tpu.dot_dimension_numbers<[1], [0], [0], [1], [0, 0, 1, 1], [], []>} : vector<2x16xbf16>, vector<16x32xbf16>, vector<2x32xf32> -> vector<2x32xf32>
    %cst_226 = arith.constant 1.250000e-01 : f32
    %372 = vector.broadcast %cst_226 : f32 to vector<2x32xf32>
    %373 = arith.mulf %371, %372 : vector<2x32xf32>
    %374 = arith.truncf %186 : vector<2x32xf32> to vector<2x32xbf16>
    %c0_227 = arith.constant 0 : index
    %c0_228 = arith.constant 0 : index
    %375 = vector.load %arg34[%c0_227, %c0_228] : memref<32x32xbf16, #tpu.memory_space<vmem>>, vector<32x32xbf16>
    %cst_229 = arith.constant dense<0.000000e+00> : vector<2x32xf32>
    %376 = tpu.matmul %374, %375, %cst_229 {dimension_numbers = #tpu.dot_dimension_numbers<[1], [0], [0], [1], [0, 0, 1, 1], [], []>} : vector<2x32xbf16>, vector<32x32xbf16>, vector<2x32xf32> -> vector<2x32xf32>
    %377 = arith.truncf %373 : vector<2x32xf32> to vector<2x32xbf16>
    %c0_230 = arith.constant 0 : index
    %c0_231 = arith.constant 0 : index
    %378 = vector.load %arg35[%c0_230, %c0_231] : memref<32x32xbf16, #tpu.memory_space<vmem>>, vector<32x32xbf16>
    %cst_232 = arith.constant dense<0.000000e+00> : vector<2x32xf32>
    %379 = tpu.matmul %377, %378, %cst_232 {dimension_numbers = #tpu.dot_dimension_numbers<[1], [0], [0], [1], [0, 0, 1, 1], [], []>} : vector<2x32xbf16>, vector<32x32xbf16>, vector<2x32xf32> -> vector<2x32xf32>
    %380 = arith.addf %376, %379 : vector<2x32xf32>
    %c0_233 = arith.constant 0 : index
    %c0_234 = arith.constant 0 : index
    %381 = vector.load %arg36[%c0_233, %c0_234] : memref<1x32xf32, #tpu.memory_space<vmem>>, vector<1x32xf32>
    %382 = vector.broadcast %381 : vector<1x32xf32> to vector<2x32xf32>
    %383 = arith.addf %380, %382 : vector<2x32xf32>
    %384 = arith.negf %383 : vector<2x32xf32>
    %385 = math.exp %384 : vector<2x32xf32>
    %cst_235 = arith.constant 1.000000e+00 : f32
    %386 = vector.broadcast %cst_235 : f32 to vector<2x32xf32>
    %387 = arith.addf %386, %385 : vector<2x32xf32>
    %388 = arith.divf %386, %387 : vector<2x32xf32>
    %389 = arith.mulf %383, %388 : vector<2x32xf32>
    %390 = arith.truncf %389 : vector<2x32xf32> to vector<2x32xbf16>
    %c0_236 = arith.constant 0 : index
    %c0_237 = arith.constant 0 : index
    %391 = vector.load %arg37[%c0_236, %c0_237] : memref<32x16xbf16, #tpu.memory_space<vmem>>, vector<32x16xbf16>
    %cst_238 = arith.constant dense<0.000000e+00> : vector<2x16xf32>
    %392 = tpu.matmul %390, %391, %cst_238 {dimension_numbers = #tpu.dot_dimension_numbers<[1], [0], [0], [1], [0, 0, 1, 1], [], []>} : vector<2x32xbf16>, vector<32x16xbf16>, vector<2x16xf32> -> vector<2x16xf32>
    %c0_239 = arith.constant 0 : index
    %c0_240 = arith.constant 0 : index
    %393 = vector.load %arg38[%c0_239, %c0_240] : memref<1x16xf32, #tpu.memory_space<vmem>>, vector<1x16xf32>
    %394 = vector.broadcast %393 : vector<1x16xf32> to vector<2x16xf32>
    %395 = arith.addf %392, %394 : vector<2x16xf32>
    %396 = arith.negf %395 : vector<2x16xf32>
    %397 = math.exp %396 : vector<2x16xf32>
    %cst_241 = arith.constant 1.000000e+00 : f32
    %398 = vector.broadcast %cst_241 : f32 to vector<2x16xf32>
    %399 = arith.addf %398, %397 : vector<2x16xf32>
    %400 = arith.divf %398, %399 : vector<2x16xf32>
    %401 = arith.mulf %395, %400 : vector<2x16xf32>
    %402 = arith.truncf %401 : vector<2x16xf32> to vector<2x16xbf16>
    %c0_242 = arith.constant 0 : index
    %c0_243 = arith.constant 0 : index
    %403 = vector.load %arg39[%c0_242, %c0_243] : memref<16x128xbf16, #tpu.memory_space<vmem>>, vector<16x128xbf16>
    %cst_244 = arith.constant dense<0.000000e+00> : vector<2x128xf32>
    %404 = tpu.matmul %402, %403, %cst_244 {dimension_numbers = #tpu.dot_dimension_numbers<[1], [0], [0], [1], [0, 0, 1, 1], [], []>} : vector<2x16xbf16>, vector<16x128xbf16>, vector<2x128xf32> -> vector<2x128xf32>
    %c0_245 = arith.constant 0 : index
    %c0_246 = arith.constant 0 : index
    %405 = vector.load %arg40[%c0_245, %c0_246] : memref<1x128xf32, #tpu.memory_space<vmem>>, vector<1x128xf32>
    %406 = vector.broadcast %405 : vector<1x128xf32> to vector<2x128xf32>
    %407 = arith.addf %404, %406 : vector<2x128xf32>
    %c0_247 = arith.constant 0 : index
    %c0_248 = arith.constant 0 : index
    %408 = vector.load %arg41[%c0_247, %c0_248] : memref<2x128xf32, #tpu.memory_space<vmem>>, vector<2x128xf32>
    tpu.vector_store %arg41[%c0_247, %c0_248], %407 {strides = array<i32>} : memref<2x128xf32, #tpu.memory_space<vmem>>, vector<2x128xf32>,
    return
  }
}

</mosaic_0001>

<llo_original>
// kernel: tpu_custom_call.1
$region0: #{tpu_custom_call.1}
  #allocation0 [shape = 'u32[]', space=smem, size = 0x4, offset = 0x4, fixed_abs, tag = 'smem constant byte address 0x4 - core index']
  #allocation1 [shape = 'u32[144,128]{1,0:T(1,128)}', space=vmem, size = 0x12000, scoped, tag = 'internal scratch']
  %s0 = inlined_call_operand.smem [shape: u32[42], index: -1, kind: input, shape index: {}]
  %s1 = sld [smem:[%s0]]
  %s2 = scalar_lea.smem %s0, 1
  %s3 = sld [smem:[%s2]]
  %s4 = scalar_lea.smem %s0, 2
  %s5 = sld [smem:[%s4]]
  %s6 = scalar_lea.smem %s0, 3
  %s7 = sld [smem:[%s6]]
  %s8 = scalar_lea.smem %s0, 4
  %s9 = sld [smem:[%s8]]
  %s10 = scalar_lea.smem %s0, 5
  %s11 = sld [smem:[%s10]]
  %s12 = scalar_lea.smem %s0, 6
  %s13 = sld [smem:[%s12]]
  %s14 = scalar_lea.smem %s0, 7
  %s15 = sld [smem:[%s14]]
  %s16 = scalar_lea.smem %s0, 8
  %s17 = sld [smem:[%s16]]
  %s18 = scalar_lea.smem %s0, 9
  %s19 = sld [smem:[%s18]]
  %s20 = scalar_lea.smem %s0, 10
  %s21 = sld [smem:[%s20]]
  %s22 = scalar_lea.smem %s0, 11
  %s23 = sld [smem:[%s22]]
  %s24 = scalar_lea.smem %s0, 12
  %s25 = sld [smem:[%s24]]
  %s26 = scalar_lea.smem %s0, 13
  %s27 = sld [smem:[%s26]]
  %s28 = scalar_lea.smem %s0, 14
  %s29 = sld [smem:[%s28]]
  %s30 = scalar_lea.smem %s0, 15
  %s31 = sld [smem:[%s30]]
  %s32 = scalar_lea.smem %s0, 16
  %s33 = sld [smem:[%s32]]
  %s34 = scalar_lea.smem %s0, 17
  %s35 = sld [smem:[%s34]]
  %s36 = scalar_lea.smem %s0, 18
  %s37 = sld [smem:[%s36]]
  %s38 = scalar_lea.smem %s0, 19
  %s39 = sld [smem:[%s38]]
  %s40 = scalar_lea.smem %s0, 20
  %s41 = sld [smem:[%s40]]
  %s42 = scalar_lea.smem %s0, 21
  %s43 = sld [smem:[%s42]]
  %s44 = scalar_lea.smem %s0, 22
  %s45 = sld [smem:[%s44]]
  %s46 = scalar_lea.smem %s0, 23
  %s47 = sld [smem:[%s46]]
  %s48 = scalar_lea.smem %s0, 24
  %s49 = sld [smem:[%s48]]
  %s50 = scalar_lea.smem %s0, 25
  %s51 = sld [smem:[%s50]]
  %s52 = scalar_lea.smem %s0, 26
  %s53 = sld [smem:[%s52]]
  %s54 = scalar_lea.smem %s0, 27
  %s55 = sld [smem:[%s54]]
  %s56 = scalar_lea.smem %s0, 28
  %s57 = sld [smem:[%s56]]
  %s58 = scalar_lea.smem %s0, 29
  %s59 = sld [smem:[%s58]]
  %s60 = scalar_lea.smem %s0, 30
  %s61 = sld [smem:[%s60]]
  %s62 = scalar_lea.smem %s0, 31
  %s63 = sld [smem:[%s62]]
  %s64 = scalar_lea.smem %s0, 32
  %s65 = sld [smem:[%s64]]
  %s66 = scalar_lea.smem %s0, 33
  %s67 = sld [smem:[%s66]]
  %s68 = scalar_lea.smem %s0, 34
  %s69 = sld [smem:[%s68]]
  %s70 = scalar_lea.smem %s0, 35
  %s71 = sld [smem:[%s70]]
  %s72 = scalar_lea.smem %s0, 36
  %s73 = sld [smem:[%s72]]
  %s74 = scalar_lea.smem %s0, 37
  %s75 = sld [smem:[%s74]]
  %s76 = scalar_lea.smem %s0, 38
  %s77 = sld [smem:[%s76]]
  %s78 = scalar_lea.smem %s0, 39
  %s79 = sld [smem:[%s78]]
  %s80 = scalar_lea.smem %s0, 40
  %s81 = sld [smem:[%s80]]
  %s82 = scalar_lea.smem %s0, 41
  %s83 = sld [smem:[%s82]]
  %s84 = sld [smem:[#allocation0]]
  $region202: #{tpu_custom_call.1} parent=0
    _
  %s86 = ssub.s32 1, %s84
  %s87 = scalar_select 0, %s86, %s84
  $region1: #{tpu_custom_call.1} parent=0
    #allocation2 [shape = 'u8[512]{0}', space=vmem, size = 0x400, scoped, tag = 'input window, operand 4, single buffered']
    #allocation3 [shape = 's32[1]{0}', space=sflag, size = 0x4, scoped, tag = 'scoped memory for tpu_custom_call.1']
    #allocation4 [shape = 's32[1]{0}', space=sflag, size = 0x4, scoped, tag = 'scoped memory for tpu_custom_call.1']
    #allocation5 [shape = 'u8[512]{0}', space=vmem, size = 0x400, scoped, tag = 'input window, operand 9, single buffered']
    #allocation6 [shape = 's32[1]{0}', space=sflag, size = 0x4, scoped, tag = 'scoped memory for tpu_custom_call.1']
    #allocation7 [shape = 'u8[512]{0}', space=vmem, size = 0x400, scoped, tag = 'input window, operand 11, single buffered']
    #allocation8 [shape = 'u8[1024]{0}', space=vmem, size = 0x400, scoped, tag = 'input window, operand 15, single buffered']
    #allocation9 [shape = 's32[1]{0}', space=sflag, size = 0x4, scoped, tag = 'scoped memory for tpu_custom_call.1']
    #allocation10 [shape = 'u8[1024]{0}', space=vmem, size = 0x400, scoped, tag = 'input window, operand 19, single buffered']
    #allocation11 [shape = 'u8[1024]{0}', space=vmem, size = 0x400, scoped, tag = 'input window, operand 21, single buffered']
    #allocation12 [shape = 's32[1]{0}', space=sflag, size = 0x4, scoped, tag = 'scoped memory for tpu_custom_call.1']
    #allocation13 [shape = 'u8[512]{0}', space=vmem, size = 0x400, scoped, tag = 'input window, operand 23, single buffered']
    #allocation14 [shape = 'u8[1024]{0}', space=vmem, size = 0x400, scoped, tag = 'output window, operand 0, single buffered']
    %88 = vsyncpa [#allocation3], 0
    %89 = vsyncpa [#allocation6], 0
    %90 = vsyncpa [#allocation9], 0
    %91 = vsyncpa [#allocation12], 0
    %92 = vsyncpa [#allocation4], 0
    // Predicated region
    $region2: #{tpu_custom_call.1} parent=1 // pred_check
      _
    $region3: #{tpu_custom_call.1} parent=1 // pred_check_branch
      %94 = sbr.rel (0) target = $region5
    $region4: #{tpu_custom_call.1} parent=1 // pred_region
      _
    $region5: #{tpu_custom_call.1} parent=1 // pred_fallthru
      _
    // Predicated region
    $region6: #{tpu_custom_call.1} parent=1 // pred_check
      _
    $region7: #{tpu_custom_call.1} parent=1 // pred_check_branch
      %96 = sbr.rel (0) target = $region9
    $region8: #{tpu_custom_call.1} parent=1 // pred_region
      _
    $region9: #{tpu_custom_call.1} parent=1 // pred_fallthru
      _
    // Predicated region
    $region10: #{tpu_custom_call.1} parent=1 // pred_check
      _
    $region11: #{tpu_custom_call.1} parent=1 // pred_check_branch
      %98 = sbr.rel (0) target = $region13
    $region12: #{tpu_custom_call.1} parent=1 // pred_region
      _
    $region13: #{tpu_custom_call.1} parent=1 // pred_fallthru
      _
    // Predicated region
    $region14: #{tpu_custom_call.1} parent=1 // pred_check
      _
    $region15: #{tpu_custom_call.1} parent=1 // pred_check_branch
      %100 = sbr.rel (0) target = $region17
    $region16: #{tpu_custom_call.1} parent=1 // pred_region
      _
    $region17: #{tpu_custom_call.1} parent=1 // pred_fallthru
      _
    // Predicated region
    $region18: #{tpu_custom_call.1} parent=1 // pred_check
      _
    $region19: #{tpu_custom_call.1} parent=1 // pred_check_branch
      %102 = sbr.rel (0) target = $region21
    $region20: #{tpu_custom_call.1} parent=1 // pred_region
      %s104 = ssub.s32 16, 16
      %105 = vsyncadd [#allocation3], %s104
      %s107 = sshll.u32 [#allocation2], 4
      %s108 = int_to_ptr.vmem [resolvable:$true] %s107
      %110 = dma.hbm_to_vmem [thread:$0]  %s9, 16, %s108, [#allocation3]
    $region21: #{tpu_custom_call.1} parent=1 // pred_fallthru
      _
    // Predicated region
    $region22: #{tpu_custom_call.1} parent=1 // pred_check
      _
    $region23: #{tpu_custom_call.1} parent=1 // pred_check_branch
      %112 = sbr.rel (0) target = $region25
    $region24: #{tpu_custom_call.1} parent=1 // pred_region
      _
    $region25: #{tpu_custom_call.1} parent=1 // pred_fallthru
      _
    // Predicated region
    $region26: #{tpu_custom_call.1} parent=1 // pred_check
      _
    $region27: #{tpu_custom_call.1} parent=1 // pred_check_branch
      %114 = sbr.rel (0) target = $region29
    $region28: #{tpu_custom_call.1} parent=1 // pred_region
      _
    $region29: #{tpu_custom_call.1} parent=1 // pred_fallthru
      _
    // Predicated region
    $region30: #{tpu_custom_call.1} parent=1 // pred_check
      _
    $region31: #{tpu_custom_call.1} parent=1 // pred_check_branch
      %116 = sbr.rel (0) target = $region33
    $region32: #{tpu_custom_call.1} parent=1 // pred_region
      _
    $region33: #{tpu_custom_call.1} parent=1 // pred_fallthru
      _
    // Predicated region
    $region34: #{tpu_custom_call.1} parent=1 // pred_check
      _
    $region35: #{tpu_custom_call.1} parent=1 // pred_check_branch
      %118 = sbr.rel (0) target = $region37
    $region36: #{tpu_custom_call.1} parent=1 // pred_region
      _
    $region37: #{tpu_custom_call.1} parent=1 // pred_fallthru
      _
    // Predicated region
    $region38: #{tpu_custom_call.1} parent=1 // pred_check
      _
    $region39: #{tpu_custom_call.1} parent=1 // pred_check_branch
      %120 = sbr.rel (0) target = $region41
    $region40: #{tpu_custom_call.1} parent=1 // pred_region
      %s122 = ssub.s32 16, 16
      %123 = vsyncadd [#allocation6], %s122
      %s125 = sshll.u32 [#allocation5], 4
      %s126 = int_to_ptr.vmem [resolvable:$true] %s125
      %128 = dma.hbm_to_vmem [thread:$0]  %s19, 16, %s126, [#allocation6]
    $region41: #{tpu_custom_call.1} parent=1 // pred_fallthru
      _
    // Predicated region
    $region42: #{tpu_custom_call.1} parent=1 // pred_check
      _
    $region43: #{tpu_custom_call.1} parent=1 // pred_check_branch
      %130 = sbr.rel (0) target = $region45
    $region44: #{tpu_custom_call.1} parent=1 // pred_region
      _
    $region45: #{tpu_custom_call.1} parent=1 // pred_fallthru
      _
    // Predicated region
    $region46: #{tpu_custom_call.1} parent=1 // pred_check
      _
    $region47: #{tpu_custom_call.1} parent=1 // pred_check_branch
      %132 = sbr.rel (0) target = $region49
    $region48: #{tpu_custom_call.1} parent=1 // pred_region
      %s134 = ssub.s32 16, 16
      %135 = vsyncadd [#allocation6], %s134
      %s137 = sshll.u32 [#allocation7], 4
      %s138 = int_to_ptr.vmem [resolvable:$true] %s137
      %140 = dma.hbm_to_vmem [thread:$0]  %s23, 16, %s138, [#allocation6]
    $region49: #{tpu_custom_call.1} parent=1 // pred_fallthru
      _
    // Predicated region
    $region50: #{tpu_custom_call.1} parent=1 // pred_check
      _
    $region51: #{tpu_custom_call.1} parent=1 // pred_check_branch
      %142 = sbr.rel (0) target = $region53
    $region52: #{tpu_custom_call.1} parent=1 // pred_region
      _
    $region53: #{tpu_custom_call.1} parent=1 // pred_fallthru
      _
    // Predicated region
    $region54: #{tpu_custom_call.1} parent=1 // pred_check
      _
    $region55: #{tpu_custom_call.1} parent=1 // pred_check_branch
      %144 = sbr.rel (0) target = $region57
    $region56: #{tpu_custom_call.1} parent=1 // pred_region
      _
    $region57: #{tpu_custom_call.1} parent=1 // pred_fallthru
      _
    // Predicated region
    $region58: #{tpu_custom_call.1} parent=1 // pred_check
      _
    $region59: #{tpu_custom_call.1} parent=1 // pred_check_branch
      %146 = sbr.rel (0) target = $region61
    $region60: #{tpu_custom_call.1} parent=1 // pred_region
      _
    $region61: #{tpu_custom_call.1} parent=1 // pred_fallthru
      _
    // Predicated region
    $region62: #{tpu_custom_call.1} parent=1 // pred_check
      _
    $region63: #{tpu_custom_call.1} parent=1 // pred_check_branch
      %148 = sbr.rel (0) target = $region65
    $region64: #{tpu_custom_call.1} parent=1 // pred_region
      %s150 = ssub.s32 32, 32
      %151 = vsyncadd [#allocation9], %s150
      %s152 = sshll.u32 [#allocation8], 4
      %s153 = int_to_ptr.vmem [resolvable:$true] %s152
      %158 = dma.hbm_to_vmem [thread:$0]  %s31, 32, %s153, [#allocation9], 16, 16, 1
    $region65: #{tpu_custom_call.1} parent=1 // pred_fallthru
      _
    // Predicated region
    $region66: #{tpu_custom_call.1} parent=1 // pred_check
      _
    $region67: #{tpu_custom_call.1} parent=1 // pred_check_branch
      %160 = sbr.rel (0) target = $region69
    $region68: #{tpu_custom_call.1} parent=1 // pred_region
      _
    $region69: #{tpu_custom_call.1} parent=1 // pred_fallthru
      _
    // Predicated region
    $region70: #{tpu_custom_call.1} parent=1 // pred_check
      _
    $region71: #{tpu_custom_call.1} parent=1 // pred_check_branch
      %162 = sbr.rel (0) target = $region73
    $region72: #{tpu_custom_call.1} parent=1 // pred_region
      _
    $region73: #{tpu_custom_call.1} parent=1 // pred_fallthru
      _
    // Predicated region
    $region74: #{tpu_custom_call.1} parent=1 // pred_check
      _
    $region75: #{tpu_custom_call.1} parent=1 // pred_check_branch
      %164 = sbr.rel (0) target = $region77
    $region76: #{tpu_custom_call.1} parent=1 // pred_region
      _
    $region77: #{tpu_custom_call.1} parent=1 // pred_fallthru
      _
    // Predicated region
    $region78: #{tpu_custom_call.1} parent=1 // pred_check
      _
    $region79: #{tpu_custom_call.1} parent=1 // pred_check_branch
      %166 = sbr.rel (0) target = $region81
    $region80: #{tpu_custom_call.1} parent=1 // pred_region
      %s168 = ssub.s32 32, 32
      %169 = vsyncadd [#allocation9], %s168
      %s170 = sshll.u32 [#allocation10], 4
      %s171 = int_to_ptr.vmem [resolvable:$true] %s170
      %176 = dma.hbm_to_vmem [thread:$0]  %s39, 32, %s171, [#allocation9], 16, 16, 1
    $region81: #{tpu_custom_call.1} parent=1 // pred_fallthru
      _
    // Predicated region
    $region82: #{tpu_custom_call.1} parent=1 // pred_check
      _
    $region83: #{tpu_custom_call.1} parent=1 // pred_check_branch
      %178 = sbr.rel (0) target = $region85
    $region84: #{tpu_custom_call.1} parent=1 // pred_region
      _
    $region85: #{tpu_custom_call.1} parent=1 // pred_fallthru
      _
    // Predicated region
    $region86: #{tpu_custom_call.1} parent=1 // pred_check
      _
    $region87: #{tpu_custom_call.1} parent=1 // pred_check_branch
      %180 = sbr.rel (0) target = $region89
    $region88: #{tpu_custom_call.1} parent=1 // pred_region
      %s182 = ssub.s32 32, 32
      %183 = vsyncadd [#allocation12], %s182
      %s184 = sshll.u32 [#allocation11], 4
      %s185 = int_to_ptr.vmem [resolvable:$true] %s184
      %190 = dma.hbm_to_vmem [thread:$0]  %s43, 32, %s185, [#allocation12], 16, 16, 1
    $region89: #{tpu_custom_call.1} parent=1 // pred_fallthru
      _
    // Predicated region
    $region90: #{tpu_custom_call.1} parent=1 // pred_check
      _
    $region91: #{tpu_custom_call.1} parent=1 // pred_check_branch
      %192 = sbr.rel (0) target = $region93
    $region92: #{tpu_custom_call.1} parent=1 // pred_region
      _
    $region93: #{tpu_custom_call.1} parent=1 // pred_fallthru
      _
    // Predicated region
    $region94: #{tpu_custom_call.1} parent=1 // pred_check
      _
    $region95: #{tpu_custom_call.1} parent=1 // pred_check_branch
      %194 = sbr.rel (0) target = $region97
    $region96: #{tpu_custom_call.1} parent=1 // pred_region
      %s196 = ssub.s32 16, 16
      %197 = vsyncadd [#allocation12], %s196
      %s199 = sshll.u32 [#allocation13], 4
      %s200 = int_to_ptr.vmem [resolvable:$true] %s199
      %202 = dma.hbm_to_vmem [thread:$0]  %s47, 16, %s200, [#allocation12]
    $region97: #{tpu_custom_call.1} parent=1 // pred_fallthru
      _
    // Predicated region
    $region98: #{tpu_custom_call.1} parent=1 // pred_check
      _
    $region99: #{tpu_custom_call.1} parent=1 // pred_check_branch
      %204 = sbr.rel (0) target = $region101
    $region100: #{tpu_custom_call.1} parent=1 // pred_region
      _
    $region101: #{tpu_custom_call.1} parent=1 // pred_fallthru
      _
    // Predicated region
    $region102: #{tpu_custom_call.1} parent=1 // pred_check
      _
    $region103: #{tpu_custom_call.1} parent=1 // pred_check_branch
      %206 = sbr.rel (0) target = $region105
    $region104: #{tpu_custom_call.1} parent=1 // pred_region
      _
    $region105: #{tpu_custom_call.1} parent=1 // pred_fallthru
      _
    // Predicated region
    $region106: #{tpu_custom_call.1} parent=1 // pred_check
      _
    $region107: #{tpu_custom_call.1} parent=1 // pred_check_branch
      %208 = sbr.rel (0) target = $region109
    $region108: #{tpu_custom_call.1} parent=1 // pred_region
      _
    $region109: #{tpu_custom_call.1} parent=1 // pred_fallthru
      _
    // Predicated region
    $region110: #{tpu_custom_call.1} parent=1 // pred_check
      _
    $region111: #{tpu_custom_call.1} parent=1 // pred_check_branch
      %210 = sbr.rel (0) target = $region113
    $region112: #{tpu_custom_call.1} parent=1 // pred_region
      _
    $region113: #{tpu_custom_call.1} parent=1 // pred_fallthru
      _
    // Predicated region
    $region114: #{tpu_custom_call.1} parent=1 // pred_check
      _
    $region115: #{tpu_custom_call.1} parent=1 // pred_check_branch
      %212 = sbr.rel (0) target = $region117
    $region116: #{tpu_custom_call.1} parent=1 // pred_region
      _
    $region117: #{tpu_custom_call.1} parent=1 // pred_fallthru
      _
    // Predicated region
    $region118: #{tpu_custom_call.1} parent=1 // pred_check
      _
    $region119: #{tpu_custom_call.1} parent=1 // pred_check_branch
      %214 = sbr.rel (0) target = $region121
    $region120: #{tpu_custom_call.1} parent=1 // pred_region
      _
    $region121: #{tpu_custom_call.1} parent=1 // pred_fallthru
      _
    // Predicated region
    $region122: #{tpu_custom_call.1} parent=1 // pred_check
      _
    $region123: #{tpu_custom_call.1} parent=1 // pred_check_branch
      %216 = sbr.rel (0) target = $region125
    $region124: #{tpu_custom_call.1} parent=1 // pred_region
      _
    $region125: #{tpu_custom_call.1} parent=1 // pred_fallthru
      _
    // Predicated region
    $region126: #{tpu_custom_call.1} parent=1 // pred_check
      _
    $region127: #{tpu_custom_call.1} parent=1 // pred_check_branch
      %218 = sbr.rel (0) target = $region129
    $region128: #{tpu_custom_call.1} parent=1 // pred_region
      _
    $region129: #{tpu_custom_call.1} parent=1 // pred_fallthru
      _
    // Predicated region
    $region130: #{tpu_custom_call.1} parent=1 // pred_check
      _
    $region131: #{tpu_custom_call.1} parent=1 // pred_check_branch
      %220 = sbr.rel (0) target = $region133
    $region132: #{tpu_custom_call.1} parent=1 // pred_region
      _
    $region133: #{tpu_custom_call.1} parent=1 // pred_fallthru
      _
    // Predicated region
    $region134: #{tpu_custom_call.1} parent=1 // pred_check
      _
    $region135: #{tpu_custom_call.1} parent=1 // pred_check_branch
      %222 = sbr.rel (0) target = $region137
    $region136: #{tpu_custom_call.1} parent=1 // pred_region
      _
    $region137: #{tpu_custom_call.1} parent=1 // pred_fallthru
      _
    // Predicated region
    $region138: #{tpu_custom_call.1} parent=1 // pred_check
      _
    $region139: #{tpu_custom_call.1} parent=1 // pred_check_branch
      %224 = sbr.rel (0) target = $region141
    $region140: #{tpu_custom_call.1} parent=1 // pred_region
      _
    $region141: #{tpu_custom_call.1} parent=1 // pred_fallthru
      _
    // Predicated region
    $region142: #{tpu_custom_call.1} parent=1 // pred_check
      _
    $region143: #{tpu_custom_call.1} parent=1 // pred_check_branch
      %226 = sbr.rel (0) target = $region145
    $region144: #{tpu_custom_call.1} parent=1 // pred_region
      _
    $region145: #{tpu_custom_call.1} parent=1 // pred_fallthru
      _
    // Predicated region
    $region146: #{tpu_custom_call.1} parent=1 // pred_check
      _
    $region147: #{tpu_custom_call.1} parent=1 // pred_check_branch
      %228 = sbr.rel (0) target = $region149
    $region148: #{tpu_custom_call.1} parent=1 // pred_region
      _
    $region149: #{tpu_custom_call.1} parent=1 // pred_fallthru
      _
    // Predicated region
    $region150: #{tpu_custom_call.1} parent=1 // pred_check
      _
    $region151: #{tpu_custom_call.1} parent=1 // pred_check_branch
      %230 = sbr.rel (0) target = $region153
    $region152: #{tpu_custom_call.1} parent=1 // pred_region
      _
    $region153: #{tpu_custom_call.1} parent=1 // pred_fallthru
      _
    // Predicated region
    $region154: #{tpu_custom_call.1} parent=1 // pred_check
      _
    $region155: #{tpu_custom_call.1} parent=1 // pred_check_branch
      %232 = sbr.rel (0) target = $region157
    $region156: #{tpu_custom_call.1} parent=1 // pred_region
      _
    $region157: #{tpu_custom_call.1} parent=1 // pred_fallthru
      _
    // Predicated region
    $region158: #{tpu_custom_call.1} parent=1 // pred_check
      _
    $region159: #{tpu_custom_call.1} parent=1 // pred_check_branch
      %234 = sbr.rel (0) target = $region161
    $region160: #{tpu_custom_call.1} parent=1 // pred_region
      _
    $region161: #{tpu_custom_call.1} parent=1 // pred_fallthru
      _
    // Predicated region
    $region162: #{tpu_custom_call.1} parent=1 // pred_check
      _
    $region163: #{tpu_custom_call.1} parent=1 // pred_check_branch
      %236 = sbr.rel (0) target = $region165
    $region164: #{tpu_custom_call.1} parent=1 // pred_region
      _
    $region165: #{tpu_custom_call.1} parent=1 // pred_fallthru
      _
    // Predicated region
    $region166: #{tpu_custom_call.1} parent=1 // pred_check
      _
    $region167: #{tpu_custom_call.1} parent=1 // pred_check_branch
      %238 = sbr.rel (0) target = $region169
    $region168: #{tpu_custom_call.1} parent=1 // pred_region
      %239 = dma.done [#allocation3], 16
    $region169: #{tpu_custom_call.1} parent=1 // pred_fallthru
      _
    // Predicated region
    $region170: #{tpu_custom_call.1} parent=1 // pred_check
      _
    $region171: #{tpu_custom_call.1} parent=1 // pred_check_branch
      %241 = sbr.rel (0) target = $region173
    $region172: #{tpu_custom_call.1} parent=1 // pred_region
      %242 = dma.done [#allocation6], 16
    $region173: #{tpu_custom_call.1} parent=1 // pred_fallthru
      _
    // Predicated region
    $region174: #{tpu_custom_call.1} parent=1 // pred_check
      _
    $region175: #{tpu_custom_call.1} parent=1 // pred_check_branch
      %244 = sbr.rel (0) target = $region177
    $region176: #{tpu_custom_call.1} parent=1 // pred_region
      %245 = dma.done [#allocation6], 16
    $region177: #{tpu_custom_call.1} parent=1 // pred_fallthru
      _
    // Predicated region
    $region178: #{tpu_custom_call.1} parent=1 // pred_check
      _
    $region179: #{tpu_custom_call.1} parent=1 // pred_check_branch
      %247 = sbr.rel (0) target = $region181
    $region180: #{tpu_custom_call.1} parent=1 // pred_region
      %248 = dma.done [#allocation9], 32
    $region181: #{tpu_custom_call.1} parent=1 // pred_fallthru
      _
    // Predicated region
    $region182: #{tpu_custom_call.1} parent=1 // pred_check
      _
    $region183: #{tpu_custom_call.1} parent=1 // pred_check_branch
      %250 = sbr.rel (0) target = $region185
    $region184: #{tpu_custom_call.1} parent=1 // pred_region
      %251 = dma.done [#allocation9], 32
    $region185: #{tpu_custom_call.1} parent=1 // pred_fallthru
      _
    // Predicated region
    $region186: #{tpu_custom_call.1} parent=1 // pred_check
      _
    $region187: #{tpu_custom_call.1} parent=1 // pred_check_branch
      %253 = sbr.rel (0) target = $region189
    $region188: #{tpu_custom_call.1} parent=1 // pred_region
      %254 = dma.done [#allocation12], 32
    $region189: #{tpu_custom_call.1} parent=1 // pred_fallthru
      _
    // Predicated region
    $region190: #{tpu_custom_call.1} parent=1 // pred_check
      _
    $region191: #{tpu_custom_call.1} parent=1 // pred_check_branch
      %256 = sbr.rel (0) target = $region193
    $region192: #{tpu_custom_call.1} parent=1 // pred_region
      %257 = dma.done [#allocation12], 16
    $region193: #{tpu_custom_call.1} parent=1 // pred_fallthru
      _
    %v259 = vld [vmem:[%s1] sm:$0xff]
    %v260 = vld [vmem:[%s1 + $0x8] sm:$0xf]
    %v261 = vpack.c.bf16 %v260, %v259
    %v262 = vld [vmem:[%s21] sm:$0xf]
    %v263 = vld [vmem:[%s21 + $0x4] sm:$0xf]
    %v264 = vld [vmem:[%s21 + $0x8] sm:$0xf]
    %v265 = vld [vmem:[#allocation7] sm:$0x1]
    %v267 = vlaneseq
    %v268 = vshrl.u32 %v267, 7
    %v269 = vsub.s32 0, %v268
    %v270 = vrot.slane %v265, %v269
    %v275 = vunpack.c.l.b16 %v262
    %v276 = vunpack.c.l.b16 %v263
    %v277 = vunpack.c.l.b16 %v264
    %v278 = vpack.c.b16 %v276, %v275
    %v279 = vpack.c.b16 %v277, %v277
    %vm281 = vcmask 195584
    %v283 = vsel %vm281, %v261, 0
    %vm285 = vcmask 1043456
    %v287 = vsel %vm285, %v279, 0
    %289 = vmatprep.subr.bf16.mxu0 0
    %290 = vmatpush1.bf16.msra.mxu0 %v278
    %291 = vmatprep.subr.bf16.mxu0 0
    %292 = vmatpush1.bf16.msra.mxu0 %v287
    %293 = vmatprep.subr.bf16.mxu0 0
    %294 = vmatpush1.bf16.msra.mxu0 0
    %295 = vmatprep.subr.bf16.mxu0 0
    %296 = vmatpush1.bf16.msra.mxu0 0
    %297 = vmatprep.subr.bf16.mxu0 0
    %298 = vmatpush1.bf16.msra.mxu0 0
    %299 = vmatprep.subr.bf16.mxu0 0
    %300 = vmatpush1.bf16.msra.mxu0 0
    %301 = vmatprep.subr.bf16.mxu0 0
    %302 = vmatpush1.bf16.msra.mxu0 0
    %303 = vmatprep.subr.bf16.mxu0 0
    %304 = vmatpush1.bf16.msra.mxu0 0
    %305 = vmatprep.subr.bf16.mxu0 0
    %306 = vmatpush1.bf16.msra.mxu0 0
    %307 = vmatprep.subr.bf16.mxu0 0
    %308 = vmatpush1.bf16.msra.mxu0 0
    %309 = vmatprep.subr.bf16.mxu0 0
    %310 = vmatpush1.bf16.msra.mxu0 0
    %311 = vmatprep.subr.bf16.mxu0 0
    %312 = vmatpush1.bf16.msra.mxu0 0
    %313 = vmatprep.subr.bf16.mxu0 0
    %314 = vmatpush1.bf16.msra.mxu0 0
    %315 = vmatprep.subr.bf16.mxu0 0
    %316 = vmatpush1.bf16.msra.mxu0 0
    %317 = vmatprep.subr.bf16.mxu0 0
    %318 = vmatpush1.bf16.msra.mxu0 0
    %319 = vmatprep.subr.bf16.mxu0 0
    %320 = vmatpush1.bf16.msra.mxu0 0
    %321 = vmatprep.mubr.bf16.mxu0 0
    %322 = vmatmul.mubr.bf16.gmra.mrb[0].mxu0 %v283
    %v323 = vpop.f32.mrb[0].mxu0
    %v324 = vadd.f32 %v270, %v323
    %v325 = vpop.f32.mrb[0].mxu0
    %v326 = vpop.f32.mrb[0].mxu0
    %v327 = vadd.f32 %v270, %v326
    %v328 = vpop.f32.mrb[0].mxu0
    %329 = vdwg.mxu0
    %v330 = vxor.u32 %v324, 2147483648
    %v331 = vxor.u32 %v327, 2147483648
    %v332 = vmul.f32 %v330, 1.442695
    %v333 = vpow.pop %v332
    %v334 = vmul.f32 %v331, 1.442695
    %v335 = vpow.pop %v334
    %v336 = vadd.f32 %v333, 1.0
    %v337 = vadd.f32 %v335, 1.0
    %v338 = vrcp.pop %v336
    %v339 = vmul.f32 1.0, %v338
    %v340 = vrcp.pop %v337
    %v341 = vmul.f32 1.0, %v340
    %v342 = vmul.f32 %v324, %v339
    %v343 = vmul.f32 %v327, %v341
    %v344 = vld [vmem:[%s3] sm:$0xff]
    %v345 = vld [vmem:[%s3 + $0x8] sm:$0xff]
    %v346 = vld [vmem:[%s3 + $0x10] sm:$0xff]
    %v347 = vpack.c.bf16 %v345, %v344
    %v348 = vpack.c.bf16 %v346, %v346
    %v349 = vld [vmem:[%s5] sm:$0xff]
    %v350 = vld [vmem:[%s5 + $0x8] sm:$0xff]
    %v351 = vld [vmem:[%s5 + $0x10] sm:$0xff]
    %v352 = vld [vmem:[%s7] sm:$0xff]
    %v353 = vld [vmem:[%s7 + $0x8] sm:$0xff]
    %v354 = vld [vmem:[%s7 + $0x10] sm:$0xff]
    %v355 = vld [vmem:[#allocation2] sm:$0x1]
    %v356 = vlaneseq
    %v357 = vand.u32 %v356, 127
    %358 = vset.pattern.permute.xlu0 0
    %359 = vperm.xlu0 %358, %v349
    %v360 = vpop.permute.xlu0 %359
    %361 = vset.pattern.permute.xlu0 0
    %362 = vperm.xlu0 %361, %v350
    %v363 = vpop.permute.xlu0 %362
    %364 = vset.pattern.permute.xlu0 0
    %365 = vperm.xlu0 %364, %v351
    %v366 = vpop.permute.xlu0 %365
    %vm367 = vcmp.eq.s32.totalorder %v357, %v360
    %vm368 = vcmp.eq.s32.totalorder %v357, %v363
    %vm369 = vcmp.eq.s32.totalorder %v357, %v366
    %v370 = vsel %vm367, 1.0, 0.0
    %v371 = vsel %vm368, 1.0, 0.0
    %v372 = vsel %vm369, 1.0, 0.0
    %v373 = vpack.c.bf16 %v371, %v370
    %v374 = vpack.c.bf16 %v372, %v372
    %375 = vset.pattern.permute.xlu0 0
    %376 = vperm.xlu0 %375, %v352
    %v377 = vpop.permute.xlu0 %376
    %378 = vset.pattern.permute.xlu0 0
    %379 = vperm.xlu0 %378, %v353
    %v380 = vpop.permute.xlu0 %379
    %381 = vset.pattern.permute.xlu0 0
    %382 = vperm.xlu0 %381, %v354
    %v383 = vpop.permute.xlu0 %382
    %vm384 = vcmp.eq.s32.totalorder %v357, %v377
    %vm385 = vcmp.eq.s32.totalorder %v357, %v380
    %vm386 = vcmp.eq.s32.totalorder %v357, %v383
    %v387 = vsel %vm384, 1.0, 0.0
    %v388 = vsel %vm385, 1.0, 0.0
    %v389 = vsel %vm386, 1.0, 0.0
    %v390 = vpack.c.bf16 %v388, %v387
    %v391 = vpack.c.bf16 %v389, %v389
    %v392 = vlaneseq
    %v393 = vshrl.u32 %v392, 7
    %v394 = vadd.s32 %v393, 8
    %v395 = vlaneseq
    %v396 = vshrl.u32 %v395, 7
    %v397 = vsub.s32 0, %v396
    %v398 = vrot.slane %v355, %v397
    %vm399 = vcmp.eq.s32.totalorder %v393, %v398
    %vm400 = vcmp.eq.s32.totalorder %v394, %v398
    %v401 = vsel %vm399, 1.0, 0.0
    %v402 = vsel %vm400, 1.0, 0.0
    %v403 = vpack.c.bf16 %v402, %v401
    %v404 = vpack.c.bf16 %v343, %v342
    %vm405 = vcmask 97280
    %v407 = vsel %vm405, %v373, 0
    %v410 = vsel %vm405, %v374, 0
    %vm412 = vcmask 1045504
    %v414 = vsel %vm412, %v404, 0
    %416 = vmatprep.subr.bf16.mxu0 0
    %417 = vmatpush1.bf16.msra.mxu0 %v414
    %418 = vmatprep.subr.bf16.mxu0 0
    %419 = vmatpush1.bf16.msra.mxu0 0
    %420 = vmatprep.subr.bf16.mxu0 0
    %421 = vmatpush1.bf16.msra.mxu0 0
    %422 = vmatprep.subr.bf16.mxu0 0
    %423 = vmatpush1.bf16.msra.mxu0 0
    %424 = vmatprep.subr.bf16.mxu0 0
    %425 = vmatpush1.bf16.msra.mxu0 0
    %426 = vmatprep.subr.bf16.mxu0 0
    %427 = vmatpush1.bf16.msra.mxu0 0
    %428 = vmatprep.subr.bf16.mxu0 0
    %429 = vmatpush1.bf16.msra.mxu0 0
    %430 = vmatprep.subr.bf16.mxu0 0
    %431 = vmatpush1.bf16.msra.mxu0 0
    %432 = vmatprep.subr.bf16.mxu0 0
    %433 = vmatpush1.bf16.msra.mxu0 0
    %434 = vmatprep.subr.bf16.mxu0 0
    %435 = vmatpush1.bf16.msra.mxu0 0
    %436 = vmatprep.subr.bf16.mxu0 0
    %437 = vmatpush1.bf16.msra.mxu0 0
    %438 = vmatprep.subr.bf16.mxu0 0
    %439 = vmatpush1.bf16.msra.mxu0 0
    %440 = vmatprep.subr.bf16.mxu0 0
    %441 = vmatpush1.bf16.msra.mxu0 0
    %442 = vmatprep.subr.bf16.mxu0 0
    %443 = vmatpush1.bf16.msra.mxu0 0
    %444 = vmatprep.subr.bf16.mxu0 0
    %445 = vmatpush1.bf16.msra.mxu0 0
    %446 = vmatprep.subr.bf16.mxu0 0
    %447 = vmatpush1.bf16.msra.mxu0 0
    %448 = vmatprep.mubr.bf16.mxu0 0
    %449 = vmatmul.mubr.bf16.gmra.mrb[0].mxu0 %v407
    %v450 = vpop.f32.mrb[0].mxu0
    %v451 = vadd.f32 0.0, %v450
    %v452 = vpop.f32.mrb[0].mxu0
    %v453 = vpop.f32.mrb[0].mxu0
    %v454 = vadd.f32 0.0, %v453
    %v455 = vpop.f32.mrb[0].mxu0
    %456 = vmatprep.mubr.bf16.mxu0 0
    %457 = vmatmul.mubr.bf16.gmra.mrb[0].mxu0 %v410
    %v458 = vpop.f32.mrb[0].mxu0
    %v459 = vadd.f32 0.0, %v458
    %v460 = vpop.f32.mrb[0].mxu0
    %v461 = vpop.f32.mrb[0].mxu0
    %v462 = vpop.f32.mrb[0].mxu0
    %463 = vdwg.mxu0
    %v464 = vpack.c.bf16 %v454, %v451
    %v465 = vpack.c.bf16 %v459, %v459
    %v467 = vsel %vm405, %v390, 0
    %v470 = vsel %vm405, %v391, 0
    %472 = vmatprep.subr.bf16.mxu0 0
    %473 = vmatpush1.bf16.msra.mxu0 %v414
    %474 = vmatprep.subr.bf16.mxu0 0
    %475 = vmatpush1.bf16.msra.mxu0 0
    %476 = vmatprep.subr.bf16.mxu0 0
    %477 = vmatpush1.bf16.msra.mxu0 0
    %478 = vmatprep.subr.bf16.mxu0 0
    %479 = vmatpush1.bf16.msra.mxu0 0
    %480 = vmatprep.subr.bf16.mxu0 0
    %481 = vmatpush1.bf16.msra.mxu0 0
    %482 = vmatprep.subr.bf16.mxu0 0
    %483 = vmatpush1.bf16.msra.mxu0 0
    %484 = vmatprep.subr.bf16.mxu0 0
    %485 = vmatpush1.bf16.msra.mxu0 0
    %486 = vmatprep.subr.bf16.mxu0 0
    %487 = vmatpush1.bf16.msra.mxu0 0
    %488 = vmatprep.subr.bf16.mxu0 0
    %489 = vmatpush1.bf16.msra.mxu0 0
    %490 = vmatprep.subr.bf16.mxu0 0
    %491 = vmatpush1.bf16.msra.mxu0 0
    %492 = vmatprep.subr.bf16.mxu0 0
    %493 = vmatpush1.bf16.msra.mxu0 0
    %494 = vmatprep.subr.bf16.mxu0 0
    %495 = vmatpush1.bf16.msra.mxu0 0
    %496 = vmatprep.subr.bf16.mxu0 0
    %497 = vmatpush1.bf16.msra.mxu0 0
    %498 = vmatprep.subr.bf16.mxu0 0
    %499 = vmatpush1.bf16.msra.mxu0 0
    %500 = vmatprep.subr.bf16.mxu0 0
    %501 = vmatpush1.bf16.msra.mxu0 0
    %502 = vmatprep.subr.bf16.mxu0 0
    %503 = vmatpush1.bf16.msra.mxu0 0
    %504 = vmatprep.mubr.bf16.mxu0 0
    %505 = vmatmul.mubr.bf16.gmra.mrb[0].mxu0 %v467
    %v506 = vpop.f32.mrb[0].mxu0
    %v507 = vadd.f32 0.0, %v506
    %v508 = vpop.f32.mrb[0].mxu0
    %v509 = vpop.f32.mrb[0].mxu0
    %v510 = vadd.f32 0.0, %v509
    %v511 = vpop.f32.mrb[0].mxu0
    %512 = vmatprep.mubr.bf16.mxu0 0
    %513 = vmatmul.mubr.bf16.gmra.mrb[0].mxu0 %v470
    %v514 = vpop.f32.mrb[0].mxu0
    %v515 = vadd.f32 0.0, %v514
    %v516 = vpop.f32.mrb[0].mxu0
    %v517 = vpop.f32.mrb[0].mxu0
    %v518 = vpop.f32.mrb[0].mxu0
    %519 = vdwg.mxu0
    %v520 = vpack.c.bf16 %v510, %v507
    %v521 = vpack.c.bf16 %v515, %v515
    %v522 = vld [vmem:[%s25] sm:$0xf]
    %v523 = vld [vmem:[%s25 + $0x4] sm:$0xf]
    %v524 = vld [vmem:[%s25 + $0x8] sm:$0xf]
    %v525 = vld [vmem:[%s25 + $0xc] sm:$0xf]
    %v526 = vld [vmem:[%s27] sm:$0xf]
    %v527 = vld [vmem:[%s27 + $0x4] sm:$0xf]
    %v528 = vld [vmem:[%s27 + $0x8] sm:$0xf]
    %v529 = vld [vmem:[%s27 + $0xc] sm:$0xf]
    %v534 = vunpack.c.l.b16 %v526
    %v535 = vunpack.c.l.b16 %v527
    %v536 = vunpack.c.l.b16 %v528
    %v537 = vunpack.c.l.b16 %v529
    %v538 = vpack.c.b16 %v535, %v534
    %v539 = vpack.c.b16 %v537, %v536
    %vm542 = vcmask 261120
    %v544 = vsel %vm542, %v520, 0
    %v547 = vsel %vm542, %v521, 0
    %549 = vmatprep.subr.bf16.mxu0 0
    %550 = vmatpush1.bf16.msra.mxu0 %v538
    %551 = vmatprep.subr.bf16.mxu0 0
    %552 = vmatpush1.bf16.msra.mxu0 %v539
    %553 = vmatprep.subr.bf16.mxu0 0
    %554 = vmatpush1.bf16.msra.mxu0 0
    %555 = vmatprep.subr.bf16.mxu0 0
    %556 = vmatpush1.bf16.msra.mxu0 0
    %557 = vmatprep.subr.bf16.mxu0 0
    %558 = vmatpush1.bf16.msra.mxu0 0
    %559 = vmatprep.subr.bf16.mxu0 0
    %560 = vmatpush1.bf16.msra.mxu0 0
    %561 = vmatprep.subr.bf16.mxu0 0
    %562 = vmatpush1.bf16.msra.mxu0 0
    %563 = vmatprep.subr.bf16.mxu0 0
    %564 = vmatpush1.bf16.msra.mxu0 0
    %565 = vmatprep.subr.bf16.mxu0 0
    %566 = vmatpush1.bf16.msra.mxu0 0
    %567 = vmatprep.subr.bf16.mxu0 0
    %568 = vmatpush1.bf16.msra.mxu0 0
    %569 = vmatprep.subr.bf16.mxu0 0
    %570 = vmatpush1.bf16.msra.mxu0 0
    %571 = vmatprep.subr.bf16.mxu0 0
    %572 = vmatpush1.bf16.msra.mxu0 0
    %573 = vmatprep.subr.bf16.mxu0 0
    %574 = vmatpush1.bf16.msra.mxu0 0
    %575 = vmatprep.subr.bf16.mxu0 0
    %576 = vmatpush1.bf16.msra.mxu0 0
    %577 = vmatprep.subr.bf16.mxu0 0
    %578 = vmatpush1.bf16.msra.mxu0 0
    %579 = vmatprep.subr.bf16.mxu0 0
    %580 = vmatpush1.bf16.msra.mxu0 0
    %581 = vmatprep.mubr.bf16.mxu0 0
    %582 = vmatmul.mubr.bf16.gmra.mrb[0].mxu0 %v544
    %v583 = vpop.f32.mrb[0].mxu0
    %v584 = vadd.f32 0.0, %v583
    %v585 = vpop.f32.mrb[0].mxu0
    %v586 = vpop.f32.mrb[0].mxu0
    %v587 = vadd.f32 0.0, %v586
    %v588 = vpop.f32.mrb[0].mxu0
    %589 = vmatprep.mubr.bf16.mxu0 0
    %590 = vmatmul.mubr.bf16.gmra.mrb[0].mxu0 %v547
    %v591 = vpop.f32.mrb[0].mxu0
    %v592 = vadd.f32 0.0, %v591
    %v593 = vpop.f32.mrb[0].mxu0
    %v594 = vpop.f32.mrb[0].mxu0
    %v595 = vpop.f32.mrb[0].mxu0
    %596 = vdwg.mxu0
    %v601 = vunpack.c.l.b16 %v522
    %v602 = vunpack.c.l.b16 %v523
    %v603 = vunpack.c.l.b16 %v524
    %v604 = vunpack.c.l.b16 %v525
    %v605 = vpack.c.b16 %v602, %v601
    %v606 = vpack.c.b16 %v604, %v603
    %v610 = vsel %vm542, %v464, 0
    %v613 = vsel %vm542, %v465, 0
    %615 = vmatprep.subr.bf16.mxu0 0
    %616 = vmatpush1.bf16.msra.mxu0 %v605
    %617 = vmatprep.subr.bf16.mxu0 0
    %618 = vmatpush1.bf16.msra.mxu0 %v606
    %619 = vmatprep.subr.bf16.mxu0 0
    %620 = vmatpush1.bf16.msra.mxu0 0
    %621 = vmatprep.subr.bf16.mxu0 0
    %622 = vmatpush1.bf16.msra.mxu0 0
    %623 = vmatprep.subr.bf16.mxu0 0
    %624 = vmatpush1.bf16.msra.mxu0 0
    %625 = vmatprep.subr.bf16.mxu0 0
    %626 = vmatpush1.bf16.msra.mxu0 0
    %627 = vmatprep.subr.bf16.mxu0 0
    %628 = vmatpush1.bf16.msra.mxu0 0
    %629 = vmatprep.subr.bf16.mxu0 0
    %630 = vmatpush1.bf16.msra.mxu0 0
    %631 = vmatprep.subr.bf16.mxu0 0
    %632 = vmatpush1.bf16.msra.mxu0 0
    %633 = vmatprep.subr.bf16.mxu0 0
    %634 = vmatpush1.bf16.msra.mxu0 0
    %635 = vmatprep.subr.bf16.mxu0 0
    %636 = vmatpush1.bf16.msra.mxu0 0
    %637 = vmatprep.subr.bf16.mxu0 0
    %638 = vmatpush1.bf16.msra.mxu0 0
    %639 = vmatprep.subr.bf16.mxu0 0
    %640 = vmatpush1.bf16.msra.mxu0 0
    %641 = vmatprep.subr.bf16.mxu0 0
    %642 = vmatpush1.bf16.msra.mxu0 0
    %643 = vmatprep.subr.bf16.mxu0 0
    %644 = vmatpush1.bf16.msra.mxu0 0
    %645 = vmatprep.subr.bf16.mxu0 0
    %646 = vmatpush1.bf16.msra.mxu0 0
    %647 = vmatprep.mubr.bf16.mxu0 0
    %648 = vmatmul.mubr.bf16.gmra.mrb[0].mxu0 %v610
    %v649 = vpop.f32.mrb[0].mxu0
    %v650 = vadd.f32 %v584, %v649
    %v651 = vpop.f32.mrb[0].mxu0
    %v652 = vpop.f32.mrb[0].mxu0
    %v653 = vadd.f32 %v587, %v652
    %v654 = vpop.f32.mrb[0].mxu0
    %655 = vmatprep.mubr.bf16.mxu0 0
    %656 = vmatmul.mubr.bf16.gmra.mrb[0].mxu0 %v613
    %v657 = vpop.f32.mrb[0].mxu0
    %v658 = vadd.f32 %v592, %v657
    %v659 = vpop.f32.mrb[0].mxu0
    %v660 = vpop.f32.mrb[0].mxu0
    %v661 = vpop.f32.mrb[0].mxu0
    %662 = vdwg.mxu0
    %v663 = vld [vmem:[%s29] sm:$0xf]
    %v664 = vld [vmem:[%s29 + $0x4] sm:$0x3]
    %v667 = vunpack.c.l.b16 %v663
    %v668 = vunpack.c.l.b16 %v664
    %v669 = vpack.c.b16 %v668, %v667
    %v671 = vsel %vm405, %v347, 0
    %v674 = vsel %vm405, %v348, 0
    %v677 = vsel %vm412, %v669, 0
    %679 = vmatprep.subr.bf16.mxu0 0
    %680 = vmatpush1.bf16.msra.mxu0 %v677
    %681 = vmatprep.subr.bf16.mxu0 0
    %682 = vmatpush1.bf16.msra.mxu0 0
    %683 = vmatprep.subr.bf16.mxu0 0
    %684 = vmatpush1.bf16.msra.mxu0 0
    %685 = vmatprep.subr.bf16.mxu0 0
    %686 = vmatpush1.bf16.msra.mxu0 0
    %687 = vmatprep.subr.bf16.mxu0 0
    %688 = vmatpush1.bf16.msra.mxu0 0
    %689 = vmatprep.subr.bf16.mxu0 0
    %690 = vmatpush1.bf16.msra.mxu0 0
    %691 = vmatprep.subr.bf16.mxu0 0
    %692 = vmatpush1.bf16.msra.mxu0 0
    %693 = vmatprep.subr.bf16.mxu0 0
    %694 = vmatpush1.bf16.msra.mxu0 0
    %695 = vmatprep.subr.bf16.mxu0 0
    %696 = vmatpush1.bf16.msra.mxu0 0
    %697 = vmatprep.subr.bf16.mxu0 0
    %698 = vmatpush1.bf16.msra.mxu0 0
    %699 = vmatprep.subr.bf16.mxu0 0
    %700 = vmatpush1.bf16.msra.mxu0 0
    %701 = vmatprep.subr.bf16.mxu0 0
    %702 = vmatpush1.bf16.msra.mxu0 0
    %703 = vmatprep.subr.bf16.mxu0 0
    %704 = vmatpush1.bf16.msra.mxu0 0
    %705 = vmatprep.subr.bf16.mxu0 0
    %706 = vmatpush1.bf16.msra.mxu0 0
    %707 = vmatprep.subr.bf16.mxu0 0
    %708 = vmatpush1.bf16.msra.mxu0 0
    %709 = vmatprep.subr.bf16.mxu0 0
    %710 = vmatpush1.bf16.msra.mxu0 0
    %711 = vmatprep.mubr.bf16.mxu0 0
    %712 = vmatmul.mubr.bf16.gmra.mrb[0].mxu0 %v671
    %v713 = vpop.f32.mrb[0].mxu0
    %v714 = vadd.f32 0.0, %v713
    %v715 = vpop.f32.mrb[0].mxu0
    %v716 = vpop.f32.mrb[0].mxu0
    %v717 = vadd.f32 0.0, %v716
    %v718 = vpop.f32.mrb[0].mxu0
    %719 = vmatprep.mubr.bf16.mxu0 0
    %720 = vmatmul.mubr.bf16.gmra.mrb[0].mxu0 %v674
    %v721 = vpop.f32.mrb[0].mxu0
    %v722 = vadd.f32 0.0, %v721
    %v723 = vpop.f32.mrb[0].mxu0
    %v724 = vpop.f32.mrb[0].mxu0
    %v725 = vpop.f32.mrb[0].mxu0
    %726 = vdwg.mxu0
    %v727 = vadd.f32 %v650, %v714
    %v728 = vadd.f32 %v653, %v717
    %v729 = vadd.f32 %v658, %v722
    %v730 = vld [vmem:[#allocation8] sm:$0x1]
    %v732 = vlaneseq
    %v733 = vshrl.u32 %v732, 7
    %v734 = vsub.s32 0, %v733
    %v735 = vrot.slane %v730, %v734
    %v737 = vadd.f32 %v727, %v735
    %v738 = vadd.f32 %v728, %v735
    %v739 = vadd.f32 %v729, %v735
    %v740 = vld [vmem:[%s33] sm:$0xf]
    %v741 = vld [vmem:[%s33 + $0x4] sm:$0xf]
    %v742 = vld [vmem:[%s33 + $0x8] sm:$0xf]
    %v743 = vld [vmem:[%s33 + $0xc] sm:$0xf]
    %v744 = vld [vmem:[%s35] sm:$0xf]
    %v745 = vld [vmem:[%s35 + $0x4] sm:$0xf]
    %v746 = vld [vmem:[%s35 + $0x8] sm:$0xf]
    %v747 = vld [vmem:[%s35 + $0xc] sm:$0xf]
    %v752 = vunpack.c.l.b16 %v744
    %v753 = vunpack.c.l.b16 %v745
    %v754 = vunpack.c.l.b16 %v746
    %v755 = vunpack.c.l.b16 %v747
    %v756 = vpack.c.b16 %v753, %v752
    %v757 = vpack.c.b16 %v755, %v754
    %760 = vmatprep.subr.bf16.mxu0 0
    %761 = vmatpush1.bf16.msra.mxu0 %v756
    %762 = vmatprep.subr.bf16.mxu0 0
    %763 = vmatpush1.bf16.msra.mxu0 %v757
    %764 = vmatprep.subr.bf16.mxu0 0
    %765 = vmatpush1.bf16.msra.mxu0 0
    %766 = vmatprep.subr.bf16.mxu0 0
    %767 = vmatpush1.bf16.msra.mxu0 0
    %768 = vmatprep.subr.bf16.mxu0 0
    %769 = vmatpush1.bf16.msra.mxu0 0
    %770 = vmatprep.subr.bf16.mxu0 0
    %771 = vmatpush1.bf16.msra.mxu0 0
    %772 = vmatprep.subr.bf16.mxu0 0
    %773 = vmatpush1.bf16.msra.mxu0 0
    %774 = vmatprep.subr.bf16.mxu0 0
    %775 = vmatpush1.bf16.msra.mxu0 0
    %776 = vmatprep.subr.bf16.mxu0 0
    %777 = vmatpush1.bf16.msra.mxu0 0
    %778 = vmatprep.subr.bf16.mxu0 0
    %779 = vmatpush1.bf16.msra.mxu0 0
    %780 = vmatprep.subr.bf16.mxu0 0
    %781 = vmatpush1.bf16.msra.mxu0 0
    %782 = vmatprep.subr.bf16.mxu0 0
    %783 = vmatpush1.bf16.msra.mxu0 0
    %784 = vmatprep.subr.bf16.mxu0 0
    %785 = vmatpush1.bf16.msra.mxu0 0
    %786 = vmatprep.subr.bf16.mxu0 0
    %787 = vmatpush1.bf16.msra.mxu0 0
    %788 = vmatprep.subr.bf16.mxu0 0
    %789 = vmatpush1.bf16.msra.mxu0 0
    %790 = vmatprep.subr.bf16.mxu0 0
    %791 = vmatpush1.bf16.msra.mxu0 0
    %792 = vmatprep.mubr.bf16.mxu0 0
    %793 = vmatmul.mubr.bf16.gmra.mrb[0].mxu0 %v544
    %v794 = vpop.f32.mrb[0].mxu0
    %v795 = vadd.f32 0.0, %v794
    %v796 = vpop.f32.mrb[0].mxu0
    %v797 = vpop.f32.mrb[0].mxu0
    %v798 = vadd.f32 0.0, %v797
    %v799 = vpop.f32.mrb[0].mxu0
    %800 = vmatprep.mubr.bf16.mxu0 0
    %801 = vmatmul.mubr.bf16.gmra.mrb[0].mxu0 %v547
    %v802 = vpop.f32.mrb[0].mxu0
    %v803 = vadd.f32 0.0, %v802
    %v804 = vpop.f32.mrb[0].mxu0
    %v805 = vpop.f32.mrb[0].mxu0
    %v806 = vpop.f32.mrb[0].mxu0
    %807 = vdwg.mxu0
    %v812 = vunpack.c.l.b16 %v740
    %v813 = vunpack.c.l.b16 %v741
    %v814 = vunpack.c.l.b16 %v742
    %v815 = vunpack.c.l.b16 %v743
    %v816 = vpack.c.b16 %v813, %v812
    %v817 = vpack.c.b16 %v815, %v814
    %820 = vmatprep.subr.bf16.mxu0 0
    %821 = vmatpush1.bf16.msra.mxu0 %v816
    %822 = vmatprep.subr.bf16.mxu0 0
    %823 = vmatpush1.bf16.msra.mxu0 %v817
    %824 = vmatprep.subr.bf16.mxu0 0
    %825 = vmatpush1.bf16.msra.mxu0 0
    %826 = vmatprep.subr.bf16.mxu0 0
    %827 = vmatpush1.bf16.msra.mxu0 0
    %828 = vmatprep.subr.bf16.mxu0 0
    %829 = vmatpush1.bf16.msra.mxu0 0
    %830 = vmatprep.subr.bf16.mxu0 0
    %831 = vmatpush1.bf16.msra.mxu0 0
    %832 = vmatprep.subr.bf16.mxu0 0
    %833 = vmatpush1.bf16.msra.mxu0 0
    %834 = vmatprep.subr.bf16.mxu0 0
    %835 = vmatpush1.bf16.msra.mxu0 0
    %836 = vmatprep.subr.bf16.mxu0 0
    %837 = vmatpush1.bf16.msra.mxu0 0
    %838 = vmatprep.subr.bf16.mxu0 0
    %839 = vmatpush1.bf16.msra.mxu0 0
    %840 = vmatprep.subr.bf16.mxu0 0
    %841 = vmatpush1.bf16.msra.mxu0 0
    %842 = vmatprep.subr.bf16.mxu0 0
    %843 = vmatpush1.bf16.msra.mxu0 0
    %844 = vmatprep.subr.bf16.mxu0 0
    %845 = vmatpush1.bf16.msra.mxu0 0
    %846 = vmatprep.subr.bf16.mxu0 0
    %847 = vmatpush1.bf16.msra.mxu0 0
    %848 = vmatprep.subr.bf16.mxu0 0
    %849 = vmatpush1.bf16.msra.mxu0 0
    %850 = vmatprep.subr.bf16.mxu0 0
    %851 = vmatpush1.bf16.msra.mxu0 0
    %852 = vmatprep.mubr.bf16.mxu0 0
    %853 = vmatmul.mubr.bf16.gmra.mrb[0].mxu0 %v610
    %v854 = vpop.f32.mrb[0].mxu0
    %v855 = vadd.f32 %v795, %v854
    %v856 = vpop.f32.mrb[0].mxu0
    %v857 = vpop.f32.mrb[0].mxu0
    %v858 = vadd.f32 %v798, %v857
    %v859 = vpop.f32.mrb[0].mxu0
    %860 = vmatprep.mubr.bf16.mxu0 0
    %861 = vmatmul.mubr.bf16.gmra.mrb[0].mxu0 %v613
    %v862 = vpop.f32.mrb[0].mxu0
    %v863 = vadd.f32 %v803, %v862
    %v864 = vpop.f32.mrb[0].mxu0
    %v865 = vpop.f32.mrb[0].mxu0
    %v866 = vpop.f32.mrb[0].mxu0
    %867 = vdwg.mxu0
    %v868 = vld [vmem:[%s37] sm:$0xf]
    %v869 = vld [vmem:[%s37 + $0x4] sm:$0x3]
    %v872 = vunpack.c.l.b16 %v868
    %v873 = vunpack.c.l.b16 %v869
    %v874 = vpack.c.b16 %v873, %v872
    %v876 = vsel %vm412, %v874, 0
    %878 = vmatprep.subr.bf16.mxu0 0
    %879 = vmatpush1.bf16.msra.mxu0 %v876
    %880 = vmatprep.subr.bf16.mxu0 0
    %881 = vmatpush1.bf16.msra.mxu0 0
    %882 = vmatprep.subr.bf16.mxu0 0
    %883 = vmatpush1.bf16.msra.mxu0 0
    %884 = vmatprep.subr.bf16.mxu0 0
    %885 = vmatpush1.bf16.msra.mxu0 0
    %886 = vmatprep.subr.bf16.mxu0 0
    %887 = vmatpush1.bf16.msra.mxu0 0
    %888 = vmatprep.subr.bf16.mxu0 0
    %889 = vmatpush1.bf16.msra.mxu0 0
    %890 = vmatprep.subr.bf16.mxu0 0
    %891 = vmatpush1.bf16.msra.mxu0 0
    %892 = vmatprep.subr.bf16.mxu0 0
    %893 = vmatpush1.bf16.msra.mxu0 0
    %894 = vmatprep.subr.bf16.mxu0 0
    %895 = vmatpush1.bf16.msra.mxu0 0
    %896 = vmatprep.subr.bf16.mxu0 0
    %897 = vmatpush1.bf16.msra.mxu0 0
    %898 = vmatprep.subr.bf16.mxu0 0
    %899 = vmatpush1.bf16.msra.mxu0 0
    %900 = vmatprep.subr.bf16.mxu0 0
    %901 = vmatpush1.bf16.msra.mxu0 0
    %902 = vmatprep.subr.bf16.mxu0 0
    %903 = vmatpush1.bf16.msra.mxu0 0
    %904 = vmatprep.subr.bf16.mxu0 0
    %905 = vmatpush1.bf16.msra.mxu0 0
    %906 = vmatprep.subr.bf16.mxu0 0
    %907 = vmatpush1.bf16.msra.mxu0 0
    %908 = vmatprep.subr.bf16.mxu0 0
    %909 = vmatpush1.bf16.msra.mxu0 0
    %910 = vmatprep.mubr.bf16.mxu0 0
    %911 = vmatmul.mubr.bf16.gmra.mrb[0].mxu0 %v671
    %v912 = vpop.f32.mrb[0].mxu0
    %v913 = vadd.f32 0.0, %v912
    %v914 = vpop.f32.mrb[0].mxu0
    %v915 = vpop.f32.mrb[0].mxu0
    %v916 = vadd.f32 0.0, %v915
    %v917 = vpop.f32.mrb[0].mxu0
    %918 = vmatprep.mubr.bf16.mxu0 0
    %919 = vmatmul.mubr.bf16.gmra.mrb[0].mxu0 %v674
    %v920 = vpop.f32.mrb[0].mxu0
    %v921 = vadd.f32 0.0, %v920
    %v922 = vpop.f32.mrb[0].mxu0
    %v923 = vpop.f32.mrb[0].mxu0
    %v924 = vpop.f32.mrb[0].mxu0
    %925 = vdwg.mxu0
    %v926 = vadd.f32 %v855, %v913
    %v927 = vadd.f32 %v858, %v916
    %v928 = vadd.f32 %v863, %v921
    %v929 = vld [vmem:[#allocation10] sm:$0x1]
    %v931 = vlaneseq
    %v932 = vshrl.u32 %v931, 7
    %v933 = vsub.s32 0, %v932
    %v934 = vrot.slane %v929, %v933
    %v936 = vadd.f32 %v926, %v934
    %v937 = vadd.f32 %v927, %v934
    %v938 = vadd.f32 %v928, %v934
    %v939 = vxor.u32 %v737, 2147483648
    %v940 = vxor.u32 %v738, 2147483648
    %v941 = vxor.u32 %v739, 2147483648
    %v942 = vmul.f32 %v939, 1.442695
    %v943 = vpow.pop %v942
    %v944 = vmul.f32 %v940, 1.442695
    %v945 = vpow.pop %v944
    %v946 = vmul.f32 %v941, 1.442695
    %v947 = vpow.pop %v946
    %v948 = vadd.f32 %v943, 1.0
    %v949 = vadd.f32 %v945, 1.0
    %v950 = vadd.f32 %v947, 1.0
    %v951 = vrcp.pop %v948
    %v952 = vmul.f32 1.0, %v951
    %v953 = vrcp.pop %v949
    %v954 = vmul.f32 1.0, %v953
    %v955 = vrcp.pop %v950
    %v956 = vmul.f32 1.0, %v955
    %vm957 = vcmp.gt.f32.partialorder %v936, 20.0
    %vm958 = vcmp.gt.f32.partialorder %v937, 20.0
    %vm959 = vcmp.gt.f32.partialorder %v938, 20.0
    %v960 = vmin.f32 %v936, 20.0
    %v961 = vmin.f32 %v937, 20.0
    %v962 = vmin.f32 %v938, 20.0
    %v963 = vmul.f32 %v960, 1.442695
    %v964 = vpow.pop %v963
    %v965 = vmul.f32 %v961, 1.442695
    %v966 = vpow.pop %v965
    %v967 = vmul.f32 %v962, 1.442695
    %v968 = vpow.pop %v967
    %v969 = vadd.f32 %v964, 1.0
    %v970 = vlog2.pop %v969
    %v971 = vmul.f32 %v970, 0.6931472
    %v972 = vmul.f32 -0.5, %v964
    %v973 = vadd.f32 %v972, 1.0
    %v974 = vmul.f32 %v973, %v964
    %v975 = vand.u32 2147483647, %v964
    %vm976 = vcmp.lt.f32.partialorder %v975, 0.0004427343
    %v977 = vsel %vm976, %v974, %v971
    %v978 = vadd.f32 %v966, 1.0
    %v979 = vlog2.pop %v978
    %v980 = vmul.f32 %v979, 0.6931472
    %v981 = vmul.f32 -0.5, %v966
    %v982 = vadd.f32 %v981, 1.0
    %v983 = vmul.f32 %v982, %v966
    %v984 = vand.u32 2147483647, %v966
    %vm985 = vcmp.lt.f32.partialorder %v984, 0.0004427343
    %v986 = vsel %vm985, %v983, %v980
    %v987 = vadd.f32 %v968, 1.0
    %v988 = vlog2.pop %v987
    %v989 = vmul.f32 %v988, 0.6931472
    %v990 = vmul.f32 -0.5, %v968
    %v991 = vadd.f32 %v990, 1.0
    %v992 = vmul.f32 %v991, %v968
    %v993 = vand.u32 2147483647, %v968
    %vm994 = vcmp.lt.f32.partialorder %v993, 0.0004427343
    %v995 = vsel %vm994, %v992, %v989
    %v996 = vsel %vm957, %v936, %v977
    %v997 = vsel %vm958, %v937, %v986
    %v998 = vsel %vm959, %v938, %v995
    %v999 = vmul.f32 %v952, %v996
    %v1000 = vmul.f32 %v954, %v997
    %v1001 = vmul.f32 %v956, %v998
    %v1002 = vpack.c.bf16 %v1000, %v999
    %v1003 = vpack.c.bf16 %v1001, %v1001
    %v1005 = vsel %vm281, %v403, 0
    %v1008 = vsel %vm285, %v1003, 0
    %1010 = vmatprep.subr.bf16.mxu0 0
    %1011 = vmatpush1.bf16.msra.mxu0 %v1002
    %1012 = vmatprep.subr.bf16.mxu0 0
    %1013 = vmatpush1.bf16.msra.mxu0 %v1008
    %1014 = vmatprep.subr.bf16.mxu0 0
    %1015 = vmatpush1.bf16.msra.mxu0 0
    %1016 = vmatprep.subr.bf16.mxu0 0
    %1017 = vmatpush1.bf16.msra.mxu0 0
    %1018 = vmatprep.subr.bf16.mxu0 0
    %1019 = vmatpush1.bf16.msra.mxu0 0
    %1020 = vmatprep.subr.bf16.mxu0 0
    %1021 = vmatpush1.bf16.msra.mxu0 0
    %1022 = vmatprep.subr.bf16.mxu0 0
    %1023 = vmatpush1.bf16.msra.mxu0 0
    %1024 = vmatprep.subr.bf16.mxu0 0
    %1025 = vmatpush1.bf16.msra.mxu0 0
    %1026 = vmatprep.subr.bf16.mxu0 0
    %1027 = vmatpush1.bf16.msra.mxu0 0
    %1028 = vmatprep.subr.bf16.mxu0 0
    %1029 = vmatpush1.bf16.msra.mxu0 0
    %1030 = vmatprep.subr.bf16.mxu0 0
    %1031 = vmatpush1.bf16.msra.mxu0 0
    %1032 = vmatprep.subr.bf16.mxu0 0
    %1033 = vmatpush1.bf16.msra.mxu0 0
    %1034 = vmatprep.subr.bf16.mxu0 0
    %1035 = vmatpush1.bf16.msra.mxu0 0
    %1036 = vmatprep.subr.bf16.mxu0 0
    %1037 = vmatpush1.bf16.msra.mxu0 0
    %1038 = vmatprep.subr.bf16.mxu0 0
    %1039 = vmatpush1.bf16.msra.mxu0 0
    %1040 = vmatprep.subr.bf16.mxu0 0
    %1041 = vmatpush1.bf16.msra.mxu0 0
    %1042 = vmatprep.mubr.bf16.mxu0 0
    %1043 = vmatmul.mubr.bf16.gmra.mrb[0].mxu0 %v1005
    %v1044 = vpop.f32.mrb[0].mxu0
    %v1045 = vadd.f32 0.0, %v1044
    %v1046 = vpop.f32.mrb[0].mxu0
    %v1047 = vpop.f32.mrb[0].mxu0
    %v1048 = vadd.f32 0.0, %v1047
    %v1049 = vpop.f32.mrb[0].mxu0
    %1050 = vdwg.mxu0
    %v1051 = vld [vmem:[%s41] sm:$0x1]
    %v1053 = vlaneseq
    %v1054 = vshrl.u32 %v1053, 7
    %v1055 = vsub.s32 0, %v1054
    %v1056 = vrot.slane %v1051, %v1055
    %v1058 = vmul.f32 %v1045, %v1056
    %v1059 = vmul.f32 %v1048, %v1056
    %v1060 = vld [vmem:[#allocation11] sm:$0x1]
    %v1062 = vlaneseq
    %v1063 = vshrl.u32 %v1062, 7
    %v1064 = vsub.s32 0, %v1063
    %v1065 = vrot.slane %v1060, %v1064
    %v1067 = vadd.f32 %v1058, %v1065
    %v1068 = vadd.f32 %v1059, %v1065
    %v1069 = vadd.f32 %v1067, %v342
    %v1070 = vadd.f32 %v1068, %v343
    %vm1071 = vcmp.gt.f32.partialorder %v1069, 20.0
    %vm1072 = vcmp.gt.f32.partialorder %v1070, 20.0
    %v1073 = vmin.f32 %v1069, 20.0
    %v1074 = vmin.f32 %v1070, 20.0
    %v1075 = vmul.f32 %v1073, 1.442695
    %v1076 = vpow.pop %v1075
    %v1077 = vmul.f32 %v1074, 1.442695
    %v1078 = vpow.pop %v1077
    %v1079 = vadd.f32 %v1076, 1.0
    %v1080 = vlog2.pop %v1079
    %v1081 = vmul.f32 %v1080, 0.6931472
    %v1082 = vmul.f32 -0.5, %v1076
    %v1083 = vadd.f32 %v1082, 1.0
    %v1084 = vmul.f32 %v1083, %v1076
    %v1085 = vand.u32 2147483647, %v1076
    %vm1086 = vcmp.lt.f32.partialorder %v1085, 0.0004427343
    %v1087 = vsel %vm1086, %v1084, %v1081
    %v1088 = vadd.f32 %v1078, 1.0
    %v1089 = vlog2.pop %v1088
    %v1090 = vmul.f32 %v1089, 0.6931472
    %v1091 = vmul.f32 -0.5, %v1078
    %v1092 = vadd.f32 %v1091, 1.0
    %v1093 = vmul.f32 %v1092, %v1078
    %v1094 = vand.u32 2147483647, %v1078
    %vm1095 = vcmp.lt.f32.partialorder %v1094, 0.0004427343
    %v1096 = vsel %vm1095, %v1093, %v1090
    %v1097 = vsel %vm1071, %v1069, %v1087
    %v1098 = vsel %vm1072, %v1070, %v1096
    %v1099 = vpack.c.bf16 %v1098, %v1097
    %v1101 = vsel %vm412, %v1099, 0
    %1103 = vmatprep.subr.bf16.mxu0 0
    %1104 = vmatpush1.bf16.msra.mxu0 %v1101
    %1105 = vmatprep.subr.bf16.mxu0 0
    %1106 = vmatpush1.bf16.msra.mxu0 0
    %1107 = vmatprep.subr.bf16.mxu0 0
    %1108 = vmatpush1.bf16.msra.mxu0 0
    %1109 = vmatprep.subr.bf16.mxu0 0
    %1110 = vmatpush1.bf16.msra.mxu0 0
    %1111 = vmatprep.subr.bf16.mxu0 0
    %1112 = vmatpush1.bf16.msra.mxu0 0
    %1113 = vmatprep.subr.bf16.mxu0 0
    %1114 = vmatpush1.bf16.msra.mxu0 0
    %1115 = vmatprep.subr.bf16.mxu0 0
    %1116 = vmatpush1.bf16.msra.mxu0 0
    %1117 = vmatprep.subr.bf16.mxu0 0
    %1118 = vmatpush1.bf16.msra.mxu0 0
    %1119 = vmatprep.subr.bf16.mxu0 0
    %1120 = vmatpush1.bf16.msra.mxu0 0
    %1121 = vmatprep.subr.bf16.mxu0 0
    %1122 = vmatpush1.bf16.msra.mxu0 0
    %1123 = vmatprep.subr.bf16.mxu0 0
    %1124 = vmatpush1.bf16.msra.mxu0 0
    %1125 = vmatprep.subr.bf16.mxu0 0
    %1126 = vmatpush1.bf16.msra.mxu0 0
    %1127 = vmatprep.subr.bf16.mxu0 0
    %1128 = vmatpush1.bf16.msra.mxu0 0
    %1129 = vmatprep.subr.bf16.mxu0 0
    %1130 = vmatpush1.bf16.msra.mxu0 0
    %1131 = vmatprep.subr.bf16.mxu0 0
    %1132 = vmatpush1.bf16.msra.mxu0 0
    %1133 = vmatprep.subr.bf16.mxu0 0
    %1134 = vmatpush1.bf16.msra.mxu0 0
    %1135 = vmatprep.mubr.bf16.mxu0 0
    %1136 = vmatmul.mubr.bf16.gmra.mrb[0].mxu0 %v407
    %v1137 = vpop.f32.mrb[0].mxu0
    %v1138 = vadd.f32 0.0, %v1137
    %v1139 = vpop.f32.mrb[0].mxu0
    %v1140 = vpop.f32.mrb[0].mxu0
    %v1141 = vadd.f32 0.0, %v1140
    %v1142 = vpop.f32.mrb[0].mxu0
    %1143 = vmatprep.mubr.bf16.mxu0 0
    %1144 = vmatmul.mubr.bf16.gmra.mrb[0].mxu0 %v410
    %v1145 = vpop.f32.mrb[0].mxu0
    %v1146 = vadd.f32 0.0, %v1145
    %v1147 = vpop.f32.mrb[0].mxu0
    %v1148 = vpop.f32.mrb[0].mxu0
    %v1149 = vpop.f32.mrb[0].mxu0
    %1150 = vdwg.mxu0
    %v1151 = vpack.c.bf16 %v1141, %v1138
    %v1152 = vpack.c.bf16 %v1146, %v1146
    %1153 = vmatprep.subr.bf16.mxu0 0
    %1154 = vmatpush1.bf16.msra.mxu0 %v1101
    %1155 = vmatprep.subr.bf16.mxu0 0
    %1156 = vmatpush1.bf16.msra.mxu0 0
    %1157 = vmatprep.subr.bf16.mxu0 0
    %1158 = vmatpush1.bf16.msra.mxu0 0
    %1159 = vmatprep.subr.bf16.mxu0 0
    %1160 = vmatpush1.bf16.msra.mxu0 0
    %1161 = vmatprep.subr.bf16.mxu0 0
    %1162 = vmatpush1.bf16.msra.mxu0 0
    %1163 = vmatprep.subr.bf16.mxu0 0
    %1164 = vmatpush1.bf16.msra.mxu0 0
    %1165 = vmatprep.subr.bf16.mxu0 0
    %1166 = vmatpush1.bf16.msra.mxu0 0
    %1167 = vmatprep.subr.bf16.mxu0 0
    %1168 = vmatpush1.bf16.msra.mxu0 0
    %1169 = vmatprep.subr.bf16.mxu0 0
    %1170 = vmatpush1.bf16.msra.mxu0 0
    %1171 = vmatprep.subr.bf16.mxu0 0
    %1172 = vmatpush1.bf16.msra.mxu0 0
    %1173 = vmatprep.subr.bf16.mxu0 0
    %1174 = vmatpush1.bf16.msra.mxu0 0
    %1175 = vmatprep.subr.bf16.mxu0 0
    %1176 = vmatpush1.bf16.msra.mxu0 0
    %1177 = vmatprep.subr.bf16.mxu0 0
    %1178 = vmatpush1.bf16.msra.mxu0 0
    %1179 = vmatprep.subr.bf16.mxu0 0
    %1180 = vmatpush1.bf16.msra.mxu0 0
    %1181 = vmatprep.subr.bf16.mxu0 0
    %1182 = vmatpush1.bf16.msra.mxu0 0
    %1183 = vmatprep.subr.bf16.mxu0 0
    %1184 = vmatpush1.bf16.msra.mxu0 0
    %1185 = vmatprep.mubr.bf16.mxu0 0
    %1186 = vmatmul.mubr.bf16.gmra.mrb[0].mxu0 %v467
    %v1187 = vpop.f32.mrb[0].mxu0
    %v1188 = vadd.f32 0.0, %v1187
    %v1189 = vpop.f32.mrb[0].mxu0
    %v1190 = vpop.f32.mrb[0].mxu0
    %v1191 = vadd.f32 0.0, %v1190
    %v1192 = vpop.f32.mrb[0].mxu0
    %1193 = vmatprep.mubr.bf16.mxu0 0
    %1194 = vmatmul.mubr.bf16.gmra.mrb[0].mxu0 %v470
    %v1195 = vpop.f32.mrb[0].mxu0
    %v1196 = vadd.f32 0.0, %v1195
    %v1197 = vpop.f32.mrb[0].mxu0
    %v1198 = vpop.f32.mrb[0].mxu0
    %v1199 = vpop.f32.mrb[0].mxu0
    %1200 = vdwg.mxu0
    %v1201 = vpack.c.bf16 %v1191, %v1188
    %v1202 = vpack.c.bf16 %v1196, %v1196
    %s1203 = scalar_lea.vmem %s25, 16
    %v1204 = vld [vmem:[%s1203] sm:$0xf]
    %v1205 = vld [vmem:[%s1203 + $0x4] sm:$0xf]
    %v1206 = vld [vmem:[%s1203 + $0x8] sm:$0xf]
    %v1207 = vld [vmem:[%s1203 + $0xc] sm:$0xf]
    %s1208 = scalar_lea.vmem %s27, 16
    %v1209 = vld [vmem:[%s1208] sm:$0xf]
    %v1210 = vld [vmem:[%s1208 + $0x4] sm:$0xf]
    %v1211 = vld [vmem:[%s1208 + $0x8] sm:$0xf]
    %v1212 = vld [vmem:[%s1208 + $0xc] sm:$0xf]
    %v1217 = vunpack.c.l.b16 %v1209
    %v1218 = vunpack.c.l.b16 %v1210
    %v1219 = vunpack.c.l.b16 %v1211
    %v1220 = vunpack.c.l.b16 %v1212
    %v1221 = vpack.c.b16 %v1218, %v1217
    %v1222 = vpack.c.b16 %v1220, %v1219
    %v1226 = vsel %vm542, %v1201, 0
    %v1229 = vsel %vm542, %v1202, 0
    %1231 = vmatprep.subr.bf16.mxu0 0
    %1232 = vmatpush1.bf16.msra.mxu0 %v1221
    %1233 = vmatprep.subr.bf16.mxu0 0
    %1234 = vmatpush1.bf16.msra.mxu0 %v1222
    %1235 = vmatprep.subr.bf16.mxu0 0
    %1236 = vmatpush1.bf16.msra.mxu0 0
    %1237 = vmatprep.subr.bf16.mxu0 0
    %1238 = vmatpush1.bf16.msra.mxu0 0
    %1239 = vmatprep.subr.bf16.mxu0 0
    %1240 = vmatpush1.bf16.msra.mxu0 0
    %1241 = vmatprep.subr.bf16.mxu0 0
    %1242 = vmatpush1.bf16.msra.mxu0 0
    %1243 = vmatprep.subr.bf16.mxu0 0
    %1244 = vmatpush1.bf16.msra.mxu0 0
    %1245 = vmatprep.subr.bf16.mxu0 0
    %1246 = vmatpush1.bf16.msra.mxu0 0
    %1247 = vmatprep.subr.bf16.mxu0 0
    %1248 = vmatpush1.bf16.msra.mxu0 0
    %1249 = vmatprep.subr.bf16.mxu0 0
    %1250 = vmatpush1.bf16.msra.mxu0 0
    %1251 = vmatprep.subr.bf16.mxu0 0
    %1252 = vmatpush1.bf16.msra.mxu0 0
    %1253 = vmatprep.subr.bf16.mxu0 0
    %1254 = vmatpush1.bf16.msra.mxu0 0
    %1255 = vmatprep.subr.bf16.mxu0 0
    %1256 = vmatpush1.bf16.msra.mxu0 0
    %1257 = vmatprep.subr.bf16.mxu0 0
    %1258 = vmatpush1.bf16.msra.mxu0 0
    %1259 = vmatprep.subr.bf16.mxu0 0
    %1260 = vmatpush1.bf16.msra.mxu0 0
    %1261 = vmatprep.subr.bf16.mxu0 0
    %1262 = vmatpush1.bf16.msra.mxu0 0
    %1263 = vmatprep.mubr.bf16.mxu0 0
    %1264 = vmatmul.mubr.bf16.gmra.mrb[0].mxu0 %v1226
    %v1265 = vpop.f32.mrb[0].mxu0
    %v1266 = vadd.f32 0.0, %v1265
    %v1267 = vpop.f32.mrb[0].mxu0
    %v1268 = vpop.f32.mrb[0].mxu0
    %v1269 = vadd.f32 0.0, %v1268
    %v1270 = vpop.f32.mrb[0].mxu0
    %1271 = vmatprep.mubr.bf16.mxu0 0
    %1272 = vmatmul.mubr.bf16.gmra.mrb[0].mxu0 %v1229
    %v1273 = vpop.f32.mrb[0].mxu0
    %v1274 = vadd.f32 0.0, %v1273
    %v1275 = vpop.f32.mrb[0].mxu0
    %v1276 = vpop.f32.mrb[0].mxu0
    %v1277 = vpop.f32.mrb[0].mxu0
    %1278 = vdwg.mxu0
    %v1283 = vunpack.c.l.b16 %v1204
    %v1284 = vunpack.c.l.b16 %v1205
    %v1285 = vunpack.c.l.b16 %v1206
    %v1286 = vunpack.c.l.b16 %v1207
    %v1287 = vpack.c.b16 %v1284, %v1283
    %v1288 = vpack.c.b16 %v1286, %v1285
    %v1292 = vsel %vm542, %v1151, 0
    %v1295 = vsel %vm542, %v1152, 0
    %1297 = vmatprep.subr.bf16.mxu0 0
    %1298 = vmatpush1.bf16.msra.mxu0 %v1287
    %1299 = vmatprep.subr.bf16.mxu0 0
    %1300 = vmatpush1.bf16.msra.mxu0 %v1288
    %1301 = vmatprep.subr.bf16.mxu0 0
    %1302 = vmatpush1.bf16.msra.mxu0 0
    %1303 = vmatprep.subr.bf16.mxu0 0
    %1304 = vmatpush1.bf16.msra.mxu0 0
    %1305 = vmatprep.subr.bf16.mxu0 0
    %1306 = vmatpush1.bf16.msra.mxu0 0
    %1307 = vmatprep.subr.bf16.mxu0 0
    %1308 = vmatpush1.bf16.msra.mxu0 0
    %1309 = vmatprep.subr.bf16.mxu0 0
    %1310 = vmatpush1.bf16.msra.mxu0 0
    %1311 = vmatprep.subr.bf16.mxu0 0
    %1312 = vmatpush1.bf16.msra.mxu0 0
    %1313 = vmatprep.subr.bf16.mxu0 0
    %1314 = vmatpush1.bf16.msra.mxu0 0
    %1315 = vmatprep.subr.bf16.mxu0 0
    %1316 = vmatpush1.bf16.msra.mxu0 0
    %1317 = vmatprep.subr.bf16.mxu0 0
    %1318 = vmatpush1.bf16.msra.mxu0 0
    %1319 = vmatprep.subr.bf16.mxu0 0
    %1320 = vmatpush1.bf16.msra.mxu0 0
    %1321 = vmatprep.subr.bf16.mxu0 0
    %1322 = vmatpush1.bf16.msra.mxu0 0
    %1323 = vmatprep.subr.bf16.mxu0 0
    %1324 = vmatpush1.bf16.msra.mxu0 0
    %1325 = vmatprep.subr.bf16.mxu0 0
    %1326 = vmatpush1.bf16.msra.mxu0 0
    %1327 = vmatprep.subr.bf16.mxu0 0
    %1328 = vmatpush1.bf16.msra.mxu0 0
    %1329 = vmatprep.mubr.bf16.mxu0 0
    %1330 = vmatmul.mubr.bf16.gmra.mrb[0].mxu0 %v1292
    %v1331 = vpop.f32.mrb[0].mxu0
    %v1332 = vadd.f32 %v1266, %v1331
    %v1333 = vpop.f32.mrb[0].mxu0
    %v1334 = vpop.f32.mrb[0].mxu0
    %v1335 = vadd.f32 %v1269, %v1334
    %v1336 = vpop.f32.mrb[0].mxu0
    %1337 = vmatprep.mubr.bf16.mxu0 0
    %1338 = vmatmul.mubr.bf16.gmra.mrb[0].mxu0 %v1295
    %v1339 = vpop.f32.mrb[0].mxu0
    %v1340 = vadd.f32 %v1274, %v1339
    %v1341 = vpop.f32.mrb[0].mxu0
    %v1342 = vpop.f32.mrb[0].mxu0
    %v1343 = vpop.f32.mrb[0].mxu0
    %1344 = vdwg.mxu0
    %s1345 = scalar_lea.vmem %s29, 8
    %v1346 = vld [vmem:[%s1345] sm:$0xf]
    %v1347 = vld [vmem:[%s1345 + $0x4] sm:$0x3]
    %v1350 = vunpack.c.l.b16 %v1346
    %v1351 = vunpack.c.l.b16 %v1347
    %v1352 = vpack.c.b16 %v1351, %v1350
    %v1354 = vsel %vm412, %v1352, 0
    %1356 = vmatprep.subr.bf16.mxu0 0
    %1357 = vmatpush1.bf16.msra.mxu0 %v1354
    %1358 = vmatprep.subr.bf16.mxu0 0
    %1359 = vmatpush1.bf16.msra.mxu0 0
    %1360 = vmatprep.subr.bf16.mxu0 0
    %1361 = vmatpush1.bf16.msra.mxu0 0
    %1362 = vmatprep.subr.bf16.mxu0 0
    %1363 = vmatpush1.bf16.msra.mxu0 0
    %1364 = vmatprep.subr.bf16.mxu0 0
    %1365 = vmatpush1.bf16.msra.mxu0 0
    %1366 = vmatprep.subr.bf16.mxu0 0
    %1367 = vmatpush1.bf16.msra.mxu0 0
    %1368 = vmatprep.subr.bf16.mxu0 0
    %1369 = vmatpush1.bf16.msra.mxu0 0
    %1370 = vmatprep.subr.bf16.mxu0 0
    %1371 = vmatpush1.bf16.msra.mxu0 0
    %1372 = vmatprep.subr.bf16.mxu0 0
    %1373 = vmatpush1.bf16.msra.mxu0 0
    %1374 = vmatprep.subr.bf16.mxu0 0
    %1375 = vmatpush1.bf16.msra.mxu0 0
    %1376 = vmatprep.subr.bf16.mxu0 0
    %1377 = vmatpush1.bf16.msra.mxu0 0
    %1378 = vmatprep.subr.bf16.mxu0 0
    %1379 = vmatpush1.bf16.msra.mxu0 0
    %1380 = vmatprep.subr.bf16.mxu0 0
    %1381 = vmatpush1.bf16.msra.mxu0 0
    %1382 = vmatprep.subr.bf16.mxu0 0
    %1383 = vmatpush1.bf16.msra.mxu0 0
    %1384 = vmatprep.subr.bf16.mxu0 0
    %1385 = vmatpush1.bf16.msra.mxu0 0
    %1386 = vmatprep.subr.bf16.mxu0 0
    %1387 = vmatpush1.bf16.msra.mxu0 0
    %1388 = vmatprep.mubr.bf16.mxu0 0
    %1389 = vmatmul.mubr.bf16.gmra.mrb[0].mxu0 %v671
    %v1390 = vpop.f32.mrb[0].mxu0
    %v1391 = vadd.f32 0.0, %v1390
    %v1392 = vpop.f32.mrb[0].mxu0
    %v1393 = vpop.f32.mrb[0].mxu0
    %v1394 = vadd.f32 0.0, %v1393
    %v1395 = vpop.f32.mrb[0].mxu0
    %1396 = vmatprep.mubr.bf16.mxu0 0
    %1397 = vmatmul.mubr.bf16.gmra.mrb[0].mxu0 %v674
    %v1398 = vpop.f32.mrb[0].mxu0
    %v1399 = vadd.f32 0.0, %v1398
    %v1400 = vpop.f32.mrb[0].mxu0
    %v1401 = vpop.f32.mrb[0].mxu0
    %v1402 = vpop.f32.mrb[0].mxu0
    %1403 = vdwg.mxu0
    %v1404 = vadd.f32 %v1332, %v1391
    %v1405 = vadd.f32 %v1335, %v1394
    %v1406 = vadd.f32 %v1340, %v1399
    %s1407 = scalar_lea.vmem [#allocation8], 1
    %v1408 = vld [vmem:[%s1407] sm:$0x1]
    %v1410 = vlaneseq
    %v1411 = vshrl.u32 %v1410, 7
    %v1412 = vsub.s32 0, %v1411
    %v1413 = vrot.slane %v1408, %v1412
    %v1415 = vadd.f32 %v1404, %v1413
    %v1416 = vadd.f32 %v1405, %v1413
    %v1417 = vadd.f32 %v1406, %v1413
    %s1418 = scalar_lea.vmem %s33, 16
    %v1419 = vld [vmem:[%s1418] sm:$0xf]
    %v1420 = vld [vmem:[%s1418 + $0x4] sm:$0xf]
    %v1421 = vld [vmem:[%s1418 + $0x8] sm:$0xf]
    %v1422 = vld [vmem:[%s1418 + $0xc] sm:$0xf]
    %s1423 = scalar_lea.vmem %s35, 16
    %v1424 = vld [vmem:[%s1423] sm:$0xf]
    %v1425 = vld [vmem:[%s1423 + $0x4] sm:$0xf]
    %v1426 = vld [vmem:[%s1423 + $0x8] sm:$0xf]
    %v1427 = vld [vmem:[%s1423 + $0xc] sm:$0xf]
    %v1432 = vunpack.c.l.b16 %v1424
    %v1433 = vunpack.c.l.b16 %v1425
    %v1434 = vunpack.c.l.b16 %v1426
    %v1435 = vunpack.c.l.b16 %v1427
    %v1436 = vpack.c.b16 %v1433, %v1432
    %v1437 = vpack.c.b16 %v1435, %v1434
    %1440 = vmatprep.subr.bf16.mxu0 0
    %1441 = vmatpush1.bf16.msra.mxu0 %v1436
    %1442 = vmatprep.subr.bf16.mxu0 0
    %1443 = vmatpush1.bf16.msra.mxu0 %v1437
    %1444 = vmatprep.subr.bf16.mxu0 0
    %1445 = vmatpush1.bf16.msra.mxu0 0
    %1446 = vmatprep.subr.bf16.mxu0 0
    %1447 = vmatpush1.bf16.msra.mxu0 0
    %1448 = vmatprep.subr.bf16.mxu0 0
    %1449 = vmatpush1.bf16.msra.mxu0 0
    %1450 = vmatprep.subr.bf16.mxu0 0
    %1451 = vmatpush1.bf16.msra.mxu0 0
    %1452 = vmatprep.subr.bf16.mxu0 0
    %1453 = vmatpush1.bf16.msra.mxu0 0
    %1454 = vmatprep.subr.bf16.mxu0 0
    %1455 = vmatpush1.bf16.msra.mxu0 0
    %1456 = vmatprep.subr.bf16.mxu0 0
    %1457 = vmatpush1.bf16.msra.mxu0 0
    %1458 = vmatprep.subr.bf16.mxu0 0
    %1459 = vmatpush1.bf16.msra.mxu0 0
    %1460 = vmatprep.subr.bf16.mxu0 0
    %1461 = vmatpush1.bf16.msra.mxu0 0
    %1462 = vmatprep.subr.bf16.mxu0 0
    %1463 = vmatpush1.bf16.msra.mxu0 0
    %1464 = vmatprep.subr.bf16.mxu0 0
    %1465 = vmatpush1.bf16.msra.mxu0 0
    %1466 = vmatprep.subr.bf16.mxu0 0
    %1467 = vmatpush1.bf16.msra.mxu0 0
    %1468 = vmatprep.subr.bf16.mxu0 0
    %1469 = vmatpush1.bf16.msra.mxu0 0
    %1470 = vmatprep.subr.bf16.mxu0 0
    %1471 = vmatpush1.bf16.msra.mxu0 0
    %1472 = vmatprep.mubr.bf16.mxu0 0
    %1473 = vmatmul.mubr.bf16.gmra.mrb[0].mxu0 %v1226
    %v1474 = vpop.f32.mrb[0].mxu0
    %v1475 = vadd.f32 0.0, %v1474
    %v1476 = vpop.f32.mrb[0].mxu0
    %v1477 = vpop.f32.mrb[0].mxu0
    %v1478 = vadd.f32 0.0, %v1477
    %v1479 = vpop.f32.mrb[0].mxu0
    %1480 = vmatprep.mubr.bf16.mxu0 0
    %1481 = vmatmul.mubr.bf16.gmra.mrb[0].mxu0 %v1229
    %v1482 = vpop.f32.mrb[0].mxu0
    %v1483 = vadd.f32 0.0, %v1482
    %v1484 = vpop.f32.mrb[0].mxu0
    %v1485 = vpop.f32.mrb[0].mxu0
    %v1486 = vpop.f32.mrb[0].mxu0
    %1487 = vdwg.mxu0
    %v1492 = vunpack.c.l.b16 %v1419
    %v1493 = vunpack.c.l.b16 %v1420
    %v1494 = vunpack.c.l.b16 %v1421
    %v1495 = vunpack.c.l.b16 %v1422
    %v1496 = vpack.c.b16 %v1493, %v1492
    %v1497 = vpack.c.b16 %v1495, %v1494
    %1500 = vmatprep.subr.bf16.mxu0 0
    %1501 = vmatpush1.bf16.msra.mxu0 %v1496
    %1502 = vmatprep.subr.bf16.mxu0 0
    %1503 = vmatpush1.bf16.msra.mxu0 %v1497
    %1504 = vmatprep.subr.bf16.mxu0 0
    %1505 = vmatpush1.bf16.msra.mxu0 0
    %1506 = vmatprep.subr.bf16.mxu0 0
    %1507 = vmatpush1.bf16.msra.mxu0 0
    %1508 = vmatprep.subr.bf16.mxu0 0
    %1509 = vmatpush1.bf16.msra.mxu0 0
    %1510 = vmatprep.subr.bf16.mxu0 0
    %1511 = vmatpush1.bf16.msra.mxu0 0
    %1512 = vmatprep.subr.bf16.mxu0 0
    %1513 = vmatpush1.bf16.msra.mxu0 0
    %1514 = vmatprep.subr.bf16.mxu0 0
    %1515 = vmatpush1.bf16.msra.mxu0 0
    %1516 = vmatprep.subr.bf16.mxu0 0
    %1517 = vmatpush1.bf16.msra.mxu0 0
    %1518 = vmatprep.subr.bf16.mxu0 0
    %1519 = vmatpush1.bf16.msra.mxu0 0
    %1520 = vmatprep.subr.bf16.mxu0 0
    %1521 = vmatpush1.bf16.msra.mxu0 0
    %1522 = vmatprep.subr.bf16.mxu0 0
    %1523 = vmatpush1.bf16.msra.mxu0 0
    %1524 = vmatprep.subr.bf16.mxu0 0
    %1525 = vmatpush1.bf16.msra.mxu0 0
    %1526 = vmatprep.subr.bf16.mxu0 0
    %1527 = vmatpush1.bf16.msra.mxu0 0
    %1528 = vmatprep.subr.bf16.mxu0 0
    %1529 = vmatpush1.bf16.msra.mxu0 0
    %1530 = vmatprep.subr.bf16.mxu0 0
    %1531 = vmatpush1.bf16.msra.mxu0 0
    %1532 = vmatprep.mubr.bf16.mxu0 0
    %1533 = vmatmul.mubr.bf16.gmra.mrb[0].mxu0 %v1292
    %v1534 = vpop.f32.mrb[0].mxu0
    %v1535 = vadd.f32 %v1475, %v1534
    %v1536 = vpop.f32.mrb[0].mxu0
    %v1537 = vpop.f32.mrb[0].mxu0
    %v1538 = vadd.f32 %v1478, %v1537
    %v1539 = vpop.f32.mrb[0].mxu0
    %1540 = vmatprep.mubr.bf16.mxu0 0
    %1541 = vmatmul.mubr.bf16.gmra.mrb[0].mxu0 %v1295
    %v1542 = vpop.f32.mrb[0].mxu0
    %v1543 = vadd.f32 %v1483, %v1542
    %v1544 = vpop.f32.mrb[0].mxu0
    %v1545 = vpop.f32.mrb[0].mxu0
    %v1546 = vpop.f32.mrb[0].mxu0
    %1547 = vdwg.mxu0
    %s1548 = scalar_lea.vmem %s37, 8
    %v1549 = vld [vmem:[%s1548] sm:$0xf]
    %v1550 = vld [vmem:[%s1548 + $0x4] sm:$0x3]
    %v1553 = vunpack.c.l.b16 %v1549
    %v1554 = vunpack.c.l.b16 %v1550
    %v1555 = vpack.c.b16 %v1554, %v1553
    %v1557 = vsel %vm412, %v1555, 0
    %1559 = vmatprep.subr.bf16.mxu0 0
    %1560 = vmatpush1.bf16.msra.mxu0 %v1557
    %1561 = vmatprep.subr.bf16.mxu0 0
    %1562 = vmatpush1.bf16.msra.mxu0 0
    %1563 = vmatprep.subr.bf16.mxu0 0
    %1564 = vmatpush1.bf16.msra.mxu0 0
    %1565 = vmatprep.subr.bf16.mxu0 0
    %1566 = vmatpush1.bf16.msra.mxu0 0
    %1567 = vmatprep.subr.bf16.mxu0 0
    %1568 = vmatpush1.bf16.msra.mxu0 0
    %1569 = vmatprep.subr.bf16.mxu0 0
    %1570 = vmatpush1.bf16.msra.mxu0 0
    %1571 = vmatprep.subr.bf16.mxu0 0
    %1572 = vmatpush1.bf16.msra.mxu0 0
    %1573 = vmatprep.subr.bf16.mxu0 0
    %1574 = vmatpush1.bf16.msra.mxu0 0
    %1575 = vmatprep.subr.bf16.mxu0 0
    %1576 = vmatpush1.bf16.msra.mxu0 0
    %1577 = vmatprep.subr.bf16.mxu0 0
    %1578 = vmatpush1.bf16.msra.mxu0 0
    %1579 = vmatprep.subr.bf16.mxu0 0
    %1580 = vmatpush1.bf16.msra.mxu0 0
    %1581 = vmatprep.subr.bf16.mxu0 0
    %1582 = vmatpush1.bf16.msra.mxu0 0
    %1583 = vmatprep.subr.bf16.mxu0 0
    %1584 = vmatpush1.bf16.msra.mxu0 0
    %1585 = vmatprep.subr.bf16.mxu0 0
    %1586 = vmatpush1.bf16.msra.mxu0 0
    %1587 = vmatprep.subr.bf16.mxu0 0
    %1588 = vmatpush1.bf16.msra.mxu0 0
    %1589 = vmatprep.subr.bf16.mxu0 0
    %1590 = vmatpush1.bf16.msra.mxu0 0
    %1591 = vmatprep.mubr.bf16.mxu0 0
    %1592 = vmatmul.mubr.bf16.gmra.mrb[0].mxu0 %v671
    %v1593 = vpop.f32.mrb[0].mxu0
    %v1594 = vadd.f32 0.0, %v1593
    %v1595 = vpop.f32.mrb[0].mxu0
    %v1596 = vpop.f32.mrb[0].mxu0
    %v1597 = vadd.f32 0.0, %v1596
    %v1598 = vpop.f32.mrb[0].mxu0
    %1599 = vmatprep.mubr.bf16.mxu0 0
    %1600 = vmatmul.mubr.bf16.gmra.mrb[0].mxu0 %v674
    %v1601 = vpop.f32.mrb[0].mxu0
    %v1602 = vadd.f32 0.0, %v1601
    %v1603 = vpop.f32.mrb[0].mxu0
    %v1604 = vpop.f32.mrb[0].mxu0
    %v1605 = vpop.f32.mrb[0].mxu0
    %1606 = vdwg.mxu0
    %v1607 = vadd.f32 %v1535, %v1594
    %v1608 = vadd.f32 %v1538, %v1597
    %v1609 = vadd.f32 %v1543, %v1602
    %s1610 = scalar_lea.vmem [#allocation10], 1
    %v1611 = vld [vmem:[%s1610] sm:$0x1]
    %v1613 = vlaneseq
    %v1614 = vshrl.u32 %v1613, 7
    %v1615 = vsub.s32 0, %v1614
    %v1616 = vrot.slane %v1611, %v1615
    %v1618 = vadd.f32 %v1607, %v1616
    %v1619 = vadd.f32 %v1608, %v1616
    %v1620 = vadd.f32 %v1609, %v1616
    %v1621 = vxor.u32 %v1415, 2147483648
    %v1622 = vxor.u32 %v1416, 2147483648
    %v1623 = vxor.u32 %v1417, 2147483648
    %v1624 = vmul.f32 %v1621, 1.442695
    %v1625 = vpow.pop %v1624
    %v1626 = vmul.f32 %v1622, 1.442695
    %v1627 = vpow.pop %v1626
    %v1628 = vmul.f32 %v1623, 1.442695
    %v1629 = vpow.pop %v1628
    %v1630 = vadd.f32 %v1625, 1.0
    %v1631 = vadd.f32 %v1627, 1.0
    %v1632 = vadd.f32 %v1629, 1.0
    %v1633 = vrcp.pop %v1630
    %v1634 = vmul.f32 1.0, %v1633
    %v1635 = vrcp.pop %v1631
    %v1636 = vmul.f32 1.0, %v1635
    %v1637 = vrcp.pop %v1632
    %v1638 = vmul.f32 1.0, %v1637
    %vm1639 = vcmp.gt.f32.partialorder %v1618, 20.0
    %vm1640 = vcmp.gt.f32.partialorder %v1619, 20.0
    %vm1641 = vcmp.gt.f32.partialorder %v1620, 20.0
    %v1642 = vmin.f32 %v1618, 20.0
    %v1643 = vmin.f32 %v1619, 20.0
    %v1644 = vmin.f32 %v1620, 20.0
    %v1645 = vmul.f32 %v1642, 1.442695
    %v1646 = vpow.pop %v1645
    %v1647 = vmul.f32 %v1643, 1.442695
    %v1648 = vpow.pop %v1647
    %v1649 = vmul.f32 %v1644, 1.442695
    %v1650 = vpow.pop %v1649
    %v1651 = vadd.f32 %v1646, 1.0
    %v1652 = vlog2.pop %v1651
    %v1653 = vmul.f32 %v1652, 0.6931472
    %v1654 = vmul.f32 -0.5, %v1646
    %v1655 = vadd.f32 %v1654, 1.0
    %v1656 = vmul.f32 %v1655, %v1646
    %v1657 = vand.u32 2147483647, %v1646
    %vm1658 = vcmp.lt.f32.partialorder %v1657, 0.0004427343
    %v1659 = vsel %vm1658, %v1656, %v1653
    %v1660 = vadd.f32 %v1648, 1.0
    %v1661 = vlog2.pop %v1660
    %v1662 = vmul.f32 %v1661, 0.6931472
    %v1663 = vmul.f32 -0.5, %v1648
    %v1664 = vadd.f32 %v1663, 1.0
    %v1665 = vmul.f32 %v1664, %v1648
    %v1666 = vand.u32 2147483647, %v1648
    %vm1667 = vcmp.lt.f32.partialorder %v1666, 0.0004427343
    %v1668 = vsel %vm1667, %v1665, %v1662
    %v1669 = vadd.f32 %v1650, 1.0
    %v1670 = vlog2.pop %v1669
    %v1671 = vmul.f32 %v1670, 0.6931472
    %v1672 = vmul.f32 -0.5, %v1650
    %v1673 = vadd.f32 %v1672, 1.0
    %v1674 = vmul.f32 %v1673, %v1650
    %v1675 = vand.u32 2147483647, %v1650
    %vm1676 = vcmp.lt.f32.partialorder %v1675, 0.0004427343
    %v1677 = vsel %vm1676, %v1674, %v1671
    %v1678 = vsel %vm1639, %v1618, %v1659
    %v1679 = vsel %vm1640, %v1619, %v1668
    %v1680 = vsel %vm1641, %v1620, %v1677
    %v1681 = vmul.f32 %v1634, %v1678
    %v1682 = vmul.f32 %v1636, %v1679
    %v1683 = vmul.f32 %v1638, %v1680
    %v1684 = vpack.c.bf16 %v1682, %v1681
    %v1685 = vpack.c.bf16 %v1683, %v1683
    %v1687 = vsel %vm285, %v1685, 0
    %1689 = vmatprep.subr.bf16.mxu0 0
    %1690 = vmatpush1.bf16.msra.mxu0 %v1684
    %1691 = vmatprep.subr.bf16.mxu0 0
    %1692 = vmatpush1.bf16.msra.mxu0 %v1687
    %1693 = vmatprep.subr.bf16.mxu0 0
    %1694 = vmatpush1.bf16.msra.mxu0 0
    %1695 = vmatprep.subr.bf16.mxu0 0
    %1696 = vmatpush1.bf16.msra.mxu0 0
    %1697 = vmatprep.subr.bf16.mxu0 0
    %1698 = vmatpush1.bf16.msra.mxu0 0
    %1699 = vmatprep.subr.bf16.mxu0 0
    %1700 = vmatpush1.bf16.msra.mxu0 0
    %1701 = vmatprep.subr.bf16.mxu0 0
    %1702 = vmatpush1.bf16.msra.mxu0 0
    %1703 = vmatprep.subr.bf16.mxu0 0
    %1704 = vmatpush1.bf16.msra.mxu0 0
    %1705 = vmatprep.subr.bf16.mxu0 0
    %1706 = vmatpush1.bf16.msra.mxu0 0
    %1707 = vmatprep.subr.bf16.mxu0 0
    %1708 = vmatpush1.bf16.msra.mxu0 0
    %1709 = vmatprep.subr.bf16.mxu0 0
    %1710 = vmatpush1.bf16.msra.mxu0 0
    %1711 = vmatprep.subr.bf16.mxu0 0
    %1712 = vmatpush1.bf16.msra.mxu0 0
    %1713 = vmatprep.subr.bf16.mxu0 0
    %1714 = vmatpush1.bf16.msra.mxu0 0
    %1715 = vmatprep.subr.bf16.mxu0 0
    %1716 = vmatpush1.bf16.msra.mxu0 0
    %1717 = vmatprep.subr.bf16.mxu0 0
    %1718 = vmatpush1.bf16.msra.mxu0 0
    %1719 = vmatprep.subr.bf16.mxu0 0
    %1720 = vmatpush1.bf16.msra.mxu0 0
    %1721 = vmatprep.mubr.bf16.mxu0 0
    %1722 = vmatmul.mubr.bf16.gmra.mrb[0].mxu0 %v1005
    %v1723 = vpop.f32.mrb[0].mxu0
    %v1724 = vadd.f32 0.0, %v1723
    %v1725 = vpop.f32.mrb[0].mxu0
    %v1726 = vpop.f32.mrb[0].mxu0
    %v1727 = vadd.f32 0.0, %v1726
    %v1728 = vpop.f32.mrb[0].mxu0
    %1729 = vdwg.mxu0
    %s1730 = scalar_lea.vmem %s41, 1
    %v1731 = vld [vmem:[%s1730] sm:$0x1]
    %v1733 = vlaneseq
    %v1734 = vshrl.u32 %v1733, 7
    %v1735 = vsub.s32 0, %v1734
    %v1736 = vrot.slane %v1731, %v1735
    %v1738 = vmul.f32 %v1724, %v1736
    %v1739 = vmul.f32 %v1727, %v1736
    %s1740 = scalar_lea.vmem [#allocation11], 1
    %v1741 = vld [vmem:[%s1740] sm:$0x1]
    %v1743 = vlaneseq
    %v1744 = vshrl.u32 %v1743, 7
    %v1745 = vsub.s32 0, %v1744
    %v1746 = vrot.slane %v1741, %v1745
    %v1748 = vadd.f32 %v1738, %v1746
    %v1749 = vadd.f32 %v1739, %v1746
    %v1750 = vadd.f32 %v1748, %v1097
    %v1751 = vadd.f32 %v1749, %v1098
    %vm1752 = vcmp.gt.f32.partialorder %v1750, 20.0
    %vm1753 = vcmp.gt.f32.partialorder %v1751, 20.0
    %v1754 = vmin.f32 %v1750, 20.0
    %v1755 = vmin.f32 %v1751, 20.0
    %v1756 = vmul.f32 %v1754, 1.442695
    %v1757 = vpow.pop %v1756
    %v1758 = vmul.f32 %v1755, 1.442695
    %v1759 = vpow.pop %v1758
    %v1760 = vadd.f32 %v1757, 1.0
    %v1761 = vlog2.pop %v1760
    %v1762 = vmul.f32 %v1761, 0.6931472
    %v1763 = vmul.f32 -0.5, %v1757
    %v1764 = vadd.f32 %v1763, 1.0
    %v1765 = vmul.f32 %v1764, %v1757
    %v1766 = vand.u32 2147483647, %v1757
    %vm1767 = vcmp.lt.f32.partialorder %v1766, 0.0004427343
    %v1768 = vsel %vm1767, %v1765, %v1762
    %v1769 = vadd.f32 %v1759, 1.0
    %v1770 = vlog2.pop %v1769
    %v1771 = vmul.f32 %v1770, 0.6931472
    %v1772 = vmul.f32 -0.5, %v1759
    %v1773 = vadd.f32 %v1772, 1.0
    %v1774 = vmul.f32 %v1773, %v1759
    %v1775 = vand.u32 2147483647, %v1759
    %vm1776 = vcmp.lt.f32.partialorder %v1775, 0.0004427343
    %v1777 = vsel %vm1776, %v1774, %v1771
    %v1778 = vsel %vm1752, %v1750, %v1768
    %v1779 = vsel %vm1753, %v1751, %v1777
    %v1780 = vmul.u32 %v393, 6
    %vm1781 = vcmp.ge.s32.totalorder %v357, %v1780
    %v1782 = vadd.s32 %v1780, 6
    %vm1783 = vcmp.lt.s32.totalorder %v357, %v1782
    %vm1784 = vmand %vm1781, %vm1783
    %v1785 = vsel %vm1784, 1.0, 0.0
    %v1786 = vpack.c.bf16 %v1785, %v1785
    %v1787 = vpack.c.bf16 %v1779, %v1778
    %v1789 = vsel %vm405, %v1786, 0
    %v1792 = vsel %vm412, %v1787, 0
    %1794 = vmatprep.subr.bf16.mxu0 0
    %1795 = vmatpush1.bf16.msra.mxu0 %v1792
    %1796 = vmatprep.subr.bf16.mxu0 0
    %1797 = vmatpush1.bf16.msra.mxu0 0
    %1798 = vmatprep.subr.bf16.mxu0 0
    %1799 = vmatpush1.bf16.msra.mxu0 0
    %1800 = vmatprep.subr.bf16.mxu0 0
    %1801 = vmatpush1.bf16.msra.mxu0 0
    %1802 = vmatprep.subr.bf16.mxu0 0
    %1803 = vmatpush1.bf16.msra.mxu0 0
    %1804 = vmatprep.subr.bf16.mxu0 0
    %1805 = vmatpush1.bf16.msra.mxu0 0
    %1806 = vmatprep.subr.bf16.mxu0 0
    %1807 = vmatpush1.bf16.msra.mxu0 0
    %1808 = vmatprep.subr.bf16.mxu0 0
    %1809 = vmatpush1.bf16.msra.mxu0 0
    %1810 = vmatprep.subr.bf16.mxu0 0
    %1811 = vmatpush1.bf16.msra.mxu0 0
    %1812 = vmatprep.subr.bf16.mxu0 0
    %1813 = vmatpush1.bf16.msra.mxu0 0
    %1814 = vmatprep.subr.bf16.mxu0 0
    %1815 = vmatpush1.bf16.msra.mxu0 0
    %1816 = vmatprep.subr.bf16.mxu0 0
    %1817 = vmatpush1.bf16.msra.mxu0 0
    %1818 = vmatprep.subr.bf16.mxu0 0
    %1819 = vmatpush1.bf16.msra.mxu0 0
    %1820 = vmatprep.subr.bf16.mxu0 0
    %1821 = vmatpush1.bf16.msra.mxu0 0
    %1822 = vmatprep.subr.bf16.mxu0 0
    %1823 = vmatpush1.bf16.msra.mxu0 0
    %1824 = vmatprep.subr.bf16.mxu0 0
    %1825 = vmatpush1.bf16.msra.mxu0 0
    %1826 = vmatprep.mubr.bf16.mxu0 0
    %1827 = vmatmul.mubr.bf16.gmra.mrb[0].mxu0 %v1789
    %v1828 = vpop.f32.mrb[0].mxu0
    %v1829 = vadd.f32 0.0, %v1828
    %v1830 = vpop.f32.mrb[0].mxu0
    %v1831 = vpop.f32.mrb[0].mxu0
    %v1832 = vpop.f32.mrb[0].mxu0
    %1833 = vdwg.mxu0
    %v1834 = vmul.f32 %v1829, 0.16666667
    %v1835 = vld [vmem:[%s11] sm:$0xff]
    %v1836 = vld [vmem:[%s11 + $0x8] sm:$0xff]
    %v1837 = vpack.c.bf16 %v1836, %v1835
    %v1838 = vld [vmem:[%s45] sm:$0xf]
    %v1839 = vld [vmem:[%s45 + $0x4] sm:$0xf]
    %v1840 = vld [vmem:[%s45 + $0x8] sm:$0x3]
    %v1841 = vld [vmem:[#allocation13] sm:$0x1]
    %v1843 = vlaneseq
    %v1844 = vshrl.u32 %v1843, 7
    %v1845 = vsub.s32 0, %v1844
    %v1846 = vrot.slane %v1841, %v1845
    %v1851 = vunpack.c.l.b16 %v1838
    %v1852 = vunpack.c.l.b16 %v1839
    %v1853 = vunpack.c.l.b16 %v1840
    %v1854 = vpack.c.b16 %v1852, %v1851
    %v1855 = vpack.c.b16 %v1853, %v1853
    %vm1857 = vcmask 162816
    %v1859 = vsel %vm1857, %v1837, 0
    %vm1861 = vcmask 1041408
    %v1863 = vsel %vm1861, %v1855, 0
    %1865 = vmatprep.subr.bf16.mxu0 0
    %1866 = vmatpush1.bf16.msra.mxu0 %v1854
    %1867 = vmatprep.subr.bf16.mxu0 0
    %1868 = vmatpush1.bf16.msra.mxu0 %v1863
    %1869 = vmatprep.subr.bf16.mxu0 0
    %1870 = vmatpush1.bf16.msra.mxu0 0
    %1871 = vmatprep.subr.bf16.mxu0 0
    %1872 = vmatpush1.bf16.msra.mxu0 0
    %1873 = vmatprep.subr.bf16.mxu0 0
    %1874 = vmatpush1.bf16.msra.mxu0 0
    %1875 = vmatprep.subr.bf16.mxu0 0
    %1876 = vmatpush1.bf16.msra.mxu0 0
    %1877 = vmatprep.subr.bf16.mxu0 0
    %1878 = vmatpush1.bf16.msra.mxu0 0
    %1879 = vmatprep.subr.bf16.mxu0 0
    %1880 = vmatpush1.bf16.msra.mxu0 0
    %1881 = vmatprep.subr.bf16.mxu0 0
    %1882 = vmatpush1.bf16.msra.mxu0 0
    %1883 = vmatprep.subr.bf16.mxu0 0
    %1884 = vmatpush1.bf16.msra.mxu0 0
    %1885 = vmatprep.subr.bf16.mxu0 0
    %1886 = vmatpush1.bf16.msra.mxu0 0
    %1887 = vmatprep.subr.bf16.mxu0 0
    %1888 = vmatpush1.bf16.msra.mxu0 0
    %1889 = vmatprep.subr.bf16.mxu0 0
    %1890 = vmatpush1.bf16.msra.mxu0 0
    %1891 = vmatprep.subr.bf16.mxu0 0
    %1892 = vmatpush1.bf16.msra.mxu0 0
    %1893 = vmatprep.subr.bf16.mxu0 0
    %1894 = vmatpush1.bf16.msra.mxu0 0
    %1895 = vmatprep.subr.bf16.mxu0 0
    %1896 = vmatpush1.bf16.msra.mxu0 0
    %1897 = vmatprep.mubr.bf16.mxu0 0
    %1898 = vmatmul.mubr.bf16.gmra.mrb[0].mxu0 %v1859
    %v1899 = vpop.f32.mrb[0].mxu0
    %v1900 = vadd.f32 %v1846, %v1899
    %v1901 = vpop.f32.mrb[0].mxu0
    %v1902 = vpop.f32.mrb[0].mxu0
    %v1903 = vadd.f32 %v1846, %v1902
    %v1904 = vpop.f32.mrb[0].mxu0
    %1905 = vdwg.mxu0
    %v1906 = vxor.u32 %v1900, 2147483648
    %v1907 = vxor.u32 %v1903, 2147483648
    %v1908 = vmul.f32 %v1906, 1.442695
    %v1909 = vpow.pop %v1908
    %v1910 = vmul.f32 %v1907, 1.442695
    %v1911 = vpow.pop %v1910
    %v1912 = vadd.f32 %v1909, 1.0
    %v1913 = vadd.f32 %v1911, 1.0
    %v1914 = vrcp.pop %v1912
    %v1915 = vmul.f32 1.0, %v1914
    %v1916 = vrcp.pop %v1913
    %v1917 = vmul.f32 1.0, %v1916
    %v1918 = vmul.f32 %v1900, %v1915
    %v1919 = vmul.f32 %v1903, %v1917
    %v1920 = vld [vmem:[%s13] sm:$0xff]
    %v1921 = vld [vmem:[%s13 + $0x8] sm:$0xff]
    %v1922 = vld [vmem:[%s13 + $0x10] sm:$0xff]
    %v1923 = vld [vmem:[%s13 + $0x18] sm:$0xff]
    %v1924 = vpack.c.bf16 %v1921, %v1920
    %v1925 = vpack.c.bf16 %v1923, %v1922
    %v1926 = vld [vmem:[%s15] sm:$0xff]
    %v1927 = vld [vmem:[%s15 + $0x8] sm:$0xff]
    %v1928 = vld [vmem:[%s15 + $0x10] sm:$0xff]
    %v1929 = vld [vmem:[%s15 + $0x18] sm:$0xff]
    %v1930 = vld [vmem:[%s17] sm:$0xff]
    %v1931 = vld [vmem:[%s17 + $0x8] sm:$0xff]
    %v1932 = vld [vmem:[%s17 + $0x10] sm:$0xff]
    %v1933 = vld [vmem:[%s17 + $0x18] sm:$0xff]
    %v1934 = vld [vmem:[#allocation5] sm:$0x1]
    %1935 = vset.pattern.permute.xlu0 0
    %1936 = vperm.xlu0 %1935, %v1926
    %v1937 = vpop.permute.xlu0 %1936
    %1938 = vset.pattern.permute.xlu0 0
    %1939 = vperm.xlu0 %1938, %v1927
    %v1940 = vpop.permute.xlu0 %1939
    %1941 = vset.pattern.permute.xlu0 0
    %1942 = vperm.xlu0 %1941, %v1928
    %v1943 = vpop.permute.xlu0 %1942
    %1944 = vset.pattern.permute.xlu0 0
    %1945 = vperm.xlu0 %1944, %v1929
    %v1946 = vpop.permute.xlu0 %1945
    %vm1947 = vcmp.eq.s32.totalorder %v357, %v1937
    %vm1948 = vcmp.eq.s32.totalorder %v357, %v1940
    %vm1949 = vcmp.eq.s32.totalorder %v357, %v1943
    %vm1950 = vcmp.eq.s32.totalorder %v357, %v1946
    %v1951 = vsel %vm1947, 1.0, 0.0
    %v1952 = vsel %vm1948, 1.0, 0.0
    %v1953 = vsel %vm1949, 1.0, 0.0
    %v1954 = vsel %vm1950, 1.0, 0.0
    %v1955 = vpack.c.bf16 %v1952, %v1951
    %v1956 = vpack.c.bf16 %v1954, %v1953
    %1957 = vset.pattern.permute.xlu0 0
    %1958 = vperm.xlu0 %1957, %v1930
    %v1959 = vpop.permute.xlu0 %1958
    %1960 = vset.pattern.permute.xlu0 0
    %1961 = vperm.xlu0 %1960, %v1931
    %v1962 = vpop.permute.xlu0 %1961
    %1963 = vset.pattern.permute.xlu0 0
    %1964 = vperm.xlu0 %1963, %v1932
    %v1965 = vpop.permute.xlu0 %1964
    %1966 = vset.pattern.permute.xlu0 0
    %1967 = vperm.xlu0 %1966, %v1933
    %v1968 = vpop.permute.xlu0 %1967
    %vm1969 = vcmp.eq.s32.totalorder %v357, %v1959
    %vm1970 = vcmp.eq.s32.totalorder %v357, %v1962
    %vm1971 = vcmp.eq.s32.totalorder %v357, %v1965
    %vm1972 = vcmp.eq.s32.totalorder %v357, %v1968
    %v1973 = vsel %vm1969, 1.0, 0.0
    %v1974 = vsel %vm1970, 1.0, 0.0
    %v1975 = vsel %vm1971, 1.0, 0.0
    %v1976 = vsel %vm1972, 1.0, 0.0
    %v1977 = vpack.c.bf16 %v1974, %v1973
    %v1978 = vpack.c.bf16 %v1976, %v1975
    %v1979 = vlaneseq
    %v1980 = vshrl.u32 %v1979, 7
    %v1981 = vsub.s32 0, %v1980
    %v1982 = vrot.slane %v1934, %v1981
    %vm1983 = vcmp.eq.s32.totalorder %v393, %v1982
    %vm1984 = vcmp.eq.s32.totalorder %v394, %v1982
    %v1985 = vsel %vm1983, 1.0, 0.0
    %v1986 = vsel %vm1984, 1.0, 0.0
    %v1987 = vpack.c.bf16 %v1986, %v1985
    %v1988 = vpack.c.bf16 %v1919, %v1918
    %vm1989 = vcmask 130048
    %v1991 = vsel %vm1989, %v1955, 0
    %v1994 = vsel %vm1989, %v1956, 0
    %1996 = vmatprep.subr.bf16.mxu0 0
    %1997 = vmatpush1.bf16.msra.mxu0 %v1988
    %1998 = vmatprep.subr.bf16.mxu0 0
    %1999 = vmatpush1.bf16.msra.mxu0 0
    %2000 = vmatprep.subr.bf16.mxu0 0
    %2001 = vmatpush1.bf16.msra.mxu0 0
    %2002 = vmatprep.subr.bf16.mxu0 0
    %2003 = vmatpush1.bf16.msra.mxu0 0
    %2004 = vmatprep.subr.bf16.mxu0 0
    %2005 = vmatpush1.bf16.msra.mxu0 0
    %2006 = vmatprep.subr.bf16.mxu0 0
    %2007 = vmatpush1.bf16.msra.mxu0 0
    %2008 = vmatprep.subr.bf16.mxu0 0
    %2009 = vmatpush1.bf16.msra.mxu0 0
    %2010 = vmatprep.subr.bf16.mxu0 0
    %2011 = vmatpush1.bf16.msra.mxu0 0
    %2012 = vmatprep.subr.bf16.mxu0 0
    %2013 = vmatpush1.bf16.msra.mxu0 0
    %2014 = vmatprep.subr.bf16.mxu0 0
    %2015 = vmatpush1.bf16.msra.mxu0 0
    %2016 = vmatprep.subr.bf16.mxu0 0
    %2017 = vmatpush1.bf16.msra.mxu0 0
    %2018 = vmatprep.subr.bf16.mxu0 0
    %2019 = vmatpush1.bf16.msra.mxu0 0
    %2020 = vmatprep.subr.bf16.mxu0 0
    %2021 = vmatpush1.bf16.msra.mxu0 0
    %2022 = vmatprep.subr.bf16.mxu0 0
    %2023 = vmatpush1.bf16.msra.mxu0 0
    %2024 = vmatprep.subr.bf16.mxu0 0
    %2025 = vmatpush1.bf16.msra.mxu0 0
    %2026 = vmatprep.subr.bf16.mxu0 0
    %2027 = vmatpush1.bf16.msra.mxu0 0
    %2028 = vmatprep.mubr.bf16.mxu0 0
    %2029 = vmatmul.mubr.bf16.gmra.mrb[0].mxu0 %v1991
    %v2030 = vpop.f32.mrb[0].mxu0
    %v2031 = vadd.f32 0.0, %v2030
    %v2032 = vpop.f32.mrb[0].mxu0
    %v2033 = vpop.f32.mrb[0].mxu0
    %v2034 = vadd.f32 0.0, %v2033
    %v2035 = vpop.f32.mrb[0].mxu0
    %2036 = vmatprep.mubr.bf16.mxu0 0
    %2037 = vmatmul.mubr.bf16.gmra.mrb[0].mxu0 %v1994
    %v2038 = vpop.f32.mrb[0].mxu0
    %v2039 = vadd.f32 0.0, %v2038
    %v2040 = vpop.f32.mrb[0].mxu0
    %v2041 = vpop.f32.mrb[0].mxu0
    %v2042 = vadd.f32 0.0, %v2041
    %v2043 = vpop.f32.mrb[0].mxu0
    %2044 = vdwg.mxu0
    %v2045 = vpack.c.bf16 %v2034, %v2031
    %v2046 = vpack.c.bf16 %v2042, %v2039
    %v2048 = vsel %vm1989, %v1977, 0
    %v2051 = vsel %vm1989, %v1978, 0
    %2053 = vmatprep.subr.bf16.mxu0 0
    %2054 = vmatpush1.bf16.msra.mxu0 %v1988
    %2055 = vmatprep.subr.bf16.mxu0 0
    %2056 = vmatpush1.bf16.msra.mxu0 0
    %2057 = vmatprep.subr.bf16.mxu0 0
    %2058 = vmatpush1.bf16.msra.mxu0 0
    %2059 = vmatprep.subr.bf16.mxu0 0
    %2060 = vmatpush1.bf16.msra.mxu0 0
    %2061 = vmatprep.subr.bf16.mxu0 0
    %2062 = vmatpush1.bf16.msra.mxu0 0
    %2063 = vmatprep.subr.bf16.mxu0 0
    %2064 = vmatpush1.bf16.msra.mxu0 0
    %2065 = vmatprep.subr.bf16.mxu0 0
    %2066 = vmatpush1.bf16.msra.mxu0 0
    %2067 = vmatprep.subr.bf16.mxu0 0
    %2068 = vmatpush1.bf16.msra.mxu0 0
    %2069 = vmatprep.subr.bf16.mxu0 0
    %2070 = vmatpush1.bf16.msra.mxu0 0
    %2071 = vmatprep.subr.bf16.mxu0 0
    %2072 = vmatpush1.bf16.msra.mxu0 0
    %2073 = vmatprep.subr.bf16.mxu0 0
    %2074 = vmatpush1.bf16.msra.mxu0 0
    %2075 = vmatprep.subr.bf16.mxu0 0
    %2076 = vmatpush1.bf16.msra.mxu0 0
    %2077 = vmatprep.subr.bf16.mxu0 0
    %2078 = vmatpush1.bf16.msra.mxu0 0
    %2079 = vmatprep.subr.bf16.mxu0 0
    %2080 = vmatpush1.bf16.msra.mxu0 0
    %2081 = vmatprep.subr.bf16.mxu0 0
    %2082 = vmatpush1.bf16.msra.mxu0 0
    %2083 = vmatprep.subr.bf16.mxu0 0
    %2084 = vmatpush1.bf16.msra.mxu0 0
    %2085 = vmatprep.mubr.bf16.mxu0 0
    %2086 = vmatmul.mubr.bf16.gmra.mrb[0].mxu0 %v2048
    %v2087 = vpop.f32.mrb[0].mxu0
    %v2088 = vadd.f32 0.0, %v2087
    %v2089 = vpop.f32.mrb[0].mxu0
    %v2090 = vpop.f32.mrb[0].mxu0
    %v2091 = vadd.f32 0.0, %v2090
    %v2092 = vpop.f32.mrb[0].mxu0
    %2093 = vmatprep.mubr.bf16.mxu0 0
    %2094 = vmatmul.mubr.bf16.gmra.mrb[0].mxu0 %v2051
    %v2095 = vpop.f32.mrb[0].mxu0
    %v2096 = vadd.f32 0.0, %v2095
    %v2097 = vpop.f32.mrb[0].mxu0
    %v2098 = vpop.f32.mrb[0].mxu0
    %v2099 = vadd.f32 0.0, %v2098
    %v2100 = vpop.f32.mrb[0].mxu0
    %2101 = vdwg.mxu0
    %v2102 = vpack.c.bf16 %v2091, %v2088
    %v2103 = vpack.c.bf16 %v2099, %v2096
    %v2104 = vld [vmem:[%s49] sm:$0xf]
    %v2105 = vld [vmem:[%s49 + $0x4] sm:$0xf]
    %v2106 = vld [vmem:[%s49 + $0x8] sm:$0xf]
    %v2107 = vld [vmem:[%s49 + $0xc] sm:$0xf]
    %v2108 = vld [vmem:[%s51] sm:$0xf]
    %v2109 = vld [vmem:[%s51 + $0x4] sm:$0xf]
    %v2110 = vld [vmem:[%s51 + $0x8] sm:$0xf]
    %v2111 = vld [vmem:[%s51 + $0xc] sm:$0xf]
    %v2116 = vunpack.c.l.b16 %v2108
    %v2117 = vunpack.c.l.b16 %v2109
    %v2118 = vunpack.c.l.b16 %v2110
    %v2119 = vunpack.c.l.b16 %v2111
    %v2120 = vpack.c.b16 %v2117, %v2116
    %v2121 = vpack.c.b16 %v2119, %v2118
    %v2125 = vsel %vm542, %v2102, 0
    %v2128 = vsel %vm542, %v2103, 0
    %2130 = vmatprep.subr.bf16.mxu0 0
    %2131 = vmatpush1.bf16.msra.mxu0 %v2120
    %2132 = vmatprep.subr.bf16.mxu0 0
    %2133 = vmatpush1.bf16.msra.mxu0 %v2121
    %2134 = vmatprep.subr.bf16.mxu0 0
    %2135 = vmatpush1.bf16.msra.mxu0 0
    %2136 = vmatprep.subr.bf16.mxu0 0
    %2137 = vmatpush1.bf16.msra.mxu0 0
    %2138 = vmatprep.subr.bf16.mxu0 0
    %2139 = vmatpush1.bf16.msra.mxu0 0
    %2140 = vmatprep.subr.bf16.mxu0 0
    %2141 = vmatpush1.bf16.msra.mxu0 0
    %2142 = vmatprep.subr.bf16.mxu0 0
    %2143 = vmatpush1.bf16.msra.mxu0 0
    %2144 = vmatprep.subr.bf16.mxu0 0
    %2145 = vmatpush1.bf16.msra.mxu0 0
    %2146 = vmatprep.subr.bf16.mxu0 0
    %2147 = vmatpush1.bf16.msra.mxu0 0
    %2148 = vmatprep.subr.bf16.mxu0 0
    %2149 = vmatpush1.bf16.msra.mxu0 0
    %2150 = vmatprep.subr.bf16.mxu0 0
    %2151 = vmatpush1.bf16.msra.mxu0 0
    %2152 = vmatprep.subr.bf16.mxu0 0
    %2153 = vmatpush1.bf16.msra.mxu0 0
    %2154 = vmatprep.subr.bf16.mxu0 0
    %2155 = vmatpush1.bf16.msra.mxu0 0
    %2156 = vmatprep.subr.bf16.mxu0 0
    %2157 = vmatpush1.bf16.msra.mxu0 0
    %2158 = vmatprep.subr.bf16.mxu0 0
    %2159 = vmatpush1.bf16.msra.mxu0 0
    %2160 = vmatprep.subr.bf16.mxu0 0
    %2161 = vmatpush1.bf16.msra.mxu0 0
    %2162 = vmatprep.mubr.bf16.mxu0 0
    %2163 = vmatmul.mubr.bf16.gmra.mrb[0].mxu0 %v2125
    %v2164 = vpop.f32.mrb[0].mxu0
    %v2165 = vadd.f32 0.0, %v2164
    %v2166 = vpop.f32.mrb[0].mxu0
    %v2167 = vpop.f32.mrb[0].mxu0
    %v2168 = vadd.f32 0.0, %v2167
    %v2169 = vpop.f32.mrb[0].mxu0
    %2170 = vmatprep.mubr.bf16.mxu0 0
    %2171 = vmatmul.mubr.bf16.gmra.mrb[0].mxu0 %v2128
    %v2172 = vpop.f32.mrb[0].mxu0
    %v2173 = vadd.f32 0.0, %v2172
    %v2174 = vpop.f32.mrb[0].mxu0
    %v2175 = vpop.f32.mrb[0].mxu0
    %v2176 = vadd.f32 0.0, %v2175
    %v2177 = vpop.f32.mrb[0].mxu0
    %2178 = vdwg.mxu0
    %v2183 = vunpack.c.l.b16 %v2104
    %v2184 = vunpack.c.l.b16 %v2105
    %v2185 = vunpack.c.l.b16 %v2106
    %v2186 = vunpack.c.l.b16 %v2107
    %v2187 = vpack.c.b16 %v2184, %v2183
    %v2188 = vpack.c.b16 %v2186, %v2185
    %v2192 = vsel %vm542, %v2045, 0
    %v2195 = vsel %vm542, %v2046, 0
    %2197 = vmatprep.subr.bf16.mxu0 0
    %2198 = vmatpush1.bf16.msra.mxu0 %v2187
    %2199 = vmatprep.subr.bf16.mxu0 0
    %2200 = vmatpush1.bf16.msra.mxu0 %v2188
    %2201 = vmatprep.subr.bf16.mxu0 0
    %2202 = vmatpush1.bf16.msra.mxu0 0
    %2203 = vmatprep.subr.bf16.mxu0 0
    %2204 = vmatpush1.bf16.msra.mxu0 0
    %2205 = vmatprep.subr.bf16.mxu0 0
    %2206 = vmatpush1.bf16.msra.mxu0 0
    %2207 = vmatprep.subr.bf16.mxu0 0
    %2208 = vmatpush1.bf16.msra.mxu0 0
    %2209 = vmatprep.subr.bf16.mxu0 0
    %2210 = vmatpush1.bf16.msra.mxu0 0
    %2211 = vmatprep.subr.bf16.mxu0 0
    %2212 = vmatpush1.bf16.msra.mxu0 0
    %2213 = vmatprep.subr.bf16.mxu0 0
    %2214 = vmatpush1.bf16.msra.mxu0 0
    %2215 = vmatprep.subr.bf16.mxu0 0
    %2216 = vmatpush1.bf16.msra.mxu0 0
    %2217 = vmatprep.subr.bf16.mxu0 0
    %2218 = vmatpush1.bf16.msra.mxu0 0
    %2219 = vmatprep.subr.bf16.mxu0 0
    %2220 = vmatpush1.bf16.msra.mxu0 0
    %2221 = vmatprep.subr.bf16.mxu0 0
    %2222 = vmatpush1.bf16.msra.mxu0 0
    %2223 = vmatprep.subr.bf16.mxu0 0
    %2224 = vmatpush1.bf16.msra.mxu0 0
    %2225 = vmatprep.subr.bf16.mxu0 0
    %2226 = vmatpush1.bf16.msra.mxu0 0
    %2227 = vmatprep.subr.bf16.mxu0 0
    %2228 = vmatpush1.bf16.msra.mxu0 0
    %2229 = vmatprep.mubr.bf16.mxu0 0
    %2230 = vmatmul.mubr.bf16.gmra.mrb[0].mxu0 %v2192
    %v2231 = vpop.f32.mrb[0].mxu0
    %v2232 = vadd.f32 %v2165, %v2231
    %v2233 = vpop.f32.mrb[0].mxu0
    %v2234 = vpop.f32.mrb[0].mxu0
    %v2235 = vadd.f32 %v2168, %v2234
    %v2236 = vpop.f32.mrb[0].mxu0
    %2237 = vmatprep.mubr.bf16.mxu0 0
    %2238 = vmatmul.mubr.bf16.gmra.mrb[0].mxu0 %v2195
    %v2239 = vpop.f32.mrb[0].mxu0
    %v2240 = vadd.f32 %v2173, %v2239
    %v2241 = vpop.f32.mrb[0].mxu0
    %v2242 = vpop.f32.mrb[0].mxu0
    %v2243 = vadd.f32 %v2176, %v2242
    %v2244 = vpop.f32.mrb[0].mxu0
    %2245 = vdwg.mxu0
    %v2246 = vld [vmem:[%s53] sm:$0xf]
    %v2247 = vld [vmem:[%s53 + $0x4] sm:$0x1]
    %v2250 = vunpack.c.l.b16 %v2246
    %v2251 = vunpack.c.l.b16 %v2247
    %v2252 = vpack.c.b16 %v2251, %v2250
    %vm2253 = vcmask 80896
    %v2255 = vsel %vm2253, %v1924, 0
    %v2258 = vsel %vm2253, %v1925, 0
    %vm2260 = vcmask 1044480
    %v2262 = vsel %vm2260, %v2252, 0
    %2264 = vmatprep.subr.bf16.mxu0 0
    %2265 = vmatpush1.bf16.msra.mxu0 %v2262
    %2266 = vmatprep.subr.bf16.mxu0 0
    %2267 = vmatpush1.bf16.msra.mxu0 0
    %2268 = vmatprep.subr.bf16.mxu0 0
    %2269 = vmatpush1.bf16.msra.mxu0 0
    %2270 = vmatprep.subr.bf16.mxu0 0
    %2271 = vmatpush1.bf16.msra.mxu0 0
    %2272 = vmatprep.subr.bf16.mxu0 0
    %2273 = vmatpush1.bf16.msra.mxu0 0
    %2274 = vmatprep.subr.bf16.mxu0 0
    %2275 = vmatpush1.bf16.msra.mxu0 0
    %2276 = vmatprep.subr.bf16.mxu0 0
    %2277 = vmatpush1.bf16.msra.mxu0 0
    %2278 = vmatprep.subr.bf16.mxu0 0
    %2279 = vmatpush1.bf16.msra.mxu0 0
    %2280 = vmatprep.subr.bf16.mxu0 0
    %2281 = vmatpush1.bf16.msra.mxu0 0
    %2282 = vmatprep.subr.bf16.mxu0 0
    %2283 = vmatpush1.bf16.msra.mxu0 0
    %2284 = vmatprep.subr.bf16.mxu0 0
    %2285 = vmatpush1.bf16.msra.mxu0 0
    %2286 = vmatprep.subr.bf16.mxu0 0
    %2287 = vmatpush1.bf16.msra.mxu0 0
    %2288 = vmatprep.subr.bf16.mxu0 0
    %2289 = vmatpush1.bf16.msra.mxu0 0
    %2290 = vmatprep.subr.bf16.mxu0 0
    %2291 = vmatpush1.bf16.msra.mxu0 0
    %2292 = vmatprep.subr.bf16.mxu0 0
    %2293 = vmatpush1.bf16.msra.mxu0 0
    %2294 = vmatprep.subr.bf16.mxu0 0
    %2295 = vmatpush1.bf16.msra.mxu0 0
    %2296 = vmatprep.mubr.bf16.mxu0 0
    %2297 = vmatmul.mubr.bf16.gmra.mrb[0].mxu0 %v2255
    %v2298 = vpop.f32.mrb[0].mxu0
    %v2299 = vadd.f32 0.0, %v2298
    %v2300 = vpop.f32.mrb[0].mxu0
    %v2301 = vpop.f32.mrb[0].mxu0
    %v2302 = vadd.f32 0.0, %v2301
    %v2303 = vpop.f32.mrb[0].mxu0
    %2304 = vmatprep.mubr.bf16.mxu0 0
    %2305 = vmatmul.mubr.bf16.gmra.mrb[0].mxu0 %v2258
    %v2306 = vpop.f32.mrb[0].mxu0
    %v2307 = vadd.f32 0.0, %v2306
    %v2308 = vpop.f32.mrb[0].mxu0
    %v2309 = vpop.f32.mrb[0].mxu0
    %v2310 = vadd.f32 0.0, %v2309
    %v2311 = vpop.f32.mrb[0].mxu0
    %2312 = vdwg.mxu0
    %v2313 = vadd.f32 %v2232, %v2299
    %v2314 = vadd.f32 %v2235, %v2302
    %v2315 = vadd.f32 %v2240, %v2307
    %v2316 = vadd.f32 %v2243, %v2310
    %v2317 = vld [vmem:[%s55] sm:$0x1]
    %v2319 = vlaneseq
    %v2320 = vshrl.u32 %v2319, 7
    %v2321 = vsub.s32 0, %v2320
    %v2322 = vrot.slane %v2317, %v2321
    %v2324 = vadd.f32 %v2313, %v2322
    %v2325 = vadd.f32 %v2314, %v2322
    %v2326 = vadd.f32 %v2315, %v2322
    %v2327 = vadd.f32 %v2316, %v2322
    %v2328 = vld [vmem:[%s57] sm:$0xf]
    %v2329 = vld [vmem:[%s57 + $0x4] sm:$0xf]
    %v2330 = vld [vmem:[%s57 + $0x8] sm:$0xf]
    %v2331 = vld [vmem:[%s57 + $0xc] sm:$0xf]
    %v2332 = vld [vmem:[%s59] sm:$0xf]
    %v2333 = vld [vmem:[%s59 + $0x4] sm:$0xf]
    %v2334 = vld [vmem:[%s59 + $0x8] sm:$0xf]
    %v2335 = vld [vmem:[%s59 + $0xc] sm:$0xf]
    %v2340 = vunpack.c.l.b16 %v2332
    %v2341 = vunpack.c.l.b16 %v2333
    %v2342 = vunpack.c.l.b16 %v2334
    %v2343 = vunpack.c.l.b16 %v2335
    %v2344 = vpack.c.b16 %v2341, %v2340
    %v2345 = vpack.c.b16 %v2343, %v2342
    %2348 = vmatprep.subr.bf16.mxu0 0
    %2349 = vmatpush1.bf16.msra.mxu0 %v2344
    %2350 = vmatprep.subr.bf16.mxu0 0
    %2351 = vmatpush1.bf16.msra.mxu0 %v2345
    %2352 = vmatprep.subr.bf16.mxu0 0
    %2353 = vmatpush1.bf16.msra.mxu0 0
    %2354 = vmatprep.subr.bf16.mxu0 0
    %2355 = vmatpush1.bf16.msra.mxu0 0
    %2356 = vmatprep.subr.bf16.mxu0 0
    %2357 = vmatpush1.bf16.msra.mxu0 0
    %2358 = vmatprep.subr.bf16.mxu0 0
    %2359 = vmatpush1.bf16.msra.mxu0 0
    %2360 = vmatprep.subr.bf16.mxu0 0
    %2361 = vmatpush1.bf16.msra.mxu0 0
    %2362 = vmatprep.subr.bf16.mxu0 0
    %2363 = vmatpush1.bf16.msra.mxu0 0
    %2364 = vmatprep.subr.bf16.mxu0 0
    %2365 = vmatpush1.bf16.msra.mxu0 0
    %2366 = vmatprep.subr.bf16.mxu0 0
    %2367 = vmatpush1.bf16.msra.mxu0 0
    %2368 = vmatprep.subr.bf16.mxu0 0
    %2369 = vmatpush1.bf16.msra.mxu0 0
    %2370 = vmatprep.subr.bf16.mxu0 0
    %2371 = vmatpush1.bf16.msra.mxu0 0
    %2372 = vmatprep.subr.bf16.mxu0 0
    %2373 = vmatpush1.bf16.msra.mxu0 0
    %2374 = vmatprep.subr.bf16.mxu0 0
    %2375 = vmatpush1.bf16.msra.mxu0 0
    %2376 = vmatprep.subr.bf16.mxu0 0
    %2377 = vmatpush1.bf16.msra.mxu0 0
    %2378 = vmatprep.subr.bf16.mxu0 0
    %2379 = vmatpush1.bf16.msra.mxu0 0
    %2380 = vmatprep.mubr.bf16.mxu0 0
    %2381 = vmatmul.mubr.bf16.gmra.mrb[0].mxu0 %v2125
    %v2382 = vpop.f32.mrb[0].mxu0
    %v2383 = vadd.f32 0.0, %v2382
    %v2384 = vpop.f32.mrb[0].mxu0
    %v2385 = vpop.f32.mrb[0].mxu0
    %v2386 = vadd.f32 0.0, %v2385
    %v2387 = vpop.f32.mrb[0].mxu0
    %2388 = vmatprep.mubr.bf16.mxu0 0
    %2389 = vmatmul.mubr.bf16.gmra.mrb[0].mxu0 %v2128
    %v2390 = vpop.f32.mrb[0].mxu0
    %v2391 = vadd.f32 0.0, %v2390
    %v2392 = vpop.f32.mrb[0].mxu0
    %v2393 = vpop.f32.mrb[0].mxu0
    %v2394 = vadd.f32 0.0, %v2393
    %v2395 = vpop.f32.mrb[0].mxu0
    %2396 = vdwg.mxu0
    %v2401 = vunpack.c.l.b16 %v2328
    %v2402 = vunpack.c.l.b16 %v2329
    %v2403 = vunpack.c.l.b16 %v2330
    %v2404 = vunpack.c.l.b16 %v2331
    %v2405 = vpack.c.b16 %v2402, %v2401
    %v2406 = vpack.c.b16 %v2404, %v2403
    %2409 = vmatprep.subr.bf16.mxu0 0
    %2410 = vmatpush1.bf16.msra.mxu0 %v2405
    %2411 = vmatprep.subr.bf16.mxu0 0
    %2412 = vmatpush1.bf16.msra.mxu0 %v2406
    %2413 = vmatprep.subr.bf16.mxu0 0
    %2414 = vmatpush1.bf16.msra.mxu0 0
    %2415 = vmatprep.subr.bf16.mxu0 0
    %2416 = vmatpush1.bf16.msra.mxu0 0
    %2417 = vmatprep.subr.bf16.mxu0 0
    %2418 = vmatpush1.bf16.msra.mxu0 0
    %2419 = vmatprep.subr.bf16.mxu0 0
    %2420 = vmatpush1.bf16.msra.mxu0 0
    %2421 = vmatprep.subr.bf16.mxu0 0
    %2422 = vmatpush1.bf16.msra.mxu0 0
    %2423 = vmatprep.subr.bf16.mxu0 0
    %2424 = vmatpush1.bf16.msra.mxu0 0
    %2425 = vmatprep.subr.bf16.mxu0 0
    %2426 = vmatpush1.bf16.msra.mxu0 0
    %2427 = vmatprep.subr.bf16.mxu0 0
    %2428 = vmatpush1.bf16.msra.mxu0 0
    %2429 = vmatprep.subr.bf16.mxu0 0
    %2430 = vmatpush1.bf16.msra.mxu0 0
    %2431 = vmatprep.subr.bf16.mxu0 0
    %2432 = vmatpush1.bf16.msra.mxu0 0
    %2433 = vmatprep.subr.bf16.mxu0 0
    %2434 = vmatpush1.bf16.msra.mxu0 0
    %2435 = vmatprep.subr.bf16.mxu0 0
    %2436 = vmatpush1.bf16.msra.mxu0 0
    %2437 = vmatprep.subr.bf16.mxu0 0
    %2438 = vmatpush1.bf16.msra.mxu0 0
    %2439 = vmatprep.subr.bf16.mxu0 0
    %2440 = vmatpush1.bf16.msra.mxu0 0
    %2441 = vmatprep.mubr.bf16.mxu0 0
    %2442 = vmatmul.mubr.bf16.gmra.mrb[0].mxu0 %v2192
    %v2443 = vpop.f32.mrb[0].mxu0
    %v2444 = vadd.f32 %v2383, %v2443
    %v2445 = vpop.f32.mrb[0].mxu0
    %v2446 = vpop.f32.mrb[0].mxu0
    %v2447 = vadd.f32 %v2386, %v2446
    %v2448 = vpop.f32.mrb[0].mxu0
    %2449 = vmatprep.mubr.bf16.mxu0 0
    %2450 = vmatmul.mubr.bf16.gmra.mrb[0].mxu0 %v2195
    %v2451 = vpop.f32.mrb[0].mxu0
    %v2452 = vadd.f32 %v2391, %v2451
    %v2453 = vpop.f32.mrb[0].mxu0
    %v2454 = vpop.f32.mrb[0].mxu0
    %v2455 = vadd.f32 %v2394, %v2454
    %v2456 = vpop.f32.mrb[0].mxu0
    %2457 = vdwg.mxu0
    %v2458 = vld [vmem:[%s61] sm:$0xf]
    %v2459 = vld [vmem:[%s61 + $0x4] sm:$0x1]
    %v2462 = vunpack.c.l.b16 %v2458
    %v2463 = vunpack.c.l.b16 %v2459
    %v2464 = vpack.c.b16 %v2463, %v2462
    %v2466 = vsel %vm2260, %v2464, 0
    %2468 = vmatprep.subr.bf16.mxu0 0
    %2469 = vmatpush1.bf16.msra.mxu0 %v2466
    %2470 = vmatprep.subr.bf16.mxu0 0
    %2471 = vmatpush1.bf16.msra.mxu0 0
    %2472 = vmatprep.subr.bf16.mxu0 0
    %2473 = vmatpush1.bf16.msra.mxu0 0
    %2474 = vmatprep.subr.bf16.mxu0 0
    %2475 = vmatpush1.bf16.msra.mxu0 0
    %2476 = vmatprep.subr.bf16.mxu0 0
    %2477 = vmatpush1.bf16.msra.mxu0 0
    %2478 = vmatprep.subr.bf16.mxu0 0
    %2479 = vmatpush1.bf16.msra.mxu0 0
    %2480 = vmatprep.subr.bf16.mxu0 0
    %2481 = vmatpush1.bf16.msra.mxu0 0
    %2482 = vmatprep.subr.bf16.mxu0 0
    %2483 = vmatpush1.bf16.msra.mxu0 0
    %2484 = vmatprep.subr.bf16.mxu0 0
    %2485 = vmatpush1.bf16.msra.mxu0 0
    %2486 = vmatprep.subr.bf16.mxu0 0
    %2487 = vmatpush1.bf16.msra.mxu0 0
    %2488 = vmatprep.subr.bf16.mxu0 0
    %2489 = vmatpush1.bf16.msra.mxu0 0
    %2490 = vmatprep.subr.bf16.mxu0 0
    %2491 = vmatpush1.bf16.msra.mxu0 0
    %2492 = vmatprep.subr.bf16.mxu0 0
    %2493 = vmatpush1.bf16.msra.mxu0 0
    %2494 = vmatprep.subr.bf16.mxu0 0
    %2495 = vmatpush1.bf16.msra.mxu0 0
    %2496 = vmatprep.subr.bf16.mxu0 0
    %2497 = vmatpush1.bf16.msra.mxu0 0
    %2498 = vmatprep.subr.bf16.mxu0 0
    %2499 = vmatpush1.bf16.msra.mxu0 0
    %2500 = vmatprep.mubr.bf16.mxu0 0
    %2501 = vmatmul.mubr.bf16.gmra.mrb[0].mxu0 %v2255
    %v2502 = vpop.f32.mrb[0].mxu0
    %v2503 = vadd.f32 0.0, %v2502
    %v2504 = vpop.f32.mrb[0].mxu0
    %v2505 = vpop.f32.mrb[0].mxu0
    %v2506 = vadd.f32 0.0, %v2505
    %v2507 = vpop.f32.mrb[0].mxu0
    %2508 = vmatprep.mubr.bf16.mxu0 0
    %2509 = vmatmul.mubr.bf16.gmra.mrb[0].mxu0 %v2258
    %v2510 = vpop.f32.mrb[0].mxu0
    %v2511 = vadd.f32 0.0, %v2510
    %v2512 = vpop.f32.mrb[0].mxu0
    %v2513 = vpop.f32.mrb[0].mxu0
    %v2514 = vadd.f32 0.0, %v2513
    %v2515 = vpop.f32.mrb[0].mxu0
    %2516 = vdwg.mxu0
    %v2517 = vadd.f32 %v2444, %v2503
    %v2518 = vadd.f32 %v2447, %v2506
    %v2519 = vadd.f32 %v2452, %v2511
    %v2520 = vadd.f32 %v2455, %v2514
    %v2521 = vld [vmem:[%s63] sm:$0x1]
    %v2523 = vlaneseq
    %v2524 = vshrl.u32 %v2523, 7
    %v2525 = vsub.s32 0, %v2524
    %v2526 = vrot.slane %v2521, %v2525
    %v2528 = vadd.f32 %v2517, %v2526
    %v2529 = vadd.f32 %v2518, %v2526
    %v2530 = vadd.f32 %v2519, %v2526
    %v2531 = vadd.f32 %v2520, %v2526
    %v2532 = vxor.u32 %v2324, 2147483648
    %v2533 = vxor.u32 %v2325, 2147483648
    %v2534 = vxor.u32 %v2326, 2147483648
    %v2535 = vxor.u32 %v2327, 2147483648
    %v2536 = vmul.f32 %v2532, 1.442695
    %v2537 = vpow.pop %v2536
    %v2538 = vmul.f32 %v2533, 1.442695
    %v2539 = vpow.pop %v2538
    %v2540 = vmul.f32 %v2534, 1.442695
    %v2541 = vpow.pop %v2540
    %v2542 = vmul.f32 %v2535, 1.442695
    %v2543 = vpow.pop %v2542
    %v2544 = vadd.f32 %v2537, 1.0
    %v2545 = vadd.f32 %v2539, 1.0
    %v2546 = vadd.f32 %v2541, 1.0
    %v2547 = vadd.f32 %v2543, 1.0
    %v2548 = vrcp.pop %v2544
    %v2549 = vmul.f32 1.0, %v2548
    %v2550 = vrcp.pop %v2545
    %v2551 = vmul.f32 1.0, %v2550
    %v2552 = vrcp.pop %v2546
    %v2553 = vmul.f32 1.0, %v2552
    %v2554 = vrcp.pop %v2547
    %v2555 = vmul.f32 1.0, %v2554
    %vm2556 = vcmp.gt.f32.partialorder %v2528, 20.0
    %vm2557 = vcmp.gt.f32.partialorder %v2529, 20.0
    %vm2558 = vcmp.gt.f32.partialorder %v2530, 20.0
    %vm2559 = vcmp.gt.f32.partialorder %v2531, 20.0
    %v2560 = vmin.f32 %v2528, 20.0
    %v2561 = vmin.f32 %v2529, 20.0
    %v2562 = vmin.f32 %v2530, 20.0
    %v2563 = vmin.f32 %v2531, 20.0
    %v2564 = vmul.f32 %v2560, 1.442695
    %v2565 = vpow.pop %v2564
    %v2566 = vmul.f32 %v2561, 1.442695
    %v2567 = vpow.pop %v2566
    %v2568 = vmul.f32 %v2562, 1.442695
    %v2569 = vpow.pop %v2568
    %v2570 = vmul.f32 %v2563, 1.442695
    %v2571 = vpow.pop %v2570
    %v2572 = vadd.f32 %v2565, 1.0
    %v2573 = vlog2.pop %v2572
    %v2574 = vmul.f32 %v2573, 0.6931472
    %v2575 = vmul.f32 -0.5, %v2565
    %v2576 = vadd.f32 %v2575, 1.0
    %v2577 = vmul.f32 %v2576, %v2565
    %v2578 = vand.u32 2147483647, %v2565
    %vm2579 = vcmp.lt.f32.partialorder %v2578, 0.0004427343
    %v2580 = vsel %vm2579, %v2577, %v2574
    %v2581 = vadd.f32 %v2567, 1.0
    %v2582 = vlog2.pop %v2581
    %v2583 = vmul.f32 %v2582, 0.6931472
    %v2584 = vmul.f32 -0.5, %v2567
    %v2585 = vadd.f32 %v2584, 1.0
    %v2586 = vmul.f32 %v2585, %v2567
    %v2587 = vand.u32 2147483647, %v2567
    %vm2588 = vcmp.lt.f32.partialorder %v2587, 0.0004427343
    %v2589 = vsel %vm2588, %v2586, %v2583
    %v2590 = vadd.f32 %v2569, 1.0
    %v2591 = vlog2.pop %v2590
    %v2592 = vmul.f32 %v2591, 0.6931472
    %v2593 = vmul.f32 -0.5, %v2569
    %v2594 = vadd.f32 %v2593, 1.0
    %v2595 = vmul.f32 %v2594, %v2569
    %v2596 = vand.u32 2147483647, %v2569
    %vm2597 = vcmp.lt.f32.partialorder %v2596, 0.0004427343
    %v2598 = vsel %vm2597, %v2595, %v2592
    %v2599 = vadd.f32 %v2571, 1.0
    %v2600 = vlog2.pop %v2599
    %v2601 = vmul.f32 %v2600, 0.6931472
    %v2602 = vmul.f32 -0.5, %v2571
    %v2603 = vadd.f32 %v2602, 1.0
    %v2604 = vmul.f32 %v2603, %v2571
    %v2605 = vand.u32 2147483647, %v2571
    %vm2606 = vcmp.lt.f32.partialorder %v2605, 0.0004427343
    %v2607 = vsel %vm2606, %v2604, %v2601
    %v2608 = vsel %vm2556, %v2528, %v2580
    %v2609 = vsel %vm2557, %v2529, %v2589
    %v2610 = vsel %vm2558, %v2530, %v2598
    %v2611 = vsel %vm2559, %v2531, %v2607
    %v2612 = vmul.f32 %v2549, %v2608
    %v2613 = vmul.f32 %v2551, %v2609
    %v2614 = vmul.f32 %v2553, %v2610
    %v2615 = vmul.f32 %v2555, %v2611
    %v2616 = vpack.c.bf16 %v2613, %v2612
    %v2617 = vpack.c.bf16 %v2615, %v2614
    %v2619 = vsel %vm542, %v1987, 0
    %2621 = vmatprep.subr.bf16.mxu0 0
    %2622 = vmatpush1.bf16.msra.mxu0 %v2616
    %2623 = vmatprep.subr.bf16.mxu0 0
    %2624 = vmatpush1.bf16.msra.mxu0 %v2617
    %2625 = vmatprep.subr.bf16.mxu0 0
    %2626 = vmatpush1.bf16.msra.mxu0 0
    %2627 = vmatprep.subr.bf16.mxu0 0
    %2628 = vmatpush1.bf16.msra.mxu0 0
    %2629 = vmatprep.subr.bf16.mxu0 0
    %2630 = vmatpush1.bf16.msra.mxu0 0
    %2631 = vmatprep.subr.bf16.mxu0 0
    %2632 = vmatpush1.bf16.msra.mxu0 0
    %2633 = vmatprep.subr.bf16.mxu0 0
    %2634 = vmatpush1.bf16.msra.mxu0 0
    %2635 = vmatprep.subr.bf16.mxu0 0
    %2636 = vmatpush1.bf16.msra.mxu0 0
    %2637 = vmatprep.subr.bf16.mxu0 0
    %2638 = vmatpush1.bf16.msra.mxu0 0
    %2639 = vmatprep.subr.bf16.mxu0 0
    %2640 = vmatpush1.bf16.msra.mxu0 0
    %2641 = vmatprep.subr.bf16.mxu0 0
    %2642 = vmatpush1.bf16.msra.mxu0 0
    %2643 = vmatprep.subr.bf16.mxu0 0
    %2644 = vmatpush1.bf16.msra.mxu0 0
    %2645 = vmatprep.subr.bf16.mxu0 0
    %2646 = vmatpush1.bf16.msra.mxu0 0
    %2647 = vmatprep.subr.bf16.mxu0 0
    %2648 = vmatpush1.bf16.msra.mxu0 0
    %2649 = vmatprep.subr.bf16.mxu0 0
    %2650 = vmatpush1.bf16.msra.mxu0 0
    %2651 = vmatprep.subr.bf16.mxu0 0
    %2652 = vmatpush1.bf16.msra.mxu0 0
    %2653 = vmatprep.mubr.bf16.mxu0 0
    %2654 = vmatmul.mubr.bf16.gmra.mrb[0].mxu0 %v2619
    %v2655 = vpop.f32.mrb[0].mxu0
    %v2656 = vadd.f32 0.0, %v2655
    %v2657 = vpop.f32.mrb[0].mxu0
    %v2658 = vpop.f32.mrb[0].mxu0
    %v2659 = vadd.f32 0.0, %v2658
    %v2660 = vpop.f32.mrb[0].mxu0
    %2661 = vdwg.mxu0
    %v2662 = vld [vmem:[%s65] sm:$0x1]
    %v2664 = vlaneseq
    %v2665 = vshrl.u32 %v2664, 7
    %v2666 = vsub.s32 0, %v2665
    %v2667 = vrot.slane %v2662, %v2666
    %v2669 = vmul.f32 %v2656, %v2667
    %v2670 = vmul.f32 %v2659, %v2667
    %v2671 = vld [vmem:[%s67] sm:$0x1]
    %v2673 = vlaneseq
    %v2674 = vshrl.u32 %v2673, 7
    %v2675 = vsub.s32 0, %v2674
    %v2676 = vrot.slane %v2671, %v2675
    %v2678 = vadd.f32 %v2669, %v2676
    %v2679 = vadd.f32 %v2670, %v2676
    %v2680 = vadd.f32 %v2678, %v1918
    %v2681 = vadd.f32 %v2679, %v1919
    %vm2682 = vcmp.gt.f32.partialorder %v2680, 20.0
    %vm2683 = vcmp.gt.f32.partialorder %v2681, 20.0
    %v2684 = vmin.f32 %v2680, 20.0
    %v2685 = vmin.f32 %v2681, 20.0
    %v2686 = vmul.f32 %v2684, 1.442695
    %v2687 = vpow.pop %v2686
    %v2688 = vmul.f32 %v2685, 1.442695
    %v2689 = vpow.pop %v2688
    %v2690 = vadd.f32 %v2687, 1.0
    %v2691 = vlog2.pop %v2690
    %v2692 = vmul.f32 %v2691, 0.6931472
    %v2693 = vmul.f32 -0.5, %v2687
    %v2694 = vadd.f32 %v2693, 1.0
    %v2695 = vmul.f32 %v2694, %v2687
    %v2696 = vand.u32 2147483647, %v2687
    %vm2697 = vcmp.lt.f32.partialorder %v2696, 0.0004427343
    %v2698 = vsel %vm2697, %v2695, %v2692
    %v2699 = vadd.f32 %v2689, 1.0
    %v2700 = vlog2.pop %v2699
    %v2701 = vmul.f32 %v2700, 0.6931472
    %v2702 = vmul.f32 -0.5, %v2689
    %v2703 = vadd.f32 %v2702, 1.0
    %v2704 = vmul.f32 %v2703, %v2689
    %v2705 = vand.u32 2147483647, %v2689
    %vm2706 = vcmp.lt.f32.partialorder %v2705, 0.0004427343
    %v2707 = vsel %vm2706, %v2704, %v2701
    %v2708 = vsel %vm2682, %v2680, %v2698
    %v2709 = vsel %vm2683, %v2681, %v2707
    %v2710 = vpack.c.bf16 %v2709, %v2708
    %2711 = vmatprep.subr.bf16.mxu0 0
    %2712 = vmatpush1.bf16.msra.mxu0 %v2710
    %2713 = vmatprep.subr.bf16.mxu0 0
    %2714 = vmatpush1.bf16.msra.mxu0 0
    %2715 = vmatprep.subr.bf16.mxu0 0
    %2716 = vmatpush1.bf16.msra.mxu0 0
    %2717 = vmatprep.subr.bf16.mxu0 0
    %2718 = vmatpush1.bf16.msra.mxu0 0
    %2719 = vmatprep.subr.bf16.mxu0 0
    %2720 = vmatpush1.bf16.msra.mxu0 0
    %2721 = vmatprep.subr.bf16.mxu0 0
    %2722 = vmatpush1.bf16.msra.mxu0 0
    %2723 = vmatprep.subr.bf16.mxu0 0
    %2724 = vmatpush1.bf16.msra.mxu0 0
    %2725 = vmatprep.subr.bf16.mxu0 0
    %2726 = vmatpush1.bf16.msra.mxu0 0
    %2727 = vmatprep.subr.bf16.mxu0 0
    %2728 = vmatpush1.bf16.msra.mxu0 0
    %2729 = vmatprep.subr.bf16.mxu0 0
    %2730 = vmatpush1.bf16.msra.mxu0 0
    %2731 = vmatprep.subr.bf16.mxu0 0
    %2732 = vmatpush1.bf16.msra.mxu0 0
    %2733 = vmatprep.subr.bf16.mxu0 0
    %2734 = vmatpush1.bf16.msra.mxu0 0
    %2735 = vmatprep.subr.bf16.mxu0 0
    %2736 = vmatpush1.bf16.msra.mxu0 0
    %2737 = vmatprep.subr.bf16.mxu0 0
    %2738 = vmatpush1.bf16.msra.mxu0 0
    %2739 = vmatprep.subr.bf16.mxu0 0
    %2740 = vmatpush1.bf16.msra.mxu0 0
    %2741 = vmatprep.subr.bf16.mxu0 0
    %2742 = vmatpush1.bf16.msra.mxu0 0
    %2743 = vmatprep.mubr.bf16.mxu0 0
    %2744 = vmatmul.mubr.bf16.gmra.mrb[0].mxu0 %v1991
    %v2745 = vpop.f32.mrb[0].mxu0
    %v2746 = vadd.f32 0.0, %v2745
    %v2747 = vpop.f32.mrb[0].mxu0
    %v2748 = vpop.f32.mrb[0].mxu0
    %v2749 = vadd.f32 0.0, %v2748
    %v2750 = vpop.f32.mrb[0].mxu0
    %2751 = vmatprep.mubr.bf16.mxu0 0
    %2752 = vmatmul.mubr.bf16.gmra.mrb[0].mxu0 %v1994
    %v2753 = vpop.f32.mrb[0].mxu0
    %v2754 = vadd.f32 0.0, %v2753
    %v2755 = vpop.f32.mrb[0].mxu0
    %v2756 = vpop.f32.mrb[0].mxu0
    %v2757 = vadd.f32 0.0, %v2756
    %v2758 = vpop.f32.mrb[0].mxu0
    %2759 = vdwg.mxu0
    %v2760 = vpack.c.bf16 %v2749, %v2746
    %v2761 = vpack.c.bf16 %v2757, %v2754
    %2762 = vmatprep.subr.bf16.mxu0 0
    %2763 = vmatpush1.bf16.msra.mxu0 %v2710
    %2764 = vmatprep.subr.bf16.mxu0 0
    %2765 = vmatpush1.bf16.msra.mxu0 0
    %2766 = vmatprep.subr.bf16.mxu0 0
    %2767 = vmatpush1.bf16.msra.mxu0 0
    %2768 = vmatprep.subr.bf16.mxu0 0
    %2769 = vmatpush1.bf16.msra.mxu0 0
    %2770 = vmatprep.subr.bf16.mxu0 0
    %2771 = vmatpush1.bf16.msra.mxu0 0
    %2772 = vmatprep.subr.bf16.mxu0 0
    %2773 = vmatpush1.bf16.msra.mxu0 0
    %2774 = vmatprep.subr.bf16.mxu0 0
    %2775 = vmatpush1.bf16.msra.mxu0 0
    %2776 = vmatprep.subr.bf16.mxu0 0
    %2777 = vmatpush1.bf16.msra.mxu0 0
    %2778 = vmatprep.subr.bf16.mxu0 0
    %2779 = vmatpush1.bf16.msra.mxu0 0
    %2780 = vmatprep.subr.bf16.mxu0 0
    %2781 = vmatpush1.bf16.msra.mxu0 0
    %2782 = vmatprep.subr.bf16.mxu0 0
    %2783 = vmatpush1.bf16.msra.mxu0 0
    %2784 = vmatprep.subr.bf16.mxu0 0
    %2785 = vmatpush1.bf16.msra.mxu0 0
    %2786 = vmatprep.subr.bf16.mxu0 0
    %2787 = vmatpush1.bf16.msra.mxu0 0
    %2788 = vmatprep.subr.bf16.mxu0 0
    %2789 = vmatpush1.bf16.msra.mxu0 0
    %2790 = vmatprep.subr.bf16.mxu0 0
    %2791 = vmatpush1.bf16.msra.mxu0 0
    %2792 = vmatprep.subr.bf16.mxu0 0
    %2793 = vmatpush1.bf16.msra.mxu0 0
    %2794 = vmatprep.mubr.bf16.mxu0 0
    %2795 = vmatmul.mubr.bf16.gmra.mrb[0].mxu0 %v2048
    %v2796 = vpop.f32.mrb[0].mxu0
    %v2797 = vadd.f32 0.0, %v2796
    %v2798 = vpop.f32.mrb[0].mxu0
    %v2799 = vpop.f32.mrb[0].mxu0
    %v2800 = vadd.f32 0.0, %v2799
    %v2801 = vpop.f32.mrb[0].mxu0
    %2802 = vmatprep.mubr.bf16.mxu0 0
    %2803 = vmatmul.mubr.bf16.gmra.mrb[0].mxu0 %v2051
    %v2804 = vpop.f32.mrb[0].mxu0
    %v2805 = vadd.f32 0.0, %v2804
    %v2806 = vpop.f32.mrb[0].mxu0
    %v2807 = vpop.f32.mrb[0].mxu0
    %v2808 = vadd.f32 0.0, %v2807
    %v2809 = vpop.f32.mrb[0].mxu0
    %2810 = vdwg.mxu0
    %v2811 = vpack.c.bf16 %v2800, %v2797
    %v2812 = vpack.c.bf16 %v2808, %v2805
    %s2813 = scalar_lea.vmem %s49, 16
    %v2814 = vld [vmem:[%s2813] sm:$0xf]
    %v2815 = vld [vmem:[%s2813 + $0x4] sm:$0xf]
    %v2816 = vld [vmem:[%s2813 + $0x8] sm:$0xf]
    %v2817 = vld [vmem:[%s2813 + $0xc] sm:$0xf]
    %s2818 = scalar_lea.vmem %s51, 16
    %v2819 = vld [vmem:[%s2818] sm:$0xf]
    %v2820 = vld [vmem:[%s2818 + $0x4] sm:$0xf]
    %v2821 = vld [vmem:[%s2818 + $0x8] sm:$0xf]
    %v2822 = vld [vmem:[%s2818 + $0xc] sm:$0xf]
    %v2827 = vunpack.c.l.b16 %v2819
    %v2828 = vunpack.c.l.b16 %v2820
    %v2829 = vunpack.c.l.b16 %v2821
    %v2830 = vunpack.c.l.b16 %v2822
    %v2831 = vpack.c.b16 %v2828, %v2827
    %v2832 = vpack.c.b16 %v2830, %v2829
    %v2836 = vsel %vm542, %v2811, 0
    %v2839 = vsel %vm542, %v2812, 0
    %2841 = vmatprep.subr.bf16.mxu0 0
    %2842 = vmatpush1.bf16.msra.mxu0 %v2831
    %2843 = vmatprep.subr.bf16.mxu0 0
    %2844 = vmatpush1.bf16.msra.mxu0 %v2832
    %2845 = vmatprep.subr.bf16.mxu0 0
    %2846 = vmatpush1.bf16.msra.mxu0 0
    %2847 = vmatprep.subr.bf16.mxu0 0
    %2848 = vmatpush1.bf16.msra.mxu0 0
    %2849 = vmatprep.subr.bf16.mxu0 0
    %2850 = vmatpush1.bf16.msra.mxu0 0
    %2851 = vmatprep.subr.bf16.mxu0 0
    %2852 = vmatpush1.bf16.msra.mxu0 0
    %2853 = vmatprep.subr.bf16.mxu0 0
    %2854 = vmatpush1.bf16.msra.mxu0 0
    %2855 = vmatprep.subr.bf16.mxu0 0
    %2856 = vmatpush1.bf16.msra.mxu0 0
    %2857 = vmatprep.subr.bf16.mxu0 0
    %2858 = vmatpush1.bf16.msra.mxu0 0
    %2859 = vmatprep.subr.bf16.mxu0 0
    %2860 = vmatpush1.bf16.msra.mxu0 0
    %2861 = vmatprep.subr.bf16.mxu0 0
    %2862 = vmatpush1.bf16.msra.mxu0 0
    %2863 = vmatprep.subr.bf16.mxu0 0
    %2864 = vmatpush1.bf16.msra.mxu0 0
    %2865 = vmatprep.subr.bf16.mxu0 0
    %2866 = vmatpush1.bf16.msra.mxu0 0
    %2867 = vmatprep.subr.bf16.mxu0 0
    %2868 = vmatpush1.bf16.msra.mxu0 0
    %2869 = vmatprep.subr.bf16.mxu0 0
    %2870 = vmatpush1.bf16.msra.mxu0 0
    %2871 = vmatprep.subr.bf16.mxu0 0
    %2872 = vmatpush1.bf16.msra.mxu0 0
    %2873 = vmatprep.mubr.bf16.mxu0 0
    %2874 = vmatmul.mubr.bf16.gmra.mrb[0].mxu0 %v2836
    %v2875 = vpop.f32.mrb[0].mxu0
    %v2876 = vadd.f32 0.0, %v2875
    %v2877 = vpop.f32.mrb[0].mxu0
    %v2878 = vpop.f32.mrb[0].mxu0
    %v2879 = vadd.f32 0.0, %v2878
    %v2880 = vpop.f32.mrb[0].mxu0
    %2881 = vmatprep.mubr.bf16.mxu0 0
    %2882 = vmatmul.mubr.bf16.gmra.mrb[0].mxu0 %v2839
    %v2883 = vpop.f32.mrb[0].mxu0
    %v2884 = vadd.f32 0.0, %v2883
    %v2885 = vpop.f32.mrb[0].mxu0
    %v2886 = vpop.f32.mrb[0].mxu0
    %v2887 = vadd.f32 0.0, %v2886
    %v2888 = vpop.f32.mrb[0].mxu0
    %2889 = vdwg.mxu0
    %v2894 = vunpack.c.l.b16 %v2814
    %v2895 = vunpack.c.l.b16 %v2815
    %v2896 = vunpack.c.l.b16 %v2816
    %v2897 = vunpack.c.l.b16 %v2817
    %v2898 = vpack.c.b16 %v2895, %v2894
    %v2899 = vpack.c.b16 %v2897, %v2896
    %v2903 = vsel %vm542, %v2760, 0
    %v2906 = vsel %vm542, %v2761, 0
    %2908 = vmatprep.subr.bf16.mxu0 0
    %2909 = vmatpush1.bf16.msra.mxu0 %v2898
    %2910 = vmatprep.subr.bf16.mxu0 0
    %2911 = vmatpush1.bf16.msra.mxu0 %v2899
    %2912 = vmatprep.subr.bf16.mxu0 0
    %2913 = vmatpush1.bf16.msra.mxu0 0
    %2914 = vmatprep.subr.bf16.mxu0 0
    %2915 = vmatpush1.bf16.msra.mxu0 0
    %2916 = vmatprep.subr.bf16.mxu0 0
    %2917 = vmatpush1.bf16.msra.mxu0 0
    %2918 = vmatprep.subr.bf16.mxu0 0
    %2919 = vmatpush1.bf16.msra.mxu0 0
    %2920 = vmatprep.subr.bf16.mxu0 0
    %2921 = vmatpush1.bf16.msra.mxu0 0
    %2922 = vmatprep.subr.bf16.mxu0 0
    %2923 = vmatpush1.bf16.msra.mxu0 0
    %2924 = vmatprep.subr.bf16.mxu0 0
    %2925 = vmatpush1.bf16.msra.mxu0 0
    %2926 = vmatprep.subr.bf16.mxu0 0
    %2927 = vmatpush1.bf16.msra.mxu0 0
    %2928 = vmatprep.subr.bf16.mxu0 0
    %2929 = vmatpush1.bf16.msra.mxu0 0
    %2930 = vmatprep.subr.bf16.mxu0 0
    %2931 = vmatpush1.bf16.msra.mxu0 0
    %2932 = vmatprep.subr.bf16.mxu0 0
    %2933 = vmatpush1.bf16.msra.mxu0 0
    %2934 = vmatprep.subr.bf16.mxu0 0
    %2935 = vmatpush1.bf16.msra.mxu0 0
    %2936 = vmatprep.subr.bf16.mxu0 0
    %2937 = vmatpush1.bf16.msra.mxu0 0
    %2938 = vmatprep.subr.bf16.mxu0 0
    %2939 = vmatpush1.bf16.msra.mxu0 0
    %2940 = vmatprep.mubr.bf16.mxu0 0
    %2941 = vmatmul.mubr.bf16.gmra.mrb[0].mxu0 %v2903
    %v2942 = vpop.f32.mrb[0].mxu0
    %v2943 = vadd.f32 %v2876, %v2942
    %v2944 = vpop.f32.mrb[0].mxu0
    %v2945 = vpop.f32.mrb[0].mxu0
    %v2946 = vadd.f32 %v2879, %v2945
    %v2947 = vpop.f32.mrb[0].mxu0
    %2948 = vmatprep.mubr.bf16.mxu0 0
    %2949 = vmatmul.mubr.bf16.gmra.mrb[0].mxu0 %v2906
    %v2950 = vpop.f32.mrb[0].mxu0
    %v2951 = vadd.f32 %v2884, %v2950
    %v2952 = vpop.f32.mrb[0].mxu0
    %v2953 = vpop.f32.mrb[0].mxu0
    %v2954 = vadd.f32 %v2887, %v2953
    %v2955 = vpop.f32.mrb[0].mxu0
    %2956 = vdwg.mxu0
    %s2957 = scalar_lea.vmem %s53, 8
    %v2958 = vld [vmem:[%s2957] sm:$0xf]
    %v2959 = vld [vmem:[%s2957 + $0x4] sm:$0x1]
    %v2962 = vunpack.c.l.b16 %v2958
    %v2963 = vunpack.c.l.b16 %v2959
    %v2964 = vpack.c.b16 %v2963, %v2962
    %v2966 = vsel %vm2260, %v2964, 0
    %2968 = vmatprep.subr.bf16.mxu0 0
    %2969 = vmatpush1.bf16.msra.mxu0 %v2966
    %2970 = vmatprep.subr.bf16.mxu0 0
    %2971 = vmatpush1.bf16.msra.mxu0 0
    %2972 = vmatprep.subr.bf16.mxu0 0
    %2973 = vmatpush1.bf16.msra.mxu0 0
    %2974 = vmatprep.subr.bf16.mxu0 0
    %2975 = vmatpush1.bf16.msra.mxu0 0
    %2976 = vmatprep.subr.bf16.mxu0 0
    %2977 = vmatpush1.bf16.msra.mxu0 0
    %2978 = vmatprep.subr.bf16.mxu0 0
    %2979 = vmatpush1.bf16.msra.mxu0 0
    %2980 = vmatprep.subr.bf16.mxu0 0
    %2981 = vmatpush1.bf16.msra.mxu0 0
    %2982 = vmatprep.subr.bf16.mxu0 0
    %2983 = vmatpush1.bf16.msra.mxu0 0
    %2984 = vmatprep.subr.bf16.mxu0 0
    %2985 = vmatpush1.bf16.msra.mxu0 0
    %2986 = vmatprep.subr.bf16.mxu0 0
    %2987 = vmatpush1.bf16.msra.mxu0 0
    %2988 = vmatprep.subr.bf16.mxu0 0
    %2989 = vmatpush1.bf16.msra.mxu0 0
    %2990 = vmatprep.subr.bf16.mxu0 0
    %2991 = vmatpush1.bf16.msra.mxu0 0
    %2992 = vmatprep.subr.bf16.mxu0 0
    %2993 = vmatpush1.bf16.msra.mxu0 0
    %2994 = vmatprep.subr.bf16.mxu0 0
    %2995 = vmatpush1.bf16.msra.mxu0 0
    %2996 = vmatprep.subr.bf16.mxu0 0
    %2997 = vmatpush1.bf16.msra.mxu0 0
    %2998 = vmatprep.subr.bf16.mxu0 0
    %2999 = vmatpush1.bf16.msra.mxu0 0
    %3000 = vmatprep.mubr.bf16.mxu0 0
    %3001 = vmatmul.mubr.bf16.gmra.mrb[0].mxu0 %v2255
    %v3002 = vpop.f32.mrb[0].mxu0
    %v3003 = vadd.f32 0.0, %v3002
    %v3004 = vpop.f32.mrb[0].mxu0
    %v3005 = vpop.f32.mrb[0].mxu0
    %v3006 = vadd.f32 0.0, %v3005
    %v3007 = vpop.f32.mrb[0].mxu0
    %3008 = vmatprep.mubr.bf16.mxu0 0
    %3009 = vmatmul.mubr.bf16.gmra.mrb[0].mxu0 %v2258
    %v3010 = vpop.f32.mrb[0].mxu0
    %v3011 = vadd.f32 0.0, %v3010
    %v3012 = vpop.f32.mrb[0].mxu0
    %v3013 = vpop.f32.mrb[0].mxu0
    %v3014 = vadd.f32 0.0, %v3013
    %v3015 = vpop.f32.mrb[0].mxu0
    %3016 = vdwg.mxu0
    %v3017 = vadd.f32 %v2943, %v3003
    %v3018 = vadd.f32 %v2946, %v3006
    %v3019 = vadd.f32 %v2951, %v3011
    %v3020 = vadd.f32 %v2954, %v3014
    %s3021 = scalar_lea.vmem %s55, 1
    %v3022 = vld [vmem:[%s3021] sm:$0x1]
    %v3024 = vlaneseq
    %v3025 = vshrl.u32 %v3024, 7
    %v3026 = vsub.s32 0, %v3025
    %v3027 = vrot.slane %v3022, %v3026
    %v3029 = vadd.f32 %v3017, %v3027
    %v3030 = vadd.f32 %v3018, %v3027
    %v3031 = vadd.f32 %v3019, %v3027
    %v3032 = vadd.f32 %v3020, %v3027
    %s3033 = scalar_lea.vmem %s57, 16
    %v3034 = vld [vmem:[%s3033] sm:$0xf]
    %v3035 = vld [vmem:[%s3033 + $0x4] sm:$0xf]
    %v3036 = vld [vmem:[%s3033 + $0x8] sm:$0xf]
    %v3037 = vld [vmem:[%s3033 + $0xc] sm:$0xf]
    %s3038 = scalar_lea.vmem %s59, 16
    %v3039 = vld [vmem:[%s3038] sm:$0xf]
    %v3040 = vld [vmem:[%s3038 + $0x4] sm:$0xf]
    %v3041 = vld [vmem:[%s3038 + $0x8] sm:$0xf]
    %v3042 = vld [vmem:[%s3038 + $0xc] sm:$0xf]
    %v3047 = vunpack.c.l.b16 %v3039
    %v3048 = vunpack.c.l.b16 %v3040
    %v3049 = vunpack.c.l.b16 %v3041
    %v3050 = vunpack.c.l.b16 %v3042
    %v3051 = vpack.c.b16 %v3048, %v3047
    %v3052 = vpack.c.b16 %v3050, %v3049
    %3055 = vmatprep.subr.bf16.mxu0 0
    %3056 = vmatpush1.bf16.msra.mxu0 %v3051
    %3057 = vmatprep.subr.bf16.mxu0 0
    %3058 = vmatpush1.bf16.msra.mxu0 %v3052
    %3059 = vmatprep.subr.bf16.mxu0 0
    %3060 = vmatpush1.bf16.msra.mxu0 0
    %3061 = vmatprep.subr.bf16.mxu0 0
    %3062 = vmatpush1.bf16.msra.mxu0 0
    %3063 = vmatprep.subr.bf16.mxu0 0
    %3064 = vmatpush1.bf16.msra.mxu0 0
    %3065 = vmatprep.subr.bf16.mxu0 0
    %3066 = vmatpush1.bf16.msra.mxu0 0
    %3067 = vmatprep.subr.bf16.mxu0 0
    %3068 = vmatpush1.bf16.msra.mxu0 0
    %3069 = vmatprep.subr.bf16.mxu0 0
    %3070 = vmatpush1.bf16.msra.mxu0 0
    %3071 = vmatprep.subr.bf16.mxu0 0
    %3072 = vmatpush1.bf16.msra.mxu0 0
    %3073 = vmatprep.subr.bf16.mxu0 0
    %3074 = vmatpush1.bf16.msra.mxu0 0
    %3075 = vmatprep.subr.bf16.mxu0 0
    %3076 = vmatpush1.bf16.msra.mxu0 0
    %3077 = vmatprep.subr.bf16.mxu0 0
    %3078 = vmatpush1.bf16.msra.mxu0 0
    %3079 = vmatprep.subr.bf16.mxu0 0
    %3080 = vmatpush1.bf16.msra.mxu0 0
    %3081 = vmatprep.subr.bf16.mxu0 0
    %3082 = vmatpush1.bf16.msra.mxu0 0
    %3083 = vmatprep.subr.bf16.mxu0 0
    %3084 = vmatpush1.bf16.msra.mxu0 0
    %3085 = vmatprep.subr.bf16.mxu0 0
    %3086 = vmatpush1.bf16.msra.mxu0 0
    %3087 = vmatprep.mubr.bf16.mxu0 0
    %3088 = vmatmul.mubr.bf16.gmra.mrb[0].mxu0 %v2836
    %v3089 = vpop.f32.mrb[0].mxu0
    %v3090 = vadd.f32 0.0, %v3089
    %v3091 = vpop.f32.mrb[0].mxu0
    %v3092 = vpop.f32.mrb[0].mxu0
    %v3093 = vadd.f32 0.0, %v3092
    %v3094 = vpop.f32.mrb[0].mxu0
    %3095 = vmatprep.mubr.bf16.mxu0 0
    %3096 = vmatmul.mubr.bf16.gmra.mrb[0].mxu0 %v2839
    %v3097 = vpop.f32.mrb[0].mxu0
    %v3098 = vadd.f32 0.0, %v3097
    %v3099 = vpop.f32.mrb[0].mxu0
    %v3100 = vpop.f32.mrb[0].mxu0
    %v3101 = vadd.f32 0.0, %v3100
    %v3102 = vpop.f32.mrb[0].mxu0
    %3103 = vdwg.mxu0
    %v3108 = vunpack.c.l.b16 %v3034
    %v3109 = vunpack.c.l.b16 %v3035
    %v3110 = vunpack.c.l.b16 %v3036
    %v3111 = vunpack.c.l.b16 %v3037
    %v3112 = vpack.c.b16 %v3109, %v3108
    %v3113 = vpack.c.b16 %v3111, %v3110
    %3116 = vmatprep.subr.bf16.mxu0 0
    %3117 = vmatpush1.bf16.msra.mxu0 %v3112
    %3118 = vmatprep.subr.bf16.mxu0 0
    %3119 = vmatpush1.bf16.msra.mxu0 %v3113
    %3120 = vmatprep.subr.bf16.mxu0 0
    %3121 = vmatpush1.bf16.msra.mxu0 0
    %3122 = vmatprep.subr.bf16.mxu0 0
    %3123 = vmatpush1.bf16.msra.mxu0 0
    %3124 = vmatprep.subr.bf16.mxu0 0
    %3125 = vmatpush1.bf16.msra.mxu0 0
    %3126 = vmatprep.subr.bf16.mxu0 0
    %3127 = vmatpush1.bf16.msra.mxu0 0
    %3128 = vmatprep.subr.bf16.mxu0 0
    %3129 = vmatpush1.bf16.msra.mxu0 0
    %3130 = vmatprep.subr.bf16.mxu0 0
    %3131 = vmatpush1.bf16.msra.mxu0 0
    %3132 = vmatprep.subr.bf16.mxu0 0
    %3133 = vmatpush1.bf16.msra.mxu0 0
    %3134 = vmatprep.subr.bf16.mxu0 0
    %3135 = vmatpush1.bf16.msra.mxu0 0
    %3136 = vmatprep.subr.bf16.mxu0 0
    %3137 = vmatpush1.bf16.msra.mxu0 0
    %3138 = vmatprep.subr.bf16.mxu0 0
    %3139 = vmatpush1.bf16.msra.mxu0 0
    %3140 = vmatprep.subr.bf16.mxu0 0
    %3141 = vmatpush1.bf16.msra.mxu0 0
    %3142 = vmatprep.subr.bf16.mxu0 0
    %3143 = vmatpush1.bf16.msra.mxu0 0
    %3144 = vmatprep.subr.bf16.mxu0 0
    %3145 = vmatpush1.bf16.msra.mxu0 0
    %3146 = vmatprep.subr.bf16.mxu0 0
    %3147 = vmatpush1.bf16.msra.mxu0 0
    %3148 = vmatprep.mubr.bf16.mxu0 0
    %3149 = vmatmul.mubr.bf16.gmra.mrb[0].mxu0 %v2903
    %v3150 = vpop.f32.mrb[0].mxu0
    %v3151 = vadd.f32 %v3090, %v3150
    %v3152 = vpop.f32.mrb[0].mxu0
    %v3153 = vpop.f32.mrb[0].mxu0
    %v3154 = vadd.f32 %v3093, %v3153
    %v3155 = vpop.f32.mrb[0].mxu0
    %3156 = vmatprep.mubr.bf16.mxu0 0
    %3157 = vmatmul.mubr.bf16.gmra.mrb[0].mxu0 %v2906
    %v3158 = vpop.f32.mrb[0].mxu0
    %v3159 = vadd.f32 %v3098, %v3158
    %v3160 = vpop.f32.mrb[0].mxu0
    %v3161 = vpop.f32.mrb[0].mxu0
    %v3162 = vadd.f32 %v3101, %v3161
    %v3163 = vpop.f32.mrb[0].mxu0
    %3164 = vdwg.mxu0
    %s3165 = scalar_lea.vmem %s61, 8
    %v3166 = vld [vmem:[%s3165] sm:$0xf]
    %v3167 = vld [vmem:[%s3165 + $0x4] sm:$0x1]
    %v3170 = vunpack.c.l.b16 %v3166
    %v3171 = vunpack.c.l.b16 %v3167
    %v3172 = vpack.c.b16 %v3171, %v3170
    %v3174 = vsel %vm2260, %v3172, 0
    %3176 = vmatprep.subr.bf16.mxu0 0
    %3177 = vmatpush1.bf16.msra.mxu0 %v3174
    %3178 = vmatprep.subr.bf16.mxu0 0
    %3179 = vmatpush1.bf16.msra.mxu0 0
    %3180 = vmatprep.subr.bf16.mxu0 0
    %3181 = vmatpush1.bf16.msra.mxu0 0
    %3182 = vmatprep.subr.bf16.mxu0 0
    %3183 = vmatpush1.bf16.msra.mxu0 0
    %3184 = vmatprep.subr.bf16.mxu0 0
    %3185 = vmatpush1.bf16.msra.mxu0 0
    %3186 = vmatprep.subr.bf16.mxu0 0
    %3187 = vmatpush1.bf16.msra.mxu0 0
    %3188 = vmatprep.subr.bf16.mxu0 0
    %3189 = vmatpush1.bf16.msra.mxu0 0
    %3190 = vmatprep.subr.bf16.mxu0 0
    %3191 = vmatpush1.bf16.msra.mxu0 0
    %3192 = vmatprep.subr.bf16.mxu0 0
    %3193 = vmatpush1.bf16.msra.mxu0 0
    %3194 = vmatprep.subr.bf16.mxu0 0
    %3195 = vmatpush1.bf16.msra.mxu0 0
    %3196 = vmatprep.subr.bf16.mxu0 0
    %3197 = vmatpush1.bf16.msra.mxu0 0
    %3198 = vmatprep.subr.bf16.mxu0 0
    %3199 = vmatpush1.bf16.msra.mxu0 0
    %3200 = vmatprep.subr.bf16.mxu0 0
    %3201 = vmatpush1.bf16.msra.mxu0 0
    %3202 = vmatprep.subr.bf16.mxu0 0
    %3203 = vmatpush1.bf16.msra.mxu0 0
    %3204 = vmatprep.subr.bf16.mxu0 0
    %3205 = vmatpush1.bf16.msra.mxu0 0
    %3206 = vmatprep.subr.bf16.mxu0 0
    %3207 = vmatpush1.bf16.msra.mxu0 0
    %3208 = vmatprep.mubr.bf16.mxu0 0
    %3209 = vmatmul.mubr.bf16.gmra.mrb[0].mxu0 %v2255
    %v3210 = vpop.f32.mrb[0].mxu0
    %v3211 = vadd.f32 0.0, %v3210
    %v3212 = vpop.f32.mrb[0].mxu0
    %v3213 = vpop.f32.mrb[0].mxu0
    %v3214 = vadd.f32 0.0, %v3213
    %v3215 = vpop.f32.mrb[0].mxu0
    %3216 = vmatprep.mubr.bf16.mxu0 0
    %3217 = vmatmul.mubr.bf16.gmra.mrb[0].mxu0 %v2258
    %v3218 = vpop.f32.mrb[0].mxu0
    %v3219 = vadd.f32 0.0, %v3218
    %v3220 = vpop.f32.mrb[0].mxu0
    %v3221 = vpop.f32.mrb[0].mxu0
    %v3222 = vadd.f32 0.0, %v3221
    %v3223 = vpop.f32.mrb[0].mxu0
    %3224 = vdwg.mxu0
    %v3225 = vadd.f32 %v3151, %v3211
    %v3226 = vadd.f32 %v3154, %v3214
    %v3227 = vadd.f32 %v3159, %v3219
    %v3228 = vadd.f32 %v3162, %v3222
    %s3229 = scalar_lea.vmem %s63, 1
    %v3230 = vld [vmem:[%s3229] sm:$0x1]
    %v3232 = vlaneseq
    %v3233 = vshrl.u32 %v3232, 7
    %v3234 = vsub.s32 0, %v3233
    %v3235 = vrot.slane %v3230, %v3234
    %v3237 = vadd.f32 %v3225, %v3235
    %v3238 = vadd.f32 %v3226, %v3235
    %v3239 = vadd.f32 %v3227, %v3235
    %v3240 = vadd.f32 %v3228, %v3235
    %v3241 = vxor.u32 %v3029, 2147483648
    %v3242 = vxor.u32 %v3030, 2147483648
    %v3243 = vxor.u32 %v3031, 2147483648
    %v3244 = vxor.u32 %v3032, 2147483648
    %v3245 = vmul.f32 %v3241, 1.442695
    %v3246 = vpow.pop %v3245
    %v3247 = vmul.f32 %v3242, 1.442695
    %v3248 = vpow.pop %v3247
    %v3249 = vmul.f32 %v3243, 1.442695
    %v3250 = vpow.pop %v3249
    %v3251 = vmul.f32 %v3244, 1.442695
    %v3252 = vpow.pop %v3251
    %v3253 = vadd.f32 %v3246, 1.0
    %v3254 = vadd.f32 %v3248, 1.0
    %v3255 = vadd.f32 %v3250, 1.0
    %v3256 = vadd.f32 %v3252, 1.0
    %v3257 = vrcp.pop %v3253
    %v3258 = vmul.f32 1.0, %v3257
    %v3259 = vrcp.pop %v3254
    %v3260 = vmul.f32 1.0, %v3259
    %v3261 = vrcp.pop %v3255
    %v3262 = vmul.f32 1.0, %v3261
    %v3263 = vrcp.pop %v3256
    %v3264 = vmul.f32 1.0, %v3263
    %vm3265 = vcmp.gt.f32.partialorder %v3237, 20.0
    %vm3266 = vcmp.gt.f32.partialorder %v3238, 20.0
    %vm3267 = vcmp.gt.f32.partialorder %v3239, 20.0
    %vm3268 = vcmp.gt.f32.partialorder %v3240, 20.0
    %v3269 = vmin.f32 %v3237, 20.0
    %v3270 = vmin.f32 %v3238, 20.0
    %v3271 = vmin.f32 %v3239, 20.0
    %v3272 = vmin.f32 %v3240, 20.0
    %v3273 = vmul.f32 %v3269, 1.442695
    %v3274 = vpow.pop %v3273
    %v3275 = vmul.f32 %v3270, 1.442695
    %v3276 = vpow.pop %v3275
    %v3277 = vmul.f32 %v3271, 1.442695
    %v3278 = vpow.pop %v3277
    %v3279 = vmul.f32 %v3272, 1.442695
    %v3280 = vpow.pop %v3279
    %v3281 = vadd.f32 %v3274, 1.0
    %v3282 = vlog2.pop %v3281
    %v3283 = vmul.f32 %v3282, 0.6931472
    %v3284 = vmul.f32 -0.5, %v3274
    %v3285 = vadd.f32 %v3284, 1.0
    %v3286 = vmul.f32 %v3285, %v3274
    %v3287 = vand.u32 2147483647, %v3274
    %vm3288 = vcmp.lt.f32.partialorder %v3287, 0.0004427343
    %v3289 = vsel %vm3288, %v3286, %v3283
    %v3290 = vadd.f32 %v3276, 1.0
    %v3291 = vlog2.pop %v3290
    %v3292 = vmul.f32 %v3291, 0.6931472
    %v3293 = vmul.f32 -0.5, %v3276
    %v3294 = vadd.f32 %v3293, 1.0
    %v3295 = vmul.f32 %v3294, %v3276
    %v3296 = vand.u32 2147483647, %v3276
    %vm3297 = vcmp.lt.f32.partialorder %v3296, 0.0004427343
    %v3298 = vsel %vm3297, %v3295, %v3292
    %v3299 = vadd.f32 %v3278, 1.0
    %v3300 = vlog2.pop %v3299
    %v3301 = vmul.f32 %v3300, 0.6931472
    %v3302 = vmul.f32 -0.5, %v3278
    %v3303 = vadd.f32 %v3302, 1.0
    %v3304 = vmul.f32 %v3303, %v3278
    %v3305 = vand.u32 2147483647, %v3278
    %vm3306 = vcmp.lt.f32.partialorder %v3305, 0.0004427343
    %v3307 = vsel %vm3306, %v3304, %v3301
    %v3308 = vadd.f32 %v3280, 1.0
    %v3309 = vlog2.pop %v3308
    %v3310 = vmul.f32 %v3309, 0.6931472
    %v3311 = vmul.f32 -0.5, %v3280
    %v3312 = vadd.f32 %v3311, 1.0
    %v3313 = vmul.f32 %v3312, %v3280
    %v3314 = vand.u32 2147483647, %v3280
    %vm3315 = vcmp.lt.f32.partialorder %v3314, 0.0004427343
    %v3316 = vsel %vm3315, %v3313, %v3310
    %v3317 = vsel %vm3265, %v3237, %v3289
    %v3318 = vsel %vm3266, %v3238, %v3298
    %v3319 = vsel %vm3267, %v3239, %v3307
    %v3320 = vsel %vm3268, %v3240, %v3316
    %v3321 = vmul.f32 %v3258, %v3317
    %v3322 = vmul.f32 %v3260, %v3318
    %v3323 = vmul.f32 %v3262, %v3319
    %v3324 = vmul.f32 %v3264, %v3320
    %v3325 = vpack.c.bf16 %v3322, %v3321
    %v3326 = vpack.c.bf16 %v3324, %v3323
    %3327 = vmatprep.subr.bf16.mxu0 0
    %3328 = vmatpush1.bf16.msra.mxu0 %v3325
    %3329 = vmatprep.subr.bf16.mxu0 0
    %3330 = vmatpush1.bf16.msra.mxu0 %v3326
    %3331 = vmatprep.subr.bf16.mxu0 0
    %3332 = vmatpush1.bf16.msra.mxu0 0
    %3333 = vmatprep.subr.bf16.mxu0 0
    %3334 = vmatpush1.bf16.msra.mxu0 0
    %3335 = vmatprep.subr.bf16.mxu0 0
    %3336 = vmatpush1.bf16.msra.mxu0 0
    %3337 = vmatprep.subr.bf16.mxu0 0
    %3338 = vmatpush1.bf16.msra.mxu0 0
    %3339 = vmatprep.subr.bf16.mxu0 0
    %3340 = vmatpush1.bf16.msra.mxu0 0
    %3341 = vmatprep.subr.bf16.mxu0 0
    %3342 = vmatpush1.bf16.msra.mxu0 0
    %3343 = vmatprep.subr.bf16.mxu0 0
    %3344 = vmatpush1.bf16.msra.mxu0 0
    %3345 = vmatprep.subr.bf16.mxu0 0
    %3346 = vmatpush1.bf16.msra.mxu0 0
    %3347 = vmatprep.subr.bf16.mxu0 0
    %3348 = vmatpush1.bf16.msra.mxu0 0
    %3349 = vmatprep.subr.bf16.mxu0 0
    %3350 = vmatpush1.bf16.msra.mxu0 0
    %3351 = vmatprep.subr.bf16.mxu0 0
    %3352 = vmatpush1.bf16.msra.mxu0 0
    %3353 = vmatprep.subr.bf16.mxu0 0
    %3354 = vmatpush1.bf16.msra.mxu0 0
    %3355 = vmatprep.subr.bf16.mxu0 0
    %3356 = vmatpush1.bf16.msra.mxu0 0
    %3357 = vmatprep.subr.bf16.mxu0 0
    %3358 = vmatpush1.bf16.msra.mxu0 0
    %3359 = vmatprep.mubr.bf16.mxu0 0
    %3360 = vmatmul.mubr.bf16.gmra.mrb[0].mxu0 %v2619
    %v3361 = vpop.f32.mrb[0].mxu0
    %v3362 = vadd.f32 0.0, %v3361
    %v3363 = vpop.f32.mrb[0].mxu0
    %v3364 = vpop.f32.mrb[0].mxu0
    %v3365 = vadd.f32 0.0, %v3364
    %v3366 = vpop.f32.mrb[0].mxu0
    %3367 = vdwg.mxu0
    %s3368 = scalar_lea.vmem %s65, 1
    %v3369 = vld [vmem:[%s3368] sm:$0x1]
    %v3371 = vlaneseq
    %v3372 = vshrl.u32 %v3371, 7
    %v3373 = vsub.s32 0, %v3372
    %v3374 = vrot.slane %v3369, %v3373
    %v3376 = vmul.f32 %v3362, %v3374
    %v3377 = vmul.f32 %v3365, %v3374
    %s3378 = scalar_lea.vmem %s67, 1
    %v3379 = vld [vmem:[%s3378] sm:$0x1]
    %v3381 = vlaneseq
    %v3382 = vshrl.u32 %v3381, 7
    %v3383 = vsub.s32 0, %v3382
    %v3384 = vrot.slane %v3379, %v3383
    %v3386 = vadd.f32 %v3376, %v3384
    %v3387 = vadd.f32 %v3377, %v3384
    %v3388 = vadd.f32 %v3386, %v2708
    %v3389 = vadd.f32 %v3387, %v2709
    %vm3390 = vcmp.gt.f32.partialorder %v3388, 20.0
    %vm3391 = vcmp.gt.f32.partialorder %v3389, 20.0
    %v3392 = vmin.f32 %v3388, 20.0
    %v3393 = vmin.f32 %v3389, 20.0
    %v3394 = vmul.f32 %v3392, 1.442695
    %v3395 = vpow.pop %v3394
    %v3396 = vmul.f32 %v3393, 1.442695
    %v3397 = vpow.pop %v3396
    %v3398 = vadd.f32 %v3395, 1.0
    %v3399 = vlog2.pop %v3398
    %v3400 = vmul.f32 %v3399, 0.6931472
    %v3401 = vmul.f32 -0.5, %v3395
    %v3402 = vadd.f32 %v3401, 1.0
    %v3403 = vmul.f32 %v3402, %v3395
    %v3404 = vand.u32 2147483647, %v3395
    %vm3405 = vcmp.lt.f32.partialorder %v3404, 0.0004427343
    %v3406 = vsel %vm3405, %v3403, %v3400
    %v3407 = vadd.f32 %v3397, 1.0
    %v3408 = vlog2.pop %v3407
    %v3409 = vmul.f32 %v3408, 0.6931472
    %v3410 = vmul.f32 -0.5, %v3397
    %v3411 = vadd.f32 %v3410, 1.0
    %v3412 = vmul.f32 %v3411, %v3397
    %v3413 = vand.u32 2147483647, %v3397
    %vm3414 = vcmp.lt.f32.partialorder %v3413, 0.0004427343
    %v3415 = vsel %vm3414, %v3412, %v3409
    %v3416 = vsel %vm3390, %v3388, %v3406
    %v3417 = vsel %vm3391, %v3389, %v3415
    %v3418 = vmul.u32 %v393, 8
    %vm3419 = vcmp.ge.s32.totalorder %v357, %v3418
    %v3420 = vadd.s32 %v3418, 8
    %vm3421 = vcmp.lt.s32.totalorder %v357, %v3420
    %vm3422 = vmand %vm3419, %vm3421
    %v3423 = vsel %vm3422, 1.0, 0.0
    %v3424 = vpack.c.bf16 %v3423, %v3423
    %v3425 = vpack.c.bf16 %v3417, %v3416
    %v3427 = vsel %vm1989, %v3424, 0
    %3429 = vmatprep.subr.bf16.mxu0 0
    %3430 = vmatpush1.bf16.msra.mxu0 %v3425
    %3431 = vmatprep.subr.bf16.mxu0 0
    %3432 = vmatpush1.bf16.msra.mxu0 0
    %3433 = vmatprep.subr.bf16.mxu0 0
    %3434 = vmatpush1.bf16.msra.mxu0 0
    %3435 = vmatprep.subr.bf16.mxu0 0
    %3436 = vmatpush1.bf16.msra.mxu0 0
    %3437 = vmatprep.subr.bf16.mxu0 0
    %3438 = vmatpush1.bf16.msra.mxu0 0
    %3439 = vmatprep.subr.bf16.mxu0 0
    %3440 = vmatpush1.bf16.msra.mxu0 0
    %3441 = vmatprep.subr.bf16.mxu0 0
    %3442 = vmatpush1.bf16.msra.mxu0 0
    %3443 = vmatprep.subr.bf16.mxu0 0
    %3444 = vmatpush1.bf16.msra.mxu0 0
    %3445 = vmatprep.subr.bf16.mxu0 0
    %3446 = vmatpush1.bf16.msra.mxu0 0
    %3447 = vmatprep.subr.bf16.mxu0 0
    %3448 = vmatpush1.bf16.msra.mxu0 0
    %3449 = vmatprep.subr.bf16.mxu0 0
    %3450 = vmatpush1.bf16.msra.mxu0 0
    %3451 = vmatprep.subr.bf16.mxu0 0
    %3452 = vmatpush1.bf16.msra.mxu0 0
    %3453 = vmatprep.subr.bf16.mxu0 0
    %3454 = vmatpush1.bf16.msra.mxu0 0
    %3455 = vmatprep.subr.bf16.mxu0 0
    %3456 = vmatpush1.bf16.msra.mxu0 0
    %3457 = vmatprep.subr.bf16.mxu0 0
    %3458 = vmatpush1.bf16.msra.mxu0 0
    %3459 = vmatprep.subr.bf16.mxu0 0
    %3460 = vmatpush1.bf16.msra.mxu0 0
    %3461 = vmatprep.mubr.bf16.mxu0 0
    %3462 = vmatmul.mubr.bf16.gmra.mrb[0].mxu0 %v3427
    %v3463 = vpop.f32.mrb[0].mxu0
    %v3464 = vadd.f32 0.0, %v3463
    %v3465 = vpop.f32.mrb[0].mxu0
    %v3466 = vpop.f32.mrb[0].mxu0
    %v3467 = vpop.f32.mrb[0].mxu0
    %3468 = vdwg.mxu0
    %v3469 = vmul.f32 %v3464, 0.125
    %v3470 = vpack.c.bf16 %v1834, %v1834
    %v3471 = vld [vmem:[%s69] sm:$0xf]
    %v3472 = vld [vmem:[%s69 + $0x4] sm:$0xf]
    %v3473 = vld [vmem:[%s69 + $0x8] sm:$0xf]
    %v3474 = vld [vmem:[%s69 + $0xc] sm:$0xf]
    %v3475 = vpack.c.bf16 %v3469, %v3469
    %v3476 = vld [vmem:[%s71] sm:$0xf]
    %v3477 = vld [vmem:[%s71 + $0x4] sm:$0xf]
    %v3478 = vld [vmem:[%s71 + $0x8] sm:$0xf]
    %v3479 = vld [vmem:[%s71 + $0xc] sm:$0xf]
    %v3484 = vunpack.c.l.b16 %v3476
    %v3485 = vunpack.c.l.b16 %v3477
    %v3486 = vunpack.c.l.b16 %v3478
    %v3487 = vunpack.c.l.b16 %v3479
    %v3488 = vpack.c.b16 %v3485, %v3484
    %v3489 = vpack.c.b16 %v3487, %v3486
    %v3493 = vsel %vm542, %v3475, 0
    %3495 = vmatprep.subr.bf16.mxu0 0
    %3496 = vmatpush1.bf16.msra.mxu0 %v3488
    %3497 = vmatprep.subr.bf16.mxu0 0
    %3498 = vmatpush1.bf16.msra.mxu0 %v3489
    %3499 = vmatprep.subr.bf16.mxu0 0
    %3500 = vmatpush1.bf16.msra.mxu0 0
    %3501 = vmatprep.subr.bf16.mxu0 0
    %3502 = vmatpush1.bf16.msra.mxu0 0
    %3503 = vmatprep.subr.bf16.mxu0 0
    %3504 = vmatpush1.bf16.msra.mxu0 0
    %3505 = vmatprep.subr.bf16.mxu0 0
    %3506 = vmatpush1.bf16.msra.mxu0 0
    %3507 = vmatprep.subr.bf16.mxu0 0
    %3508 = vmatpush1.bf16.msra.mxu0 0
    %3509 = vmatprep.subr.bf16.mxu0 0
    %3510 = vmatpush1.bf16.msra.mxu0 0
    %3511 = vmatprep.subr.bf16.mxu0 0
    %3512 = vmatpush1.bf16.msra.mxu0 0
    %3513 = vmatprep.subr.bf16.mxu0 0
    %3514 = vmatpush1.bf16.msra.mxu0 0
    %3515 = vmatprep.subr.bf16.mxu0 0
    %3516 = vmatpush1.bf16.msra.mxu0 0
    %3517 = vmatprep.subr.bf16.mxu0 0
    %3518 = vmatpush1.bf16.msra.mxu0 0
    %3519 = vmatprep.subr.bf16.mxu0 0
    %3520 = vmatpush1.bf16.msra.mxu0 0
    %3521 = vmatprep.subr.bf16.mxu0 0
    %3522 = vmatpush1.bf16.msra.mxu0 0
    %3523 = vmatprep.subr.bf16.mxu0 0
    %3524 = vmatpush1.bf16.msra.mxu0 0
    %3525 = vmatprep.subr.bf16.mxu0 0
    %3526 = vmatpush1.bf16.msra.mxu0 0
    %3527 = vmatprep.mubr.bf16.mxu0 0
    %3528 = vmatmul.mubr.bf16.gmra.mrb[0].mxu0 %v3493
    %v3529 = vpop.f32.mrb[0].mxu0
    %v3530 = vadd.f32 0.0, %v3529
    %v3531 = vpop.f32.mrb[0].mxu0
    %v3532 = vpop.f32.mrb[0].mxu0
    %v3533 = vpop.f32.mrb[0].mxu0
    %3534 = vdwg.mxu0
    %v3539 = vunpack.c.l.b16 %v3471
    %v3540 = vunpack.c.l.b16 %v3472
    %v3541 = vunpack.c.l.b16 %v3473
    %v3542 = vunpack.c.l.b16 %v3474
    %v3543 = vpack.c.b16 %v3540, %v3539
    %v3544 = vpack.c.b16 %v3542, %v3541
    %v3548 = vsel %vm542, %v3470, 0
    %3550 = vmatprep.subr.bf16.mxu0 0
    %3551 = vmatpush1.bf16.msra.mxu0 %v3543
    %3552 = vmatprep.subr.bf16.mxu0 0
    %3553 = vmatpush1.bf16.msra.mxu0 %v3544
    %3554 = vmatprep.subr.bf16.mxu0 0
    %3555 = vmatpush1.bf16.msra.mxu0 0
    %3556 = vmatprep.subr.bf16.mxu0 0
    %3557 = vmatpush1.bf16.msra.mxu0 0
    %3558 = vmatprep.subr.bf16.mxu0 0
    %3559 = vmatpush1.bf16.msra.mxu0 0
    %3560 = vmatprep.subr.bf16.mxu0 0
    %3561 = vmatpush1.bf16.msra.mxu0 0
    %3562 = vmatprep.subr.bf16.mxu0 0
    %3563 = vmatpush1.bf16.msra.mxu0 0
    %3564 = vmatprep.subr.bf16.mxu0 0
    %3565 = vmatpush1.bf16.msra.mxu0 0
    %3566 = vmatprep.subr.bf16.mxu0 0
    %3567 = vmatpush1.bf16.msra.mxu0 0
    %3568 = vmatprep.subr.bf16.mxu0 0
    %3569 = vmatpush1.bf16.msra.mxu0 0
    %3570 = vmatprep.subr.bf16.mxu0 0
    %3571 = vmatpush1.bf16.msra.mxu0 0
    %3572 = vmatprep.subr.bf16.mxu0 0
    %3573 = vmatpush1.bf16.msra.mxu0 0
    %3574 = vmatprep.subr.bf16.mxu0 0
    %3575 = vmatpush1.bf16.msra.mxu0 0
    %3576 = vmatprep.subr.bf16.mxu0 0
    %3577 = vmatpush1.bf16.msra.mxu0 0
    %3578 = vmatprep.subr.bf16.mxu0 0
    %3579 = vmatpush1.bf16.msra.mxu0 0
    %3580 = vmatprep.subr.bf16.mxu0 0
    %3581 = vmatpush1.bf16.msra.mxu0 0
    %3582 = vmatprep.mubr.bf16.mxu0 0
    %3583 = vmatmul.mubr.bf16.gmra.mrb[0].mxu0 %v3548
    %v3584 = vpop.f32.mrb[0].mxu0
    %v3585 = vadd.f32 %v3530, %v3584
    %v3586 = vpop.f32.mrb[0].mxu0
    %v3587 = vpop.f32.mrb[0].mxu0
    %v3588 = vpop.f32.mrb[0].mxu0
    %3589 = vdwg.mxu0
    %v3590 = vld [vmem:[%s73] sm:$0x1]
    %v3592 = vlaneseq
    %v3593 = vshrl.u32 %v3592, 7
    %v3594 = vsub.s32 0, %v3593
    %v3595 = vrot.slane %v3590, %v3594
    %v3597 = vadd.f32 %v3585, %v3595
    %v3598 = vxor.u32 %v3597, 2147483648
    %v3599 = vmul.f32 %v3598, 1.442695
    %v3600 = vpow.pop %v3599
    %v3601 = vadd.f32 %v3600, 1.0
    %v3602 = vrcp.pop %v3601
    %v3603 = vmul.f32 1.0, %v3602
    %v3604 = vmul.f32 %v3597, %v3603
    %v3605 = vpack.c.bf16 %v3604, %v3604
    %v3606 = vld [vmem:[%s75] sm:$0xf]
    %v3607 = vld [vmem:[%s75 + $0x4] sm:$0xf]
    %v3608 = vld [vmem:[%s75 + $0x8] sm:$0xf]
    %v3609 = vld [vmem:[%s75 + $0xc] sm:$0xf]
    %v3610 = vld [vmem:[%s77] sm:$0x1]
    %v3612 = vlaneseq
    %v3613 = vshrl.u32 %v3612, 7
    %v3614 = vsub.s32 0, %v3613
    %v3615 = vrot.slane %v3610, %v3614
    %v3621 = vunpack.c.l.b16 %v3606
    %v3622 = vunpack.c.l.b16 %v3607
    %v3623 = vunpack.c.l.b16 %v3608
    %v3624 = vunpack.c.l.b16 %v3609
    %v3625 = vpack.c.b16 %v3622, %v3621
    %v3626 = vpack.c.b16 %v3624, %v3623
    %v3630 = vsel %vm542, %v3605, 0
    %3632 = vmatprep.subr.bf16.mxu0 0
    %3633 = vmatpush1.bf16.msra.mxu0 %v3625
    %3634 = vmatprep.subr.bf16.mxu0 0
    %3635 = vmatpush1.bf16.msra.mxu0 %v3626
    %3636 = vmatprep.subr.bf16.mxu0 0
    %3637 = vmatpush1.bf16.msra.mxu0 0
    %3638 = vmatprep.subr.bf16.mxu0 0
    %3639 = vmatpush1.bf16.msra.mxu0 0
    %3640 = vmatprep.subr.bf16.mxu0 0
    %3641 = vmatpush1.bf16.msra.mxu0 0
    %3642 = vmatprep.subr.bf16.mxu0 0
    %3643 = vmatpush1.bf16.msra.mxu0 0
    %3644 = vmatprep.subr.bf16.mxu0 0
    %3645 = vmatpush1.bf16.msra.mxu0 0
    %3646 = vmatprep.subr.bf16.mxu0 0
    %3647 = vmatpush1.bf16.msra.mxu0 0
    %3648 = vmatprep.subr.bf16.mxu0 0
    %3649 = vmatpush1.bf16.msra.mxu0 0
    %3650 = vmatprep.subr.bf16.mxu0 0
    %3651 = vmatpush1.bf16.msra.mxu0 0
    %3652 = vmatprep.subr.bf16.mxu0 0
    %3653 = vmatpush1.bf16.msra.mxu0 0
    %3654 = vmatprep.subr.bf16.mxu0 0
    %3655 = vmatpush1.bf16.msra.mxu0 0
    %3656 = vmatprep.subr.bf16.mxu0 0
    %3657 = vmatpush1.bf16.msra.mxu0 0
    %3658 = vmatprep.subr.bf16.mxu0 0
    %3659 = vmatpush1.bf16.msra.mxu0 0
    %3660 = vmatprep.subr.bf16.mxu0 0
    %3661 = vmatpush1.bf16.msra.mxu0 0
    %3662 = vmatprep.subr.bf16.mxu0 0
    %3663 = vmatpush1.bf16.msra.mxu0 0
    %3664 = vmatprep.mubr.bf16.mxu0 0
    %3665 = vmatmul.mubr.bf16.gmra.mrb[0].mxu0 %v3630
    %v3666 = vpop.f32.mrb[0].mxu0
    %v3667 = vadd.f32 %v3615, %v3666
    %v3668 = vpop.f32.mrb[0].mxu0
    %v3669 = vpop.f32.mrb[0].mxu0
    %v3670 = vpop.f32.mrb[0].mxu0
    %3671 = vdwg.mxu0
    %v3672 = vxor.u32 %v3667, 2147483648
    %v3673 = vmul.f32 %v3672, 1.442695
    %v3674 = vpow.pop %v3673
    %v3675 = vadd.f32 %v3674, 1.0
    %v3676 = vrcp.pop %v3675
    %v3677 = vmul.f32 1.0, %v3676
    %v3678 = vmul.f32 %v3667, %v3677
    %v3679 = vpack.c.bf16 %v3678, %v3678
    %v3680 = vld [vmem:[%s79] sm:$0xf]
    %v3681 = vld [vmem:[%s79 + $0x4] sm:$0xf]
    %v3682 = vld [vmem:[%s81] sm:$0x1]
    %v3684 = vlaneseq
    %v3685 = vshrl.u32 %v3684, 7
    %v3686 = vsub.s32 0, %v3685
    %v3687 = vrot.slane %v3682, %v3686
    %v3691 = vunpack.c.l.b16 %v3680
    %v3692 = vunpack.c.l.b16 %v3681
    %v3693 = vpack.c.b16 %v3692, %v3691
    %v3696 = vsel %vm1989, %v3679, 0
    %3698 = vmatprep.subr.bf16.mxu0 0
    %3699 = vmatpush1.bf16.msra.mxu0 %v3693
    %3700 = vmatprep.subr.bf16.mxu0 0
    %3701 = vmatpush1.bf16.msra.mxu0 0
    %3702 = vmatprep.subr.bf16.mxu0 0
    %3703 = vmatpush1.bf16.msra.mxu0 0
    %3704 = vmatprep.subr.bf16.mxu0 0
    %3705 = vmatpush1.bf16.msra.mxu0 0
    %3706 = vmatprep.subr.bf16.mxu0 0
    %3707 = vmatpush1.bf16.msra.mxu0 0
    %3708 = vmatprep.subr.bf16.mxu0 0
    %3709 = vmatpush1.bf16.msra.mxu0 0
    %3710 = vmatprep.subr.bf16.mxu0 0
    %3711 = vmatpush1.bf16.msra.mxu0 0
    %3712 = vmatprep.subr.bf16.mxu0 0
    %3713 = vmatpush1.bf16.msra.mxu0 0
    %3714 = vmatprep.subr.bf16.mxu0 0
    %3715 = vmatpush1.bf16.msra.mxu0 0
    %3716 = vmatprep.subr.bf16.mxu0 0
    %3717 = vmatpush1.bf16.msra.mxu0 0
    %3718 = vmatprep.subr.bf16.mxu0 0
    %3719 = vmatpush1.bf16.msra.mxu0 0
    %3720 = vmatprep.subr.bf16.mxu0 0
    %3721 = vmatpush1.bf16.msra.mxu0 0
    %3722 = vmatprep.subr.bf16.mxu0 0
    %3723 = vmatpush1.bf16.msra.mxu0 0
    %3724 = vmatprep.subr.bf16.mxu0 0
    %3725 = vmatpush1.bf16.msra.mxu0 0
    %3726 = vmatprep.subr.bf16.mxu0 0
    %3727 = vmatpush1.bf16.msra.mxu0 0
    %3728 = vmatprep.subr.bf16.mxu0 0
    %3729 = vmatpush1.bf16.msra.mxu0 0
    %3730 = vmatprep.mubr.bf16.mxu0 0
    %3731 = vmatmul.mubr.bf16.gmra.mrb[0].mxu0 %v3696
    %v3732 = vpop.f32.mrb[0].mxu0
    %v3733 = vadd.f32 %v3687, %v3732
    %v3734 = vpop.f32.mrb[0].mxu0
    %v3735 = vpop.f32.mrb[0].mxu0
    %v3736 = vpop.f32.mrb[0].mxu0
    %3737 = vdwg.mxu0
    %3738 = vst [vmem:[#allocation14] sm:$0x3] %v3733
    // Predicated region
    $region194: #{tpu_custom_call.1} parent=1 // pred_check
      _
    $region195: #{tpu_custom_call.1} parent=1 // pred_check_branch
      %3740 = sbr.rel (0) target = $region197
    $region196: #{tpu_custom_call.1} parent=1 // pred_region
      %s3742 = ssub.s32 32, 32
      %3743 = vsyncadd [#allocation4], %s3742
      %s3745 = sshll.u32 [#allocation14], 4
      %s3746 = int_to_ptr.vmem [resolvable:$true] %s3745
      %3748 = dma.vmem_to_hbm [thread:$0]  %s3746, 32, %s83, [#allocation4]
    $region197: #{tpu_custom_call.1} parent=1 // pred_fallthru
      _
    // Predicated region
    $region198: #{tpu_custom_call.1} parent=1 // pred_check
      _
    $region199: #{tpu_custom_call.1} parent=1 // pred_check_branch
      %3750 = sbr.rel (0) target = $region201
    $region200: #{tpu_custom_call.1} parent=1 // pred_region
      %3751 = dma.done [#allocation4], 32
    $region201: #{tpu_custom_call.1} parent=1 // pred_fallthru
      _
    %3752 = vsyncpa [#allocation3], 1
    %3753 = vsyncpa [#allocation6], 1
    %3754 = vsyncpa [#allocation9], 1
    %3755 = vsyncpa [#allocation12], 1
    %3756 = vsyncpa [#allocation4], 1

</llo_original>
